<compile_context>
chip_gen: v7x
topology: tpu7x:2x2x1
jax: 0.10.0
libtpu: 0.0.40
codegen_flags: <defaults>
</compile_context>

<pallas_src>
import functools

import jax
import jax.numpy as jnp
from jax.experimental import pallas as pl
from jax.experimental.pallas import tpu as pltpu


# -----------------------------------------------------------------------------
# Fused Pallas kernel: pooling prologue + 12 encoder layers + head, grid=(B,)
# -----------------------------------------------------------------------------

def _fused_forward_kernel(emb_ref, mask_ref, pos_ref, kbias_ref,
                          hw_ref, hb_ref,
                          wq_ref, wk_ref, wv_ref, bq_ref, bk_ref, bv_ref,
                          wo_ref, w1_ref, b1_ref, w2_ref, lvec_ref,
                          out_ref, *, num_heads):
    S = emb_ref.shape[1]          # chunks per batch row (sequence for encoder)
    D = emb_ref.shape[3]          # embed dim
    H = num_heads
    hd = D // H
    n_layers = wq_ref.shape[0]
    eps = 1e-5
    scale = 1.0 / float(hd) ** 0.5

    # ---- prologue: masked mean pooling (surrogate backbone) + pos encoding ----
    # VPU multiply + sublane reduce (no tiny per-row matmuls); exact divide.
    m = mask_ref[0]                                          # (S, C, 1) f32
    emb = emb_ref[0]                                         # (S, C, D) f32
    pooled = jnp.sum(m * emb, axis=1)                        # (S, D)
    cnt = jnp.maximum(jnp.sum(m, axis=1), 1.0)               # (S, 1)
    x0 = pooled / cnt + pos_ref[...]                         # (S, D) f32

    kb = kbias_ref[...]                                      # (1, 1, S) additive

    # ---- 12 encoder layers: in-kernel loop over VMEM-resident weight stacks ----
    def layer(l, x):
        # Head-batched Q/K/V projections: (H,S,D) @ (H,D,hd) -> (H,S,hd).
        xb = jnp.broadcast_to(x.astype(jnp.bfloat16)[None], (H, S, D))
        q = jnp.einsum('hsd,hde->hse', xb, wq_ref[l],
                       preferred_element_type=jnp.float32) + bq_ref[l]
        k = jnp.einsum('hsd,hde->hse', xb, wk_ref[l],
                       preferred_element_type=jnp.float32) + bk_ref[l]
        v = jnp.einsum('hsd,hde->hse', xb, wv_ref[l],
                       preferred_element_type=jnp.float32) + bv_ref[l]

        # One batched score matmul + ONE fused softmax over the (H,S,S) stack.
        sc = jnp.einsum('hqd,hkd->hqk', q, k,
                        preferred_element_type=jnp.float32) * scale + kb
        sc = sc - jnp.max(sc, axis=-1, keepdims=True)
        p = jnp.exp(sc)
        p = p * pl.reciprocal(jnp.sum(p, axis=-1, keepdims=True), approx=True)
        ctx = jnp.einsum('hqk,hkd->hqd', p, v,
                         preferred_element_type=jnp.float32)     # (H, S, hd)

        lv = lvec_ref[l]          # (6, D): [bo, ln1_g, ln1_b, ln2_g, ln2_b, b2]

        # Output projection: batched (H,S,hd)@(H,hd,D) summed over heads
        # (== concat-heads @ W_o), bf16 weights, f32 accumulation.
        attn = jnp.sum(
            jnp.einsum('hqd,hde->hqe', ctx.astype(jnp.bfloat16), wo_ref[l],
                       preferred_element_type=jnp.float32), axis=0) + lv[0:1]

        # residual + LayerNorm 1 (post-LN, norm_first=False)
        h1 = x + attn
        mu = jnp.mean(h1, axis=-1, keepdims=True)
        var = jnp.mean((h1 - mu) ** 2, axis=-1, keepdims=True)
        h1 = (h1 - mu) * jax.lax.rsqrt(var + eps) * lv[1:2] + lv[2:3]

        # feed-forward: Linear -> ReLU -> Linear (bf16 MXU, f32 accum)
        f = jnp.dot(h1.astype(jnp.bfloat16), w1_ref[l],
                    preferred_element_type=jnp.float32) + b1_ref[l]   # (S, F)
        f = jnp.maximum(f, 0.0)
        f = jnp.dot(f.astype(jnp.bfloat16), w2_ref[l],
                    preferred_element_type=jnp.float32) + lv[5:6]     # (S, D)

        # residual + LayerNorm 2
        h2 = h1 + f
        mu2 = jnp.mean(h2, axis=-1, keepdims=True)
        var2 = jnp.mean((h2 - mu2) ** 2, axis=-1, keepdims=True)
        return (h2 - mu2) * jax.lax.rsqrt(var2 + eps) * lv[3:4] + lv[4:5]

    xL = jax.lax.fori_loop(0, n_layers, layer, x0)

    # ---- classification head, applied only to chunk position 0 (output[0]) ----
    # NOTE: 2-lane output -> masked store; negligible at this size (low prio).
    logits = (jnp.dot(xL[0:1, :].astype(jnp.bfloat16), hw_ref[...],
                      preferred_element_type=jnp.float32) + hb_ref[...])
    out_ref[0] = logits


def fused_forward(emb, mask, pos, kbias, p, *, num_heads):
    """emb: (B,S,C,D), mask: (B,S,C,1), pos: (S,D), kbias: (B,1,S) -> (B,1,2)."""
    B, S, C, D = emb.shape
    L, H, _, hd = p["wq"].shape
    F = p["w1"].shape[-1]
    kernel = functools.partial(_fused_forward_kernel, num_heads=num_heads)

    def full(shape):
        return pl.BlockSpec(shape, lambda b, _n=len(shape): (0,) * _n)

    def per_batch(shape):
        return pl.BlockSpec(shape, lambda b, _n=len(shape): (b,) + (0,) * (_n - 1))

    in_specs = [
        per_batch((1, S, C, D)),      # emb            (one DMA per batch step)
        per_batch((1, S, C, 1)),      # chunk mask
        full((S, D)),                 # positional table slice (shared)
        per_batch((1, 1, S)),         # key-padding additive bias
        full((D, 2)),                 # head weight (bf16)
        full((1, 2)),                 # head bias
        full((L, H, D, hd)),          # wq  (bf16, whole stack VMEM-resident)
        full((L, H, D, hd)),          # wk  (bf16)
        full((L, H, D, hd)),          # wv  (bf16)
        full((L, H, 1, hd)),          # bq
        full((L, H, 1, hd)),          # bk
        full((L, H, 1, hd)),          # bv
        full((L, H, hd, D)),          # wo  (bf16)
        full((L, D, F)),              # w1  (bf16)
        full((L, 1, F)),              # b1
        full((L, F, D)),              # w2  (bf16)
        full((L, 6, D)),              # packed per-layer vectors
    ]

    return pl.pallas_call(
        kernel,
        out_shape=jax.ShapeDtypeStruct((B, 1, 2), jnp.float32),
        grid_spec=pltpu.PrefetchScalarGridSpec(
            num_scalar_prefetch=0,
            grid=(B,),
            in_specs=in_specs,
            out_specs=pl.BlockSpec((1, 1, 2), lambda b: (b, 0, 0)),
        ),
        compiler_params=pltpu.CompilerParams(
            dimension_semantics=("parallel",)),
    )(emb, mask, pos, kbias, p["head_w"], p["head_b"],
      p["wq"], p["wk"], p["wv"], p["bq"], p["bk"], p["bv"],
      p["wo"], p["w1"], p["b1"], p["w2"], p["lvec"])


# -----------------------------------------------------------------------------
# Plain-JAX glue reproducing CodeBertModel.prepare_chunk / forward
# -----------------------------------------------------------------------------

def prepare_chunk(input_ids, attention_mask, chunk_size, pad_token_id):
    B, L = input_ids.shape
    num_chunk = L // chunk_size
    pad_len = 0
    if L % chunk_size != 0:
        num_chunk += 1
        pad_len = chunk_size - L % chunk_size
    pad = jnp.full((B, pad_len), pad_token_id, dtype=input_ids.dtype)
    zeros = jnp.zeros((B, pad_len), dtype=attention_mask.dtype)
    padded_ids = jnp.concatenate([input_ids, pad], axis=-1).T           # (L', B)
    padded_mask = jnp.concatenate([attention_mask, zeros], axis=-1).T   # (L', B)
    chunked_ids = padded_ids.reshape(num_chunk, chunk_size, B).transpose(0, 2, 1)
    chunked_mask = padded_mask.reshape(num_chunk, chunk_size, B).transpose(0, 2, 1)
    pad_chunk_mask = (jnp.sum(chunked_ids == pad_token_id, -1)
                      == chunk_size).transpose(1, 0)                    # (B, S)
    return chunked_ids, chunked_mask, pad_chunk_mask


def codebert_forward(params, input_ids, attention_mask, *,
                     chunk_size, pad_token_id, num_heads):
    chunked_ids, chunked_mask, pad_chunk_mask = prepare_chunk(
        input_ids, attention_mask, chunk_size, pad_token_id)
    S, B, C = chunked_ids.shape

    # TODO(synk): pretrained AutoModel backbone replaced by deterministic token
    # embedding lookup + masked mean pooling (one embed_dim vector per chunk).
    emb = params["tok_table"][chunked_ids]                   # (S, B, C, D)
    emb = jnp.transpose(emb, (1, 0, 2, 3))                   # (B, S, C, D)
    mask = jnp.transpose(chunked_mask, (1, 0, 2)).astype(jnp.float32)[..., None]

    # PositionalEncoding: nn.Embedding on positions 0..S-1 (padding_idx=0),
    # dropout identity in eval mode.  Shared across the batch (added in-kernel).
    pos = params["pos_table"][jnp.arange(S)]                 # (S, D)

    # Key-padding mask for fully padded chunks -> additive bias (-1e9, finite).
    kbias = jnp.where(pad_chunk_mask, -1e9, 0.0).astype(jnp.float32)
    kbias = kbias.reshape(B, 1, S)

    logits = fused_forward(emb, mask, pos, kbias, params,
                           num_heads=num_heads)              # (B, 1, 2)
    # PyTorch: logits = ffn(output[0]) -> chunk position 0 of each batch row.
    return logits.reshape(B, 2)


# -----------------------------------------------------------------------------
# Deterministic parameter initialization (stacked, head-major per-layer weights)
# -----------------------------------------------------------------------------

def init_params(key, *, vocab_size, d_model, ff_dim, num_layers, num_heads,
                max_len):
    # NOTE: weights stored (in, out) / head-major and applied as x @ W; real
    # PyTorch (out, in) weights would need transposing + splitting D -> (H, hd).
    ks = jax.random.split(key, 9)
    L, D, F, H = num_layers, d_model, ff_dim, num_heads
    hd = D // H

    def w(k, shape):
        return (jax.random.normal(k, shape, jnp.float32) * 0.05).astype(jnp.bfloat16)

    p = {}
    p["tok_table"] = jax.random.normal(ks[0], (vocab_size, D), jnp.float32) * 0.05
    pos = jax.random.normal(ks[1], (max_len, D), jnp.float32) * 0.05
    p["pos_table"] = pos.at[0].set(0.0)                      # padding_idx = 0

    p["wq"] = w(ks[2], (L, H, D, hd))
    p["wk"] = w(ks[3], (L, H, D, hd))
    p["wv"] = w(ks[4], (L, H, D, hd))
    p["bq"] = jnp.zeros((L, H, 1, hd), jnp.float32)
    p["bk"] = jnp.zeros((L, H, 1, hd), jnp.float32)
    p["bv"] = jnp.zeros((L, H, 1, hd), jnp.float32)
    p["wo"] = w(ks[5], (L, H, hd, D))                        # bf16 (review #4)
    p["w1"] = w(ks[6], (L, D, F))
    p["b1"] = jnp.zeros((L, 1, F), jnp.float32)
    p["w2"] = w(ks[7], (L, F, D))
    # Packed per-layer vectors: [bo, ln1_gamma, ln1_beta, ln2_gamma, ln2_beta, b2]
    lvec = jnp.zeros((L, 6, D), jnp.float32)
    lvec = lvec.at[:, 1, :].set(1.0).at[:, 3, :].set(1.0)
    p["lvec"] = lvec

    p["head_w"] = (jax.random.normal(ks[8], (D, 2), jnp.float32) * 0.05
                   ).astype(jnp.bfloat16)                    # bf16 (review #4)
    p["head_b"] = jnp.zeros((1, 2), jnp.float32)
    return p


# -----------------------------------------------------------------------------
# Main
# -----------------------------------------------------------------------------

if __name__ == "__main__":
    # Small, module-consistent shapes.
    B = 2
    L = 28                 # token sequence length
    CHUNK_SIZE = 8         # -> num_chunk = 4 (with padding)
    VOCAB = 256
    PAD_TOKEN_ID = 1       # RoBERTa/CodeBERT-style pad id
    D_MODEL = 32
    NUM_HEADS = 8          # module default nhead=8
    FF_DIM = 768           # hardcoded dim_feedforward in the module
    NUM_LAYERS = 12        # hardcoded num_layers in the module
    MAX_SEQ_LEN = 512      # positional-encoding table size

    root = jax.random.PRNGKey(0)
    k_ids, k_params = jax.random.split(root)

    input_ids = jax.random.randint(k_ids, (B, L), 2, VOCAB, dtype=jnp.int32)
    lengths = jnp.array([28, 20], dtype=jnp.int32)
    attention_mask = (jnp.arange(L)[None, :] < lengths[:, None]).astype(jnp.int32)

    params = init_params(k_params, vocab_size=VOCAB, d_model=D_MODEL,
                         ff_dim=FF_DIM, num_layers=NUM_LAYERS,
                         num_heads=NUM_HEADS, max_len=MAX_SEQ_LEN)

    fwd = jax.jit(functools.partial(codebert_forward,
                                    chunk_size=CHUNK_SIZE,
                                    pad_token_id=PAD_TOKEN_ID,
                                    num_heads=NUM_HEADS))
    logits = fwd(params, input_ids, attention_mask)
    logits = jax.block_until_ready(logits)

    assert logits.shape == (B, 2)
    assert bool(jnp.all(jnp.isfinite(logits)))
    print("KERNEL_OK")
</pallas_src>

<mosaic_0001>
module attributes {stable_mosaic.version = 11 : i64} {
  func.func @_fused_forward_kernel(%arg0: i32, %arg1: memref<1x4x8x32xf32, #tpu.memory_space<vmem>>, %arg2: memref<1x4x8x1xf32, #tpu.memory_space<vmem>>, %arg3: memref<4x32xf32, #tpu.memory_space<vmem>>, %arg4: memref<1x1x4xf32, #tpu.memory_space<vmem>>, %arg5: memref<32x2xbf16, #tpu.memory_space<vmem>>, %arg6: memref<1x2xf32, #tpu.memory_space<vmem>>, %arg7: memref<12x8x32x4xbf16, #tpu.memory_space<vmem>>, %arg8: memref<12x8x32x4xbf16, #tpu.memory_space<vmem>>, %arg9: memref<12x8x32x4xbf16, #tpu.memory_space<vmem>>, %arg10: memref<12x8x1x4xf32, #tpu.memory_space<vmem>>, %arg11: memref<12x8x1x4xf32, #tpu.memory_space<vmem>>, %arg12: memref<12x8x1x4xf32, #tpu.memory_space<vmem>>, %arg13: memref<12x8x4x32xbf16, #tpu.memory_space<vmem>>, %arg14: memref<12x32x768xbf16, #tpu.memory_space<vmem>>, %arg15: memref<12x1x768xf32, #tpu.memory_space<vmem>>, %arg16: memref<12x768x32xbf16, #tpu.memory_space<vmem>>, %arg17: memref<12x6x32xf32, #tpu.memory_space<vmem>>, %arg18: memref<1x1x2xf32, #tpu.memory_space<vmem>>) attributes {dimension_semantics = [#tpu.dimension_semantics<parallel>], iteration_bounds = array<i64: 2>, scalar_prefetch = 0 : i64, scratch_operands = 0 : i64, tpu.core_type = #tpu.core_type<tc>, window_params = [{transform_indices = @transform_0, window_bounds = array<i64: 1, 4, 8, 32>}, {transform_indices = @transform_1, window_bounds = array<i64: 1, 4, 8, 1>}, {pipeline_mode = #tpu.pipeline_mode<synchronous>, transform_indices = @transform_2, window_bounds = array<i64: 4, 32>}, {transform_indices = @transform_3, window_bounds = array<i64: 1, 1, 4>}, {pipeline_mode = #tpu.pipeline_mode<synchronous>, transform_indices = @transform_4, window_bounds = array<i64: 32, 2>}, {pipeline_mode = #tpu.pipeline_mode<synchronous>, transform_indices = @transform_5, window_bounds = array<i64: 1, 2>}, {pipeline_mode = #tpu.pipeline_mode<synchronous>, transform_indices = @transform_6, window_bounds = array<i64: 12, 8, 32, 4>}, {pipeline_mode = #tpu.pipeline_mode<synchronous>, transform_indices = @transform_7, window_bounds = array<i64: 12, 8, 32, 4>}, {pipeline_mode = #tpu.pipeline_mode<synchronous>, transform_indices = @transform_8, window_bounds = array<i64: 12, 8, 32, 4>}, {pipeline_mode = #tpu.pipeline_mode<synchronous>, transform_indices = @transform_9, window_bounds = array<i64: 12, 8, 1, 4>}, {pipeline_mode = #tpu.pipeline_mode<synchronous>, transform_indices = @transform_10, window_bounds = array<i64: 12, 8, 1, 4>}, {pipeline_mode = #tpu.pipeline_mode<synchronous>, transform_indices = @transform_11, window_bounds = array<i64: 12, 8, 1, 4>}, {pipeline_mode = #tpu.pipeline_mode<synchronous>, transform_indices = @transform_12, window_bounds = array<i64: 12, 8, 4, 32>}, {pipeline_mode = #tpu.pipeline_mode<synchronous>, transform_indices = @transform_13, window_bounds = array<i64: 12, 32, 768>}, {pipeline_mode = #tpu.pipeline_mode<synchronous>, transform_indices = @transform_14, window_bounds = array<i64: 12, 1, 768>}, {pipeline_mode = #tpu.pipeline_mode<synchronous>, transform_indices = @transform_15, window_bounds = array<i64: 12, 768, 32>}, {pipeline_mode = #tpu.pipeline_mode<synchronous>, transform_indices = @transform_16, window_bounds = array<i64: 12, 6, 32>}, {transform_indices = @transform_17, window_bounds = array<i64: 1, 1, 2>}]} {
    %c0 = arith.constant 0 : index
    %c0_0 = arith.constant 0 : index
    %c0_1 = arith.constant 0 : index
    %c0_2 = arith.constant 0 : index
    %0 = vector.load %arg2[%c0, %c0_0, %c0_1, %c0_2] : memref<1x4x8x1xf32, #tpu.memory_space<vmem>>, vector<1x4x8x1xf32>
    %1 = vector.shape_cast %0 : vector<1x4x8x1xf32> to vector<4x8x1xf32>
    %c0_3 = arith.constant 0 : index
    %c0_4 = arith.constant 0 : index
    %c0_5 = arith.constant 0 : index
    %c0_6 = arith.constant 0 : index
    %2 = vector.load %arg1[%c0_3, %c0_4, %c0_5, %c0_6] : memref<1x4x8x32xf32, #tpu.memory_space<vmem>>, vector<1x4x8x32xf32>
    %3 = vector.shape_cast %2 : vector<1x4x8x32xf32> to vector<4x8x32xf32>
    %4 = vector.broadcast %1 : vector<4x8x1xf32> to vector<4x8x32xf32>
    %5 = arith.mulf %4, %3 : vector<4x8x32xf32>
    %cst = arith.constant dense<0.000000e+00> : vector<4x32xf32>
    %6 = vector.multi_reduction <add>, %5, %cst [1] : vector<4x8x32xf32> to vector<4x32xf32>
    %cst_7 = arith.constant dense<0.000000e+00> : vector<4x1xf32>
    %7 = vector.multi_reduction <add>, %1, %cst_7 [1] : vector<4x8x1xf32> to vector<4x1xf32>
    %cst_8 = arith.constant 1.000000e+00 : f32
    %8 = vector.broadcast %cst_8 : f32 to vector<4x1xf32>
    %9 = arith.maximumf %7, %8 : vector<4x1xf32>
    %10 = vector.broadcast %9 : vector<4x1xf32> to vector<4x32xf32>
    %11 = arith.divf %6, %10 : vector<4x32xf32>
    %c0_9 = arith.constant 0 : index
    %c0_10 = arith.constant 0 : index
    %12 = vector.load %arg3[%c0_9, %c0_10] : memref<4x32xf32, #tpu.memory_space<vmem>>, vector<4x32xf32>
    %13 = arith.addf %11, %12 : vector<4x32xf32>
    %c0_11 = arith.constant 0 : index
    %c0_12 = arith.constant 0 : index
    %c0_13 = arith.constant 0 : index
    %14 = vector.load %arg4[%c0_11, %c0_12, %c0_13] : memref<1x1x4xf32, #tpu.memory_space<vmem>>, vector<1x1x4xf32>
    %c0_i32 = arith.constant 0 : i32
    %c12_i32 = arith.constant 12 : i32
    %15 = arith.addi %c0_i32, %c12_i32 : i32
    %c1_i32 = arith.constant 1 : i32
    %16 = scf.for %arg19 = %c0_i32 to %15 step %c1_i32 iter_args(%arg20 = %13) -> (vector<4x32xf32>)  : i32 {
      %26 = arith.truncf %arg20 : vector<4x32xf32> to vector<4x32xbf16>
      %27 = vector.shape_cast %26 : vector<4x32xbf16> to vector<1x4x32xbf16>
      %28 = vector.shape_cast %27 : vector<1x4x32xbf16> to vector<1x4x32xbf16>
      %29 = vector.broadcast %28 : vector<1x4x32xbf16> to vector<8x4x32xbf16>
      %30 = arith.index_cast %arg19 : i32 to index
      %c0_23 = arith.constant 0 : index
      %c0_24 = arith.constant 0 : index
      %c0_25 = arith.constant 0 : index
      %31 = vector.load %arg7[%30, %c0_23, %c0_24, %c0_25] : memref<12x8x32x4xbf16, #tpu.memory_space<vmem>>, vector<1x8x32x4xbf16>
      %32 = vector.shape_cast %31 : vector<1x8x32x4xbf16> to vector<8x32x4xbf16>
      "tpu.trace_start"() <{level = 10 : i32, message = "hsd,hde->hse"}> : () -> ()
      %cst_26 = arith.constant dense<0.000000e+00> : vector<8x4x4xf32>
      %33 = tpu.matmul %29, %32, %cst_26 {dimension_numbers = #tpu.dot_dimension_numbers<[2], [1], [1], [2], [0, 0, 0, 1, 1, 2], [0], [0]>} : vector<8x4x32xbf16>, vector<8x32x4xbf16>, vector<8x4x4xf32> -> vector<8x4x4xf32>
      "tpu.trace_stop"() : () -> ()
      %34 = arith.index_cast %arg19 : i32 to index
      %c0_27 = arith.constant 0 : index
      %c0_28 = arith.constant 0 : index
      %c0_29 = arith.constant 0 : index
      %35 = vector.load %arg10[%34, %c0_27, %c0_28, %c0_29] : memref<12x8x1x4xf32, #tpu.memory_space<vmem>>, vector<1x8x1x4xf32>
      %36 = vector.shape_cast %35 : vector<1x8x1x4xf32> to vector<8x1x4xf32>
      %37 = vector.broadcast %36 : vector<8x1x4xf32> to vector<8x4x4xf32>
      %38 = arith.addf %33, %37 : vector<8x4x4xf32>
      %39 = arith.index_cast %arg19 : i32 to index
      %c0_30 = arith.constant 0 : index
      %c0_31 = arith.constant 0 : index
      %c0_32 = arith.constant 0 : index
      %40 = vector.load %arg8[%39, %c0_30, %c0_31, %c0_32] : memref<12x8x32x4xbf16, #tpu.memory_space<vmem>>, vector<1x8x32x4xbf16>
      %41 = vector.shape_cast %40 : vector<1x8x32x4xbf16> to vector<8x32x4xbf16>
      "tpu.trace_start"() <{level = 10 : i32, message = "hsd,hde->hse"}> : () -> ()
      %cst_33 = arith.constant dense<0.000000e+00> : vector<8x4x4xf32>
      %42 = tpu.matmul %29, %41, %cst_33 {dimension_numbers = #tpu.dot_dimension_numbers<[2], [1], [1], [2], [0, 0, 0, 1, 1, 2], [0], [0]>} : vector<8x4x32xbf16>, vector<8x32x4xbf16>, vector<8x4x4xf32> -> vector<8x4x4xf32>
      "tpu.trace_stop"() : () -> ()
      %43 = arith.index_cast %arg19 : i32 to index
      %c0_34 = arith.constant 0 : index
      %c0_35 = arith.constant 0 : index
      %c0_36 = arith.constant 0 : index
      %44 = vector.load %arg11[%43, %c0_34, %c0_35, %c0_36] : memref<12x8x1x4xf32, #tpu.memory_space<vmem>>, vector<1x8x1x4xf32>
      %45 = vector.shape_cast %44 : vector<1x8x1x4xf32> to vector<8x1x4xf32>
      %46 = vector.broadcast %45 : vector<8x1x4xf32> to vector<8x4x4xf32>
      %47 = arith.addf %42, %46 : vector<8x4x4xf32>
      %48 = arith.index_cast %arg19 : i32 to index
      %c0_37 = arith.constant 0 : index
      %c0_38 = arith.constant 0 : index
      %c0_39 = arith.constant 0 : index
      %49 = vector.load %arg9[%48, %c0_37, %c0_38, %c0_39] : memref<12x8x32x4xbf16, #tpu.memory_space<vmem>>, vector<1x8x32x4xbf16>
      %50 = vector.shape_cast %49 : vector<1x8x32x4xbf16> to vector<8x32x4xbf16>
      "tpu.trace_start"() <{level = 10 : i32, message = "hsd,hde->hse"}> : () -> ()
      %cst_40 = arith.constant dense<0.000000e+00> : vector<8x4x4xf32>
      %51 = tpu.matmul %29, %50, %cst_40 {dimension_numbers = #tpu.dot_dimension_numbers<[2], [1], [1], [2], [0, 0, 0, 1, 1, 2], [0], [0]>} : vector<8x4x32xbf16>, vector<8x32x4xbf16>, vector<8x4x4xf32> -> vector<8x4x4xf32>
      "tpu.trace_stop"() : () -> ()
      %52 = arith.index_cast %arg19 : i32 to index
      %c0_41 = arith.constant 0 : index
      %c0_42 = arith.constant 0 : index
      %c0_43 = arith.constant 0 : index
      %53 = vector.load %arg12[%52, %c0_41, %c0_42, %c0_43] : memref<12x8x1x4xf32, #tpu.memory_space<vmem>>, vector<1x8x1x4xf32>
      %54 = vector.shape_cast %53 : vector<1x8x1x4xf32> to vector<8x1x4xf32>
      %55 = vector.broadcast %54 : vector<8x1x4xf32> to vector<8x4x4xf32>
      %56 = arith.addf %51, %55 : vector<8x4x4xf32>
      "tpu.trace_start"() <{level = 10 : i32, message = "hqd,hkd->hqk"}> : () -> ()
      %cst_44 = arith.constant dense<0.000000e+00> : vector<8x4x4xf32>
      %57 = tpu.matmul %38, %47, %cst_44 {dimension_numbers = #tpu.dot_dimension_numbers<[2], [2], [1], [1], [0, 0, 0, 1, 1, 1], [0], [0]>} : vector<8x4x4xf32>, vector<8x4x4xf32>, vector<8x4x4xf32> -> vector<8x4x4xf32>
      "tpu.trace_stop"() : () -> ()
      %cst_45 = arith.constant 5.000000e-01 : f32
      %58 = vector.broadcast %cst_45 : f32 to vector<8x4x4xf32>
      %59 = arith.mulf %57, %58 : vector<8x4x4xf32>
      %60 = vector.broadcast %14 : vector<1x1x4xf32> to vector<8x4x4xf32>
      %61 = arith.addf %59, %60 : vector<8x4x4xf32>
      %cst_46 = arith.constant dense<0xFF800000> : vector<8x4xf32>
      %62 = vector.multi_reduction <maximumf>, %61, %cst_46 [2] : vector<8x4x4xf32> to vector<8x4xf32>
      %63 = vector.shape_cast %62 : vector<8x4xf32> to vector<8x4x1xf32>
      %64 = vector.broadcast %63 : vector<8x4x1xf32> to vector<8x4x4xf32>
      %65 = arith.subf %61, %64 : vector<8x4x4xf32>
      %66 = math.exp %65 : vector<8x4x4xf32>
      %cst_47 = arith.constant dense<0.000000e+00> : vector<8x4xf32>
      %67 = vector.multi_reduction <add>, %66, %cst_47 [2] : vector<8x4x4xf32> to vector<8x4xf32>
      %68 = vector.shape_cast %67 : vector<8x4xf32> to vector<8x4x1xf32>
      %69 = tpu.reciprocal %68 {approx = true} : vector<8x4x1xf32> -> vector<8x4x1xf32>
      %70 = vector.broadcast %69 : vector<8x4x1xf32> to vector<8x4x4xf32>
      %71 = arith.mulf %66, %70 : vector<8x4x4xf32>
      "tpu.trace_start"() <{level = 10 : i32, message = "hqk,hkd->hqd"}> : () -> ()
      %cst_48 = arith.constant dense<0.000000e+00> : vector<8x4x4xf32>
      %72 = tpu.matmul %71, %56, %cst_48 {dimension_numbers = #tpu.dot_dimension_numbers<[2], [1], [1], [2], [0, 0, 0, 1, 1, 2], [0], [0]>} : vector<8x4x4xf32>, vector<8x4x4xf32>, vector<8x4x4xf32> -> vector<8x4x4xf32>
      "tpu.trace_stop"() : () -> ()
      %73 = arith.index_cast %arg19 : i32 to index
      %c0_49 = arith.constant 0 : index
      %c0_50 = arith.constant 0 : index
      %74 = vector.load %arg17[%73, %c0_49, %c0_50] : memref<12x6x32xf32, #tpu.memory_space<vmem>>, vector<1x6x32xf32>
      %75 = vector.shape_cast %74 : vector<1x6x32xf32> to vector<6x32xf32>
      %76 = arith.truncf %72 : vector<8x4x4xf32> to vector<8x4x4xbf16>
      %77 = arith.index_cast %arg19 : i32 to index
      %c0_51 = arith.constant 0 : index
      %c0_52 = arith.constant 0 : index
      %c0_53 = arith.constant 0 : index
      %78 = vector.load %arg13[%77, %c0_51, %c0_52, %c0_53] : memref<12x8x4x32xbf16, #tpu.memory_space<vmem>>, vector<1x8x4x32xbf16>
      %79 = vector.shape_cast %78 : vector<1x8x4x32xbf16> to vector<8x4x32xbf16>
      "tpu.trace_start"() <{level = 10 : i32, message = "hqd,hde->hqe"}> : () -> ()
      %cst_54 = arith.constant dense<0.000000e+00> : vector<8x4x32xf32>
      %80 = tpu.matmul %76, %79, %cst_54 {dimension_numbers = #tpu.dot_dimension_numbers<[2], [1], [1], [2], [0, 0, 0, 1, 1, 2], [0], [0]>} : vector<8x4x4xbf16>, vector<8x4x32xbf16>, vector<8x4x32xf32> -> vector<8x4x32xf32>
      "tpu.trace_stop"() : () -> ()
      %cst_55 = arith.constant dense<0.000000e+00> : vector<4x32xf32>
      %81 = vector.multi_reduction <add>, %80, %cst_55 [0] : vector<8x4x32xf32> to vector<4x32xf32>
      %82 = vector.extract_strided_slice %75 {offsets = [0, 0], sizes = [1, 32], strides = [1, 1]} : vector<6x32xf32> to vector<1x32xf32>
      %83 = vector.broadcast %82 : vector<1x32xf32> to vector<4x32xf32>
      %84 = arith.addf %81, %83 : vector<4x32xf32>
      %85 = arith.addf %arg20, %84 : vector<4x32xf32>
      %cst_56 = arith.constant dense<0.000000e+00> : vector<4xf32>
      %86 = vector.multi_reduction <add>, %85, %cst_56 [1] : vector<4x32xf32> to vector<4xf32>
      %87 = vector.shape_cast %86 : vector<4xf32> to vector<4x1xf32>
      %cst_57 = arith.constant 3.200000e+01 : f32
      %88 = vector.broadcast %cst_57 : f32 to vector<4x1xf32>
      %89 = arith.divf %87, %88 : vector<4x1xf32>
      %90 = vector.broadcast %89 : vector<4x1xf32> to vector<4x32xf32>
      %91 = arith.subf %85, %90 : vector<4x32xf32>
      %92 = arith.mulf %91, %91 : vector<4x32xf32>
      %cst_58 = arith.constant dense<0.000000e+00> : vector<4xf32>
      %93 = vector.multi_reduction <add>, %92, %cst_58 [1] : vector<4x32xf32> to vector<4xf32>
      %94 = vector.shape_cast %93 : vector<4xf32> to vector<4x1xf32>
      %cst_59 = arith.constant 3.200000e+01 : f32
      %95 = vector.broadcast %cst_59 : f32 to vector<4x1xf32>
      %96 = arith.divf %94, %95 : vector<4x1xf32>
      %97 = vector.broadcast %89 : vector<4x1xf32> to vector<4x32xf32>
      %98 = arith.subf %85, %97 : vector<4x32xf32>
      %cst_60 = arith.constant 9.99999974E-6 : f32
      %99 = vector.broadcast %cst_60 : f32 to vector<4x1xf32>
      %100 = arith.addf %96, %99 : vector<4x1xf32>
      %101 = math.rsqrt %100 : vector<4x1xf32>
      %102 = vector.broadcast %101 : vector<4x1xf32> to vector<4x32xf32>
      %103 = arith.mulf %98, %102 : vector<4x32xf32>
      %104 = vector.extract_strided_slice %75 {offsets = [1, 0], sizes = [1, 32], strides = [1, 1]} : vector<6x32xf32> to vector<1x32xf32>
      %105 = vector.broadcast %104 : vector<1x32xf32> to vector<4x32xf32>
      %106 = arith.mulf %103, %105 : vector<4x32xf32>
      %107 = vector.extract_strided_slice %75 {offsets = [2, 0], sizes = [1, 32], strides = [1, 1]} : vector<6x32xf32> to vector<1x32xf32>
      %108 = vector.broadcast %107 : vector<1x32xf32> to vector<4x32xf32>
      %109 = arith.addf %106, %108 : vector<4x32xf32>
      %110 = arith.truncf %109 : vector<4x32xf32> to vector<4x32xbf16>
      %111 = arith.index_cast %arg19 : i32 to index
      %c0_61 = arith.constant 0 : index
      %c0_62 = arith.constant 0 : index
      %112 = vector.load %arg14[%111, %c0_61, %c0_62] : memref<12x32x768xbf16, #tpu.memory_space<vmem>>, vector<1x32x768xbf16>
      %113 = vector.shape_cast %112 : vector<1x32x768xbf16> to vector<32x768xbf16>
      %cst_63 = arith.constant dense<0.000000e+00> : vector<4x768xf32>
      %114 = tpu.matmul %110, %113, %cst_63 {dimension_numbers = #tpu.dot_dimension_numbers<[1], [0], [0], [1], [0, 0, 1, 1], [], []>} : vector<4x32xbf16>, vector<32x768xbf16>, vector<4x768xf32> -> vector<4x768xf32>
      %115 = arith.index_cast %arg19 : i32 to index
      %c0_64 = arith.constant 0 : index
      %c0_65 = arith.constant 0 : index
      %116 = vector.load %arg15[%115, %c0_64, %c0_65] : memref<12x1x768xf32, #tpu.memory_space<vmem>>, vector<1x1x768xf32>
      %117 = vector.shape_cast %116 : vector<1x1x768xf32> to vector<1x768xf32>
      %118 = vector.broadcast %117 : vector<1x768xf32> to vector<4x768xf32>
      %119 = arith.addf %114, %118 : vector<4x768xf32>
      %cst_66 = arith.constant 0.000000e+00 : f32
      %120 = vector.broadcast %cst_66 : f32 to vector<4x768xf32>
      %121 = arith.maximumf %119, %120 : vector<4x768xf32>
      %122 = arith.truncf %121 : vector<4x768xf32> to vector<4x768xbf16>
      %123 = arith.index_cast %arg19 : i32 to index
      %c0_67 = arith.constant 0 : index
      %c0_68 = arith.constant 0 : index
      %124 = vector.load %arg16[%123, %c0_67, %c0_68] : memref<12x768x32xbf16, #tpu.memory_space<vmem>>, vector<1x768x32xbf16>
      %125 = vector.shape_cast %124 : vector<1x768x32xbf16> to vector<768x32xbf16>
      %cst_69 = arith.constant dense<0.000000e+00> : vector<4x32xf32>
      %126 = tpu.matmul %122, %125, %cst_69 {dimension_numbers = #tpu.dot_dimension_numbers<[1], [0], [0], [1], [0, 0, 1, 1], [], []>} : vector<4x768xbf16>, vector<768x32xbf16>, vector<4x32xf32> -> vector<4x32xf32>
      %127 = vector.extract_strided_slice %75 {offsets = [5, 0], sizes = [1, 32], strides = [1, 1]} : vector<6x32xf32> to vector<1x32xf32>
      %128 = vector.broadcast %127 : vector<1x32xf32> to vector<4x32xf32>
      %129 = arith.addf %126, %128 : vector<4x32xf32>
      %130 = arith.addf %109, %129 : vector<4x32xf32>
      %cst_70 = arith.constant dense<0.000000e+00> : vector<4xf32>
      %131 = vector.multi_reduction <add>, %130, %cst_70 [1] : vector<4x32xf32> to vector<4xf32>
      %132 = vector.shape_cast %131 : vector<4xf32> to vector<4x1xf32>
      %cst_71 = arith.constant 3.200000e+01 : f32
      %133 = vector.broadcast %cst_71 : f32 to vector<4x1xf32>
      %134 = arith.divf %132, %133 : vector<4x1xf32>
      %135 = vector.broadcast %134 : vector<4x1xf32> to vector<4x32xf32>
      %136 = arith.subf %130, %135 : vector<4x32xf32>
      %137 = arith.mulf %136, %136 : vector<4x32xf32>
      %cst_72 = arith.constant dense<0.000000e+00> : vector<4xf32>
      %138 = vector.multi_reduction <add>, %137, %cst_72 [1] : vector<4x32xf32> to vector<4xf32>
      %139 = vector.shape_cast %138 : vector<4xf32> to vector<4x1xf32>
      %cst_73 = arith.constant 3.200000e+01 : f32
      %140 = vector.broadcast %cst_73 : f32 to vector<4x1xf32>
      %141 = arith.divf %139, %140 : vector<4x1xf32>
      %142 = vector.broadcast %134 : vector<4x1xf32> to vector<4x32xf32>
      %143 = arith.subf %130, %142 : vector<4x32xf32>
      %cst_74 = arith.constant 9.99999974E-6 : f32
      %144 = vector.broadcast %cst_74 : f32 to vector<4x1xf32>
      %145 = arith.addf %141, %144 : vector<4x1xf32>
      %146 = math.rsqrt %145 : vector<4x1xf32>
      %147 = vector.broadcast %146 : vector<4x1xf32> to vector<4x32xf32>
      %148 = arith.mulf %143, %147 : vector<4x32xf32>
      %149 = vector.extract_strided_slice %75 {offsets = [3, 0], sizes = [1, 32], strides = [1, 1]} : vector<6x32xf32> to vector<1x32xf32>
      %150 = vector.broadcast %149 : vector<1x32xf32> to vector<4x32xf32>
      %151 = arith.mulf %148, %150 : vector<4x32xf32>
      %152 = vector.extract_strided_slice %75 {offsets = [4, 0], sizes = [1, 32], strides = [1, 1]} : vector<6x32xf32> to vector<1x32xf32>
      %153 = vector.broadcast %152 : vector<1x32xf32> to vector<4x32xf32>
      %154 = arith.addf %151, %153 : vector<4x32xf32>
      scf.yield %154 : vector<4x32xf32>
    }
    %c12_i32_14 = arith.constant 12 : i32
    %17 = vector.extract_strided_slice %16 {offsets = [0, 0], sizes = [1, 32], strides = [1, 1]} : vector<4x32xf32> to vector<1x32xf32>
    %18 = arith.truncf %17 : vector<1x32xf32> to vector<1x32xbf16>
    %c0_15 = arith.constant 0 : index
    %c0_16 = arith.constant 0 : index
    %19 = vector.load %arg5[%c0_15, %c0_16] : memref<32x2xbf16, #tpu.memory_space<vmem>>, vector<32x2xbf16>
    %cst_17 = arith.constant dense<0.000000e+00> : vector<1x2xf32>
    %20 = tpu.matmul %18, %19, %cst_17 {dimension_numbers = #tpu.dot_dimension_numbers<[1], [0], [0], [1], [0, 0, 1, 1], [], []>} : vector<1x32xbf16>, vector<32x2xbf16>, vector<1x2xf32> -> vector<1x2xf32>
    %c0_18 = arith.constant 0 : index
    %c0_19 = arith.constant 0 : index
    %21 = vector.load %arg6[%c0_18, %c0_19] : memref<1x2xf32, #tpu.memory_space<vmem>>, vector<1x2xf32>
    %22 = arith.addf %20, %21 : vector<1x2xf32>
    %c0_20 = arith.constant 0 : index
    %c0_21 = arith.constant 0 : index
    %c0_22 = arith.constant 0 : index
    %23 = vector.load %arg18[%c0_20, %c0_21, %c0_22] : memref<1x1x2xf32, #tpu.memory_space<vmem>>, vector<1x1x2xf32>
    %24 = vector.shape_cast %23 : vector<1x1x2xf32> to vector<1x2xf32>
    %25 = vector.shape_cast %22 : vector<1x2xf32> to vector<1x1x2xf32>
    tpu.vector_store %arg18[%c0_20, %c0_21, %c0_22], %25 {strides = array<i32>} : memref<1x1x2xf32, #tpu.memory_space<vmem>>, vector<1x1x2xf32>,
    return
  }
  func.func @transform_0(%arg0: i32) -> (i32, i32, i32, i32) {
    %c0_i32 = arith.constant 0 : i32
    %c0_i32_0 = arith.constant 0 : i32
    %c0_i32_1 = arith.constant 0 : i32
    %c0_i32_2 = arith.constant 0 : i32
    return %arg0, %c0_i32, %c0_i32_0, %c0_i32_1 : i32, i32, i32, i32
  }
  func.func @transform_1(%arg0: i32) -> (i32, i32, i32, i32) {
    %c0_i32 = arith.constant 0 : i32
    %c0_i32_0 = arith.constant 0 : i32
    %c0_i32_1 = arith.constant 0 : i32
    %c0_i32_2 = arith.constant 0 : i32
    return %arg0, %c0_i32, %c0_i32_0, %c0_i32_1 : i32, i32, i32, i32
  }
  func.func @transform_2(%arg0: i32) -> (i32, i32) {
    %c0_i32 = arith.constant 0 : i32
    %c0_i32_0 = arith.constant 0 : i32
    %c0_i32_1 = arith.constant 0 : i32
    return %c0_i32, %c0_i32_0 : i32, i32
  }
  func.func @transform_3(%arg0: i32) -> (i32, i32, i32) {
    %c0_i32 = arith.constant 0 : i32
    %c0_i32_0 = arith.constant 0 : i32
    %c0_i32_1 = arith.constant 0 : i32
    return %arg0, %c0_i32, %c0_i32_0 : i32, i32, i32
  }
  func.func @transform_4(%arg0: i32) -> (i32, i32) {
    %c0_i32 = arith.constant 0 : i32
    %c0_i32_0 = arith.constant 0 : i32
    %c0_i32_1 = arith.constant 0 : i32
    return %c0_i32, %c0_i32_0 : i32, i32
  }
  func.func @transform_5(%arg0: i32) -> (i32, i32) {
    %c0_i32 = arith.constant 0 : i32
    %c0_i32_0 = arith.constant 0 : i32
    %c0_i32_1 = arith.constant 0 : i32
    return %c0_i32, %c0_i32_0 : i32, i32
  }
  func.func @transform_6(%arg0: i32) -> (i32, i32, i32, i32) {
    %c0_i32 = arith.constant 0 : i32
    %c0_i32_0 = arith.constant 0 : i32
    %c0_i32_1 = arith.constant 0 : i32
    %c0_i32_2 = arith.constant 0 : i32
    %c0_i32_3 = arith.constant 0 : i32
    return %c0_i32, %c0_i32_0, %c0_i32_1, %c0_i32_2 : i32, i32, i32, i32
  }
  func.func @transform_7(%arg0: i32) -> (i32, i32, i32, i32) {
    %c0_i32 = arith.constant 0 : i32
    %c0_i32_0 = arith.constant 0 : i32
    %c0_i32_1 = arith.constant 0 : i32
    %c0_i32_2 = arith.constant 0 : i32
    %c0_i32_3 = arith.constant 0 : i32
    return %c0_i32, %c0_i32_0, %c0_i32_1, %c0_i32_2 : i32, i32, i32, i32
  }
  func.func @transform_8(%arg0: i32) -> (i32, i32, i32, i32) {
    %c0_i32 = arith.constant 0 : i32
    %c0_i32_0 = arith.constant 0 : i32
    %c0_i32_1 = arith.constant 0 : i32
    %c0_i32_2 = arith.constant 0 : i32
    %c0_i32_3 = arith.constant 0 : i32
    return %c0_i32, %c0_i32_0, %c0_i32_1, %c0_i32_2 : i32, i32, i32, i32
  }
  func.func @transform_9(%arg0: i32) -> (i32, i32, i32, i32) {
    %c0_i32 = arith.constant 0 : i32
    %c0_i32_0 = arith.constant 0 : i32
    %c0_i32_1 = arith.constant 0 : i32
    %c0_i32_2 = arith.constant 0 : i32
    %c0_i32_3 = arith.constant 0 : i32
    return %c0_i32, %c0_i32_0, %c0_i32_1, %c0_i32_2 : i32, i32, i32, i32
  }
  func.func @transform_10(%arg0: i32) -> (i32, i32, i32, i32) {
    %c0_i32 = arith.constant 0 : i32
    %c0_i32_0 = arith.constant 0 : i32
    %c0_i32_1 = arith.constant 0 : i32
    %c0_i32_2 = arith.constant 0 : i32
    %c0_i32_3 = arith.constant 0 : i32
    return %c0_i32, %c0_i32_0, %c0_i32_1, %c0_i32_2 : i32, i32, i32, i32
  }
  func.func @transform_11(%arg0: i32) -> (i32, i32, i32, i32) {
    %c0_i32 = arith.constant 0 : i32
    %c0_i32_0 = arith.constant 0 : i32
    %c0_i32_1 = arith.constant 0 : i32
    %c0_i32_2 = arith.constant 0 : i32
    %c0_i32_3 = arith.constant 0 : i32
    return %c0_i32, %c0_i32_0, %c0_i32_1, %c0_i32_2 : i32, i32, i32, i32
  }
  func.func @transform_12(%arg0: i32) -> (i32, i32, i32, i32) {
    %c0_i32 = arith.constant 0 : i32
    %c0_i32_0 = arith.constant 0 : i32
    %c0_i32_1 = arith.constant 0 : i32
    %c0_i32_2 = arith.constant 0 : i32
    %c0_i32_3 = arith.constant 0 : i32
    return %c0_i32, %c0_i32_0, %c0_i32_1, %c0_i32_2 : i32, i32, i32, i32
  }
  func.func @transform_13(%arg0: i32) -> (i32, i32, i32) {
    %c0_i32 = arith.constant 0 : i32
    %c0_i32_0 = arith.constant 0 : i32
    %c0_i32_1 = arith.constant 0 : i32
    %c0_i32_2 = arith.constant 0 : i32
    return %c0_i32, %c0_i32_0, %c0_i32_1 : i32, i32, i32
  }
  func.func @transform_14(%arg0: i32) -> (i32, i32, i32) {
    %c0_i32 = arith.constant 0 : i32
    %c0_i32_0 = arith.constant 0 : i32
    %c0_i32_1 = arith.constant 0 : i32
    %c0_i32_2 = arith.constant 0 : i32
    return %c0_i32, %c0_i32_0, %c0_i32_1 : i32, i32, i32
  }
  func.func @transform_15(%arg0: i32) -> (i32, i32, i32) {
    %c0_i32 = arith.constant 0 : i32
    %c0_i32_0 = arith.constant 0 : i32
    %c0_i32_1 = arith.constant 0 : i32
    %c0_i32_2 = arith.constant 0 : i32
    return %c0_i32, %c0_i32_0, %c0_i32_1 : i32, i32, i32
  }
  func.func @transform_16(%arg0: i32) -> (i32, i32, i32) {
    %c0_i32 = arith.constant 0 : i32
    %c0_i32_0 = arith.constant 0 : i32
    %c0_i32_1 = arith.constant 0 : i32
    %c0_i32_2 = arith.constant 0 : i32
    return %c0_i32, %c0_i32_0, %c0_i32_1 : i32, i32, i32
  }
  func.func @transform_17(%arg0: i32) -> (i32, i32, i32) {
    %c0_i32 = arith.constant 0 : i32
    %c0_i32_0 = arith.constant 0 : i32
    %c0_i32_1 = arith.constant 0 : i32
    return %arg0, %c0_i32, %c0_i32_0 : i32, i32, i32
  }
}

</mosaic_0001>

<llo_original>
// kernel: codebert_forward.1
$region0: #{codebert_forward.1}
  #allocation0 [shape = 'u32[]', space=smem, size = 0x4, offset = 0x4, fixed_abs, tag = 'smem constant byte address 0x4 - core index']
  #allocation1 [shape = 'u32[144,128]{1,0:T(1,128)}', space=vmem, size = 0x12000, scoped, tag = 'internal scratch']
  %s0 = inlined_call_operand.vmem [shape: f32[2,4,8,32], index: 0, kind: input, shape index: {}]
  %s1 = inlined_call_operand.vmem [shape: f32[2,4,8,1], index: 1, kind: input, shape index: {}]
  %s2 = inlined_call_operand.vmem [shape: f32[4,32], index: 2, kind: input, shape index: {}]
  %s3 = inlined_call_operand.vmem [shape: f32[2,1,4], index: 3, kind: input, shape index: {}]
  %s4 = inlined_call_operand.vmem [shape: bf16[32,2], index: 4, kind: input, shape index: {}]
  %s5 = inlined_call_operand.vmem [shape: f32[1,2], index: 5, kind: input, shape index: {}]
  %s6 = inlined_call_operand.vmem [shape: bf16[12,8,32,4], index: 6, kind: input, shape index: {}]
  %s7 = inlined_call_operand.vmem [shape: bf16[12,8,32,4], index: 7, kind: input, shape index: {}]
  %s8 = inlined_call_operand.vmem [shape: bf16[12,8,32,4], index: 8, kind: input, shape index: {}]
  %s9 = inlined_call_operand.vmem [shape: f32[12,8,1,4], index: 9, kind: input, shape index: {}]
  %s10 = inlined_call_operand.vmem [shape: f32[12,8,1,4], index: 10, kind: input, shape index: {}]
  %s11 = inlined_call_operand.vmem [shape: f32[12,8,1,4], index: 11, kind: input, shape index: {}]
  %s12 = inlined_call_operand.vmem [shape: bf16[12,8,4,32], index: 12, kind: input, shape index: {}]
  %s13 = inlined_call_operand.vmem [shape: bf16[12,32,768], index: 13, kind: input, shape index: {}]
  %s14 = inlined_call_operand.vmem [shape: f32[12,1,768], index: 14, kind: input, shape index: {}]
  %s15 = inlined_call_operand.vmem [shape: bf16[12,768,32], index: 15, kind: input, shape index: {}]
  %s16 = inlined_call_operand.vmem [shape: f32[12,6,32], index: 16, kind: input, shape index: {}]
  %s17 = inlined_call_operand.hbm [shape: f32[2,1,2], index: 17, kind: output, shape index: {}]
  %s18 = sld [smem:[#allocation0]]
  $region108: #{codebert_forward.1} parent=0
    _
  %s20 = ssub.s32 1, %s18
  %s21 = scalar_select 0, %s20, %s18
  $region1: #{codebert_forward.1} parent=0
    #allocation2 [shape = 'u8[1024]{0}', space=vmem, size = 0x400, scoped, tag = 'output window, operand 0']
    #allocation3 [shape = 's32[2]{0}', space=sflag, size = 0x8, scoped, tag = 'scoped memory for codebert_forward.1']
    %22 = vsyncpa [#allocation3], 0
    %s23 = scalar_lea.sflag [#allocation3], 1
    %24 = vsyncpa %s23, 0
    loop: start=0, step=1, limit=4
    $region2: #{codebert_forward.1} parent=1 // loop_pre_header
      _
    $region3: #{codebert_forward.1} parent=1 // loop_header
      %s26 = sphi 0, %s30
      %p27 = scmp.ge.s32.totalorder %s26, 4
      %s36 = sphi 0, %s38
      %s39 = sphi 0, %s36
      %s40 = sphi 0, %s39
      %s56 = sphi 0, %s40
      %s62 = sphi 0, %s64
      %s65 = sphi 0, %s62
      %s66 = sphi 0, %s65
      %s82 = sphi 0, %s66
      %s86 = sphi 0, %s86
      %s88 = sphi 0, %s86
      %s89 = sphi 0, %s88
      %s103 = sphi 0, %s89
      %s109 = sphi 0, %s111
      %s112 = sphi 0, %s109
      %s113 = sphi 0, %s112
      %s129 = sphi 0, %s113
      %s133 = sphi 0, %s133
      %s135 = sphi 0, %s133
      %s136 = sphi 0, %s135
      %s150 = sphi 0, %s136
      %s154 = sphi 0, %s154
      %s156 = sphi 0, %s154
      %s157 = sphi 0, %s156
      %s171 = sphi 0, %s157
      %s175 = sphi 0, %s175
      %s177 = sphi 0, %s175
      %s178 = sphi 0, %s177
      %s192 = sphi 0, %s178
      %s196 = sphi 0, %s196
      %s198 = sphi 0, %s196
      %s199 = sphi 0, %s198
      %s213 = sphi 0, %s199
      %s217 = sphi 0, %s217
      %s219 = sphi 0, %s217
      %s220 = sphi 0, %s219
      %s234 = sphi 0, %s220
      %s238 = sphi 0, %s238
      %s240 = sphi 0, %s238
      %s241 = sphi 0, %s240
      %s255 = sphi 0, %s241
      %s259 = sphi 0, %s259
      %s261 = sphi 0, %s259
      %s262 = sphi 0, %s261
      %s276 = sphi 0, %s262
      %s280 = sphi 0, %s280
      %s282 = sphi 0, %s280
      %s283 = sphi 0, %s282
      %s297 = sphi 0, %s283
      %s301 = sphi 0, %s301
      %s303 = sphi 0, %s301
      %s304 = sphi 0, %s303
      %s318 = sphi 0, %s304
      %s322 = sphi 0, %s322
      %s324 = sphi 0, %s322
      %s325 = sphi 0, %s324
      %s339 = sphi 0, %s325
      %s343 = sphi 0, %s343
      %s345 = sphi 0, %s343
      %s346 = sphi 0, %s345
      %s360 = sphi 0, %s346
      %s364 = sphi 0, %s364
      %s366 = sphi 0, %s364
      %s367 = sphi 0, %s366
      %s381 = sphi 0, %s367
      %s385 = sphi 0, %s385
      %s387 = sphi 0, %s385
      %s388 = sphi 0, %s387
      %s402 = sphi 0, %s388
      %s408 = sphi 0, %s410
      %s411 = sphi 0, %s408
      %s412 = sphi 0, %s411
      %s428 = sphi 0, %s412
    $region4: #{codebert_forward.1} parent=1 // loop_header_branch
      %29 = sbr.rel (%p27) target = $region8
    $region5: #{codebert_forward.1} parent=1 // loop_body
      %s31 = ssub.s32 %s26, 1
      %s32 = ssub.s32 %s26, 2
      %s33 = sadd.s32 %s26, 1
      %s34 = ssub.s32 %s26, %s33
      %p35 = scmp.eq.s32.totalorder %s34, 0
      %s37 = sadd.s32 %s36, 1
      %s38 = scalar_select %p35, %s36, %s37
      %p41 = pneg %p35
      %p42 = scmp.eq.s32.totalorder %s26, 1
      %p43 = por %p41, %p42
      %p44 = scmp.ne.s32.totalorder %s36, %s39
      %p45 = scmp.eq.s32.totalorder %s26, 0
      %p46 = por %p44, %p45
      %p47 = scmp.ne.s32.totalorder %s36, %s39
      %p48 = scmp.eq.s32.totalorder %s31, 1
      %p49 = por %p47, %p48
      %p50 = scmp.ne.s32.totalorder %s39, %s40
      %p51 = scmp.eq.s32.totalorder %s31, 0
      %p52 = por %p50, %p51
      %p53 = scmp.ne.s32.totalorder %s39, %s40
      %p54 = scmp.eq.s32.totalorder %s32, 1
      %p55 = por %p53, %p54
      %p57 = scmp.ne.s32.totalorder %s40, %s56
      %p58 = scmp.eq.s32.totalorder %s32, 0
      %p59 = por %p57, %p58
      %s60 = ssub.s32 %s26, %s33
      %p61 = scmp.eq.s32.totalorder %s60, 0
      %s63 = sadd.s32 %s62, 1
      %s64 = scalar_select %p61, %s62, %s63
      %p67 = pneg %p61
      %p68 = scmp.eq.s32.totalorder %s26, 1
      %p69 = por %p67, %p68
      %p70 = scmp.ne.s32.totalorder %s62, %s65
      %p71 = scmp.eq.s32.totalorder %s26, 0
      %p72 = por %p70, %p71
      %p73 = scmp.ne.s32.totalorder %s62, %s65
      %p74 = scmp.eq.s32.totalorder %s31, 1
      %p75 = por %p73, %p74
      %p76 = scmp.ne.s32.totalorder %s65, %s66
      %p77 = scmp.eq.s32.totalorder %s31, 0
      %p78 = por %p76, %p77
      %p79 = scmp.ne.s32.totalorder %s65, %s66
      %p80 = scmp.eq.s32.totalorder %s32, 1
      %p81 = por %p79, %p80
      %p83 = scmp.ne.s32.totalorder %s66, %s82
      %p84 = scmp.eq.s32.totalorder %s32, 0
      %p85 = por %p83, %p84
      %s87 = sadd.s32 %s86, 1
      %p90 = scmp.eq.s32.totalorder %s26, 1
      %p91 = scmp.ne.s32.totalorder %s86, %s88
      %p92 = scmp.eq.s32.totalorder %s26, 0
      %p93 = por %p91, %p92
      %p94 = scmp.ne.s32.totalorder %s86, %s88
      %p95 = scmp.eq.s32.totalorder %s31, 1
      %p96 = por %p94, %p95
      %p97 = scmp.ne.s32.totalorder %s88, %s89
      %p98 = scmp.eq.s32.totalorder %s31, 0
      %p99 = por %p97, %p98
      %p100 = scmp.ne.s32.totalorder %s88, %s89
      %p101 = scmp.eq.s32.totalorder %s32, 1
      %p102 = por %p100, %p101
      %p104 = scmp.ne.s32.totalorder %s89, %s103
      %p105 = scmp.eq.s32.totalorder %s32, 0
      %p106 = por %p104, %p105
      %s107 = ssub.s32 %s26, %s33
      %p108 = scmp.eq.s32.totalorder %s107, 0
      %s110 = sadd.s32 %s109, 1
      %s111 = scalar_select %p108, %s109, %s110
      %p114 = pneg %p108
      %p115 = scmp.eq.s32.totalorder %s26, 1
      %p116 = por %p114, %p115
      %p117 = scmp.ne.s32.totalorder %s109, %s112
      %p118 = scmp.eq.s32.totalorder %s26, 0
      %p119 = por %p117, %p118
      %p120 = scmp.ne.s32.totalorder %s109, %s112
      %p121 = scmp.eq.s32.totalorder %s31, 1
      %p122 = por %p120, %p121
      %p123 = scmp.ne.s32.totalorder %s112, %s113
      %p124 = scmp.eq.s32.totalorder %s31, 0
      %p125 = por %p123, %p124
      %p126 = scmp.ne.s32.totalorder %s112, %s113
      %p127 = scmp.eq.s32.totalorder %s32, 1
      %p128 = por %p126, %p127
      %p130 = scmp.ne.s32.totalorder %s113, %s129
      %p131 = scmp.eq.s32.totalorder %s32, 0
      %p132 = por %p130, %p131
      %s134 = sadd.s32 %s133, 1
      %p137 = scmp.eq.s32.totalorder %s26, 1
      %p138 = scmp.ne.s32.totalorder %s133, %s135
      %p139 = scmp.eq.s32.totalorder %s26, 0
      %p140 = por %p138, %p139
      %p141 = scmp.ne.s32.totalorder %s133, %s135
      %p142 = scmp.eq.s32.totalorder %s31, 1
      %p143 = por %p141, %p142
      %p144 = scmp.ne.s32.totalorder %s135, %s136
      %p145 = scmp.eq.s32.totalorder %s31, 0
      %p146 = por %p144, %p145
      %p147 = scmp.ne.s32.totalorder %s135, %s136
      %p148 = scmp.eq.s32.totalorder %s32, 1
      %p149 = por %p147, %p148
      %p151 = scmp.ne.s32.totalorder %s136, %s150
      %p152 = scmp.eq.s32.totalorder %s32, 0
      %p153 = por %p151, %p152
      %s155 = sadd.s32 %s154, 1
      %p158 = scmp.eq.s32.totalorder %s26, 1
      %p159 = scmp.ne.s32.totalorder %s154, %s156
      %p160 = scmp.eq.s32.totalorder %s26, 0
      %p161 = por %p159, %p160
      %p162 = scmp.ne.s32.totalorder %s154, %s156
      %p163 = scmp.eq.s32.totalorder %s31, 1
      %p164 = por %p162, %p163
      %p165 = scmp.ne.s32.totalorder %s156, %s157
      %p166 = scmp.eq.s32.totalorder %s31, 0
      %p167 = por %p165, %p166
      %p168 = scmp.ne.s32.totalorder %s156, %s157
      %p169 = scmp.eq.s32.totalorder %s32, 1
      %p170 = por %p168, %p169
      %p172 = scmp.ne.s32.totalorder %s157, %s171
      %p173 = scmp.eq.s32.totalorder %s32, 0
      %p174 = por %p172, %p173
      %s176 = sadd.s32 %s175, 1
      %p179 = scmp.eq.s32.totalorder %s26, 1
      %p180 = scmp.ne.s32.totalorder %s175, %s177
      %p181 = scmp.eq.s32.totalorder %s26, 0
      %p182 = por %p180, %p181
      %p183 = scmp.ne.s32.totalorder %s175, %s177
      %p184 = scmp.eq.s32.totalorder %s31, 1
      %p185 = por %p183, %p184
      %p186 = scmp.ne.s32.totalorder %s177, %s178
      %p187 = scmp.eq.s32.totalorder %s31, 0
      %p188 = por %p186, %p187
      %p189 = scmp.ne.s32.totalorder %s177, %s178
      %p190 = scmp.eq.s32.totalorder %s32, 1
      %p191 = por %p189, %p190
      %p193 = scmp.ne.s32.totalorder %s178, %s192
      %p194 = scmp.eq.s32.totalorder %s32, 0
      %p195 = por %p193, %p194
      %s197 = sadd.s32 %s196, 1
      %p200 = scmp.eq.s32.totalorder %s26, 1
      %p201 = scmp.ne.s32.totalorder %s196, %s198
      %p202 = scmp.eq.s32.totalorder %s26, 0
      %p203 = por %p201, %p202
      %p204 = scmp.ne.s32.totalorder %s196, %s198
      %p205 = scmp.eq.s32.totalorder %s31, 1
      %p206 = por %p204, %p205
      %p207 = scmp.ne.s32.totalorder %s198, %s199
      %p208 = scmp.eq.s32.totalorder %s31, 0
      %p209 = por %p207, %p208
      %p210 = scmp.ne.s32.totalorder %s198, %s199
      %p211 = scmp.eq.s32.totalorder %s32, 1
      %p212 = por %p210, %p211
      %p214 = scmp.ne.s32.totalorder %s199, %s213
      %p215 = scmp.eq.s32.totalorder %s32, 0
      %p216 = por %p214, %p215
      %s218 = sadd.s32 %s217, 1
      %p221 = scmp.eq.s32.totalorder %s26, 1
      %p222 = scmp.ne.s32.totalorder %s217, %s219
      %p223 = scmp.eq.s32.totalorder %s26, 0
      %p224 = por %p222, %p223
      %p225 = scmp.ne.s32.totalorder %s217, %s219
      %p226 = scmp.eq.s32.totalorder %s31, 1
      %p227 = por %p225, %p226
      %p228 = scmp.ne.s32.totalorder %s219, %s220
      %p229 = scmp.eq.s32.totalorder %s31, 0
      %p230 = por %p228, %p229
      %p231 = scmp.ne.s32.totalorder %s219, %s220
      %p232 = scmp.eq.s32.totalorder %s32, 1
      %p233 = por %p231, %p232
      %p235 = scmp.ne.s32.totalorder %s220, %s234
      %p236 = scmp.eq.s32.totalorder %s32, 0
      %p237 = por %p235, %p236
      %s239 = sadd.s32 %s238, 1
      %p242 = scmp.eq.s32.totalorder %s26, 1
      %p243 = scmp.ne.s32.totalorder %s238, %s240
      %p244 = scmp.eq.s32.totalorder %s26, 0
      %p245 = por %p243, %p244
      %p246 = scmp.ne.s32.totalorder %s238, %s240
      %p247 = scmp.eq.s32.totalorder %s31, 1
      %p248 = por %p246, %p247
      %p249 = scmp.ne.s32.totalorder %s240, %s241
      %p250 = scmp.eq.s32.totalorder %s31, 0
      %p251 = por %p249, %p250
      %p252 = scmp.ne.s32.totalorder %s240, %s241
      %p253 = scmp.eq.s32.totalorder %s32, 1
      %p254 = por %p252, %p253
      %p256 = scmp.ne.s32.totalorder %s241, %s255
      %p257 = scmp.eq.s32.totalorder %s32, 0
      %p258 = por %p256, %p257
      %s260 = sadd.s32 %s259, 1
      %p263 = scmp.eq.s32.totalorder %s26, 1
      %p264 = scmp.ne.s32.totalorder %s259, %s261
      %p265 = scmp.eq.s32.totalorder %s26, 0
      %p266 = por %p264, %p265
      %p267 = scmp.ne.s32.totalorder %s259, %s261
      %p268 = scmp.eq.s32.totalorder %s31, 1
      %p269 = por %p267, %p268
      %p270 = scmp.ne.s32.totalorder %s261, %s262
      %p271 = scmp.eq.s32.totalorder %s31, 0
      %p272 = por %p270, %p271
      %p273 = scmp.ne.s32.totalorder %s261, %s262
      %p274 = scmp.eq.s32.totalorder %s32, 1
      %p275 = por %p273, %p274
      %p277 = scmp.ne.s32.totalorder %s262, %s276
      %p278 = scmp.eq.s32.totalorder %s32, 0
      %p279 = por %p277, %p278
      %s281 = sadd.s32 %s280, 1
      %p284 = scmp.eq.s32.totalorder %s26, 1
      %p285 = scmp.ne.s32.totalorder %s280, %s282
      %p286 = scmp.eq.s32.totalorder %s26, 0
      %p287 = por %p285, %p286
      %p288 = scmp.ne.s32.totalorder %s280, %s282
      %p289 = scmp.eq.s32.totalorder %s31, 1
      %p290 = por %p288, %p289
      %p291 = scmp.ne.s32.totalorder %s282, %s283
      %p292 = scmp.eq.s32.totalorder %s31, 0
      %p293 = por %p291, %p292
      %p294 = scmp.ne.s32.totalorder %s282, %s283
      %p295 = scmp.eq.s32.totalorder %s32, 1
      %p296 = por %p294, %p295
      %p298 = scmp.ne.s32.totalorder %s283, %s297
      %p299 = scmp.eq.s32.totalorder %s32, 0
      %p300 = por %p298, %p299
      %s302 = sadd.s32 %s301, 1
      %p305 = scmp.eq.s32.totalorder %s26, 1
      %p306 = scmp.ne.s32.totalorder %s301, %s303
      %p307 = scmp.eq.s32.totalorder %s26, 0
      %p308 = por %p306, %p307
      %p309 = scmp.ne.s32.totalorder %s301, %s303
      %p310 = scmp.eq.s32.totalorder %s31, 1
      %p311 = por %p309, %p310
      %p312 = scmp.ne.s32.totalorder %s303, %s304
      %p313 = scmp.eq.s32.totalorder %s31, 0
      %p314 = por %p312, %p313
      %p315 = scmp.ne.s32.totalorder %s303, %s304
      %p316 = scmp.eq.s32.totalorder %s32, 1
      %p317 = por %p315, %p316
      %p319 = scmp.ne.s32.totalorder %s304, %s318
      %p320 = scmp.eq.s32.totalorder %s32, 0
      %p321 = por %p319, %p320
      %s323 = sadd.s32 %s322, 1
      %p326 = scmp.eq.s32.totalorder %s26, 1
      %p327 = scmp.ne.s32.totalorder %s322, %s324
      %p328 = scmp.eq.s32.totalorder %s26, 0
      %p329 = por %p327, %p328
      %p330 = scmp.ne.s32.totalorder %s322, %s324
      %p331 = scmp.eq.s32.totalorder %s31, 1
      %p332 = por %p330, %p331
      %p333 = scmp.ne.s32.totalorder %s324, %s325
      %p334 = scmp.eq.s32.totalorder %s31, 0
      %p335 = por %p333, %p334
      %p336 = scmp.ne.s32.totalorder %s324, %s325
      %p337 = scmp.eq.s32.totalorder %s32, 1
      %p338 = por %p336, %p337
      %p340 = scmp.ne.s32.totalorder %s325, %s339
      %p341 = scmp.eq.s32.totalorder %s32, 0
      %p342 = por %p340, %p341
      %s344 = sadd.s32 %s343, 1
      %p347 = scmp.eq.s32.totalorder %s26, 1
      %p348 = scmp.ne.s32.totalorder %s343, %s345
      %p349 = scmp.eq.s32.totalorder %s26, 0
      %p350 = por %p348, %p349
      %p351 = scmp.ne.s32.totalorder %s343, %s345
      %p352 = scmp.eq.s32.totalorder %s31, 1
      %p353 = por %p351, %p352
      %p354 = scmp.ne.s32.totalorder %s345, %s346
      %p355 = scmp.eq.s32.totalorder %s31, 0
      %p356 = por %p354, %p355
      %p357 = scmp.ne.s32.totalorder %s345, %s346
      %p358 = scmp.eq.s32.totalorder %s32, 1
      %p359 = por %p357, %p358
      %p361 = scmp.ne.s32.totalorder %s346, %s360
      %p362 = scmp.eq.s32.totalorder %s32, 0
      %p363 = por %p361, %p362
      %s365 = sadd.s32 %s364, 1
      %p368 = scmp.eq.s32.totalorder %s26, 1
      %p369 = scmp.ne.s32.totalorder %s364, %s366
      %p370 = scmp.eq.s32.totalorder %s26, 0
      %p371 = por %p369, %p370
      %p372 = scmp.ne.s32.totalorder %s364, %s366
      %p373 = scmp.eq.s32.totalorder %s31, 1
      %p374 = por %p372, %p373
      %p375 = scmp.ne.s32.totalorder %s366, %s367
      %p376 = scmp.eq.s32.totalorder %s31, 0
      %p377 = por %p375, %p376
      %p378 = scmp.ne.s32.totalorder %s366, %s367
      %p379 = scmp.eq.s32.totalorder %s32, 1
      %p380 = por %p378, %p379
      %p382 = scmp.ne.s32.totalorder %s367, %s381
      %p383 = scmp.eq.s32.totalorder %s32, 0
      %p384 = por %p382, %p383
      %s386 = sadd.s32 %s385, 1
      %p389 = scmp.eq.s32.totalorder %s26, 1
      %p390 = scmp.ne.s32.totalorder %s385, %s387
      %p391 = scmp.eq.s32.totalorder %s26, 0
      %p392 = por %p390, %p391
      %p393 = scmp.ne.s32.totalorder %s385, %s387
      %p394 = scmp.eq.s32.totalorder %s31, 1
      %p395 = por %p393, %p394
      %p396 = scmp.ne.s32.totalorder %s387, %s388
      %p397 = scmp.eq.s32.totalorder %s31, 0
      %p398 = por %p396, %p397
      %p399 = scmp.ne.s32.totalorder %s387, %s388
      %p400 = scmp.eq.s32.totalorder %s32, 1
      %p401 = por %p399, %p400
      %p403 = scmp.ne.s32.totalorder %s388, %s402
      %p404 = scmp.eq.s32.totalorder %s32, 0
      %p405 = por %p403, %p404
      %s406 = ssub.s32 %s26, %s33
      %p407 = scmp.eq.s32.totalorder %s406, 0
      %s409 = sadd.s32 %s408, 1
      %s410 = scalar_select %p407, %s408, %s409
      %p413 = pneg %p407
      %p414 = scmp.eq.s32.totalorder %s26, 1
      %p415 = por %p413, %p414
      %p416 = scmp.ne.s32.totalorder %s408, %s411
      %p417 = scmp.eq.s32.totalorder %s26, 0
      %p418 = por %p416, %p417
      %p419 = scmp.ne.s32.totalorder %s408, %s411
      %p420 = scmp.eq.s32.totalorder %s31, 1
      %p421 = por %p419, %p420
      %p422 = scmp.ne.s32.totalorder %s411, %s412
      %p423 = scmp.eq.s32.totalorder %s31, 0
      %p424 = por %p422, %p423
      %p425 = scmp.ne.s32.totalorder %s411, %s412
      %p426 = scmp.eq.s32.totalorder %s32, 1
      %p427 = por %p425, %p426
      %p429 = scmp.ne.s32.totalorder %s412, %s428
      %p430 = scmp.eq.s32.totalorder %s32, 0
      %p431 = por %p429, %p430
      %p432 = scmp.le.s32.totalorder 1, %s26
      %p433 = scmp.lt.s32.totalorder %s26, 3
      %p434 = pnand %p432, %p433
      %p435 = pneg %p434
      // Predicated region
      $region9: #{codebert_forward.1} parent=5 // pred_check
        _
      $region10: #{codebert_forward.1} parent=5 // pred_check_branch
        %437 = sbr.rel (%p434) target = $region12
      $region11: #{codebert_forward.1} parent=5 // pred_region
        %s438 = ssub.s32 %s26, 1
        // Predicated region
        $region13: #{codebert_forward.1} parent=11 // pred_check
          %p439 = pneg %p99
        $region14: #{codebert_forward.1} parent=11 // pred_check_branch
          %441 = sbr.rel (%p439) target = $region16
        $region15: #{codebert_forward.1} parent=11 // pred_region
          _
        $region16: #{codebert_forward.1} parent=11 // pred_fallthru
          _
        // Predicated region
        $region17: #{codebert_forward.1} parent=11 // pred_check
          %p442 = pneg %p146
        $region18: #{codebert_forward.1} parent=11 // pred_check_branch
          %444 = sbr.rel (%p442) target = $region20
        $region19: #{codebert_forward.1} parent=11 // pred_region
          _
        $region20: #{codebert_forward.1} parent=11 // pred_fallthru
          _
        // Predicated region
        $region21: #{codebert_forward.1} parent=11 // pred_check
          %p445 = pneg %p167
        $region22: #{codebert_forward.1} parent=11 // pred_check_branch
          %447 = sbr.rel (%p445) target = $region24
        $region23: #{codebert_forward.1} parent=11 // pred_region
          _
        $region24: #{codebert_forward.1} parent=11 // pred_fallthru
          _
        // Predicated region
        $region25: #{codebert_forward.1} parent=11 // pred_check
          %p448 = pneg %p188
        $region26: #{codebert_forward.1} parent=11 // pred_check_branch
          %450 = sbr.rel (%p448) target = $region28
        $region27: #{codebert_forward.1} parent=11 // pred_region
          _
        $region28: #{codebert_forward.1} parent=11 // pred_fallthru
          _
        // Predicated region
        $region29: #{codebert_forward.1} parent=11 // pred_check
          %p451 = pneg %p209
        $region30: #{codebert_forward.1} parent=11 // pred_check_branch
          %453 = sbr.rel (%p451) target = $region32
        $region31: #{codebert_forward.1} parent=11 // pred_region
          _
        $region32: #{codebert_forward.1} parent=11 // pred_fallthru
          _
        // Predicated region
        $region33: #{codebert_forward.1} parent=11 // pred_check
          %p454 = pneg %p230
        $region34: #{codebert_forward.1} parent=11 // pred_check_branch
          %456 = sbr.rel (%p454) target = $region36
        $region35: #{codebert_forward.1} parent=11 // pred_region
          _
        $region36: #{codebert_forward.1} parent=11 // pred_fallthru
          _
        // Predicated region
        $region37: #{codebert_forward.1} parent=11 // pred_check
          %p457 = pneg %p251
        $region38: #{codebert_forward.1} parent=11 // pred_check_branch
          %459 = sbr.rel (%p457) target = $region40
        $region39: #{codebert_forward.1} parent=11 // pred_region
          _
        $region40: #{codebert_forward.1} parent=11 // pred_fallthru
          _
        // Predicated region
        $region41: #{codebert_forward.1} parent=11 // pred_check
          %p460 = pneg %p272
        $region42: #{codebert_forward.1} parent=11 // pred_check_branch
          %462 = sbr.rel (%p460) target = $region44
        $region43: #{codebert_forward.1} parent=11 // pred_region
          _
        $region44: #{codebert_forward.1} parent=11 // pred_fallthru
          _
        // Predicated region
        $region45: #{codebert_forward.1} parent=11 // pred_check
          %p463 = pneg %p293
        $region46: #{codebert_forward.1} parent=11 // pred_check_branch
          %465 = sbr.rel (%p463) target = $region48
        $region47: #{codebert_forward.1} parent=11 // pred_region
          _
        $region48: #{codebert_forward.1} parent=11 // pred_fallthru
          _
        // Predicated region
        $region49: #{codebert_forward.1} parent=11 // pred_check
          %p466 = pneg %p314
        $region50: #{codebert_forward.1} parent=11 // pred_check_branch
          %468 = sbr.rel (%p466) target = $region52
        $region51: #{codebert_forward.1} parent=11 // pred_region
          _
        $region52: #{codebert_forward.1} parent=11 // pred_fallthru
          _
        // Predicated region
        $region53: #{codebert_forward.1} parent=11 // pred_check
          %p469 = pneg %p335
        $region54: #{codebert_forward.1} parent=11 // pred_check_branch
          %471 = sbr.rel (%p469) target = $region56
        $region55: #{codebert_forward.1} parent=11 // pred_region
          _
        $region56: #{codebert_forward.1} parent=11 // pred_fallthru
          _
        // Predicated region
        $region57: #{codebert_forward.1} parent=11 // pred_check
          %p472 = pneg %p356
        $region58: #{codebert_forward.1} parent=11 // pred_check_branch
          %474 = sbr.rel (%p472) target = $region60
        $region59: #{codebert_forward.1} parent=11 // pred_region
          _
        $region60: #{codebert_forward.1} parent=11 // pred_fallthru
          _
        // Predicated region
        $region61: #{codebert_forward.1} parent=11 // pred_check
          %p475 = pneg %p377
        $region62: #{codebert_forward.1} parent=11 // pred_check_branch
          %477 = sbr.rel (%p475) target = $region64
        $region63: #{codebert_forward.1} parent=11 // pred_region
          _
        $region64: #{codebert_forward.1} parent=11 // pred_fallthru
          _
        // Predicated region
        $region65: #{codebert_forward.1} parent=11 // pred_check
          %p478 = pneg %p398
        $region66: #{codebert_forward.1} parent=11 // pred_check_branch
          %480 = sbr.rel (%p478) target = $region68
        $region67: #{codebert_forward.1} parent=11 // pred_region
          _
        $region68: #{codebert_forward.1} parent=11 // pred_fallthru
          _
      $region12: #{codebert_forward.1} parent=5 // pred_fallthru
        _
      %p481 = scmp.lt.s32.totalorder %s26, 2
      // Predicated region
      $region69: #{codebert_forward.1} parent=5 // pred_check
        %p482 = pneg %p481
      $region70: #{codebert_forward.1} parent=5 // pred_check_branch
        %484 = sbr.rel (%p482) target = $region72
      $region71: #{codebert_forward.1} parent=5 // pred_region
        // Predicated region
        $region73: #{codebert_forward.1} parent=71 // pred_check
          %p485 = pneg %p46
        $region74: #{codebert_forward.1} parent=71 // pred_check_branch
          %487 = sbr.rel (%p485) target = $region76
        $region75: #{codebert_forward.1} parent=71 // pred_region
          %p488 = scmp.lt.s32.totalorder %s26, 1
          %s489 = scalar_select %p488, %s26, 1
          %s490 = smul.addr %s489, 4
          %s491 = smul.addr %s490, 8
          %s492 = scalar_lea.vmem %s0, %s491
        $region76: #{codebert_forward.1} parent=71 // pred_fallthru
          _
        // Predicated region
        $region77: #{codebert_forward.1} parent=71 // pred_check
          %p493 = pneg %p72
        $region78: #{codebert_forward.1} parent=71 // pred_check_branch
          %495 = sbr.rel (%p493) target = $region80
        $region79: #{codebert_forward.1} parent=71 // pred_region
          %p496 = scmp.lt.s32.totalorder %s26, 1
          %s497 = scalar_select %p496, %s26, 1
          %s498 = smul.addr %s497, 4
          %s499 = smul.addr %s498, 8
          %s500 = scalar_lea.vmem %s1, %s499
        $region80: #{codebert_forward.1} parent=71 // pred_fallthru
          _
        // Predicated region
        $region81: #{codebert_forward.1} parent=71 // pred_check
          %p501 = pneg %p119
        $region82: #{codebert_forward.1} parent=71 // pred_check_branch
          %503 = sbr.rel (%p501) target = $region84
        $region83: #{codebert_forward.1} parent=71 // pred_region
          %p504 = scmp.lt.s32.totalorder %s26, 1
          %s505 = scalar_select %p504, %s26, 1
          %s506 = scalar_lea.vmem %s3, %s505
        $region84: #{codebert_forward.1} parent=71 // pred_fallthru
          _
      $region72: #{codebert_forward.1} parent=5 // pred_fallthru
        _
      %p507 = scmp.le.s32.totalorder 1, %s26
      %p508 = scmp.lt.s32.totalorder %s26, 3
      %p509 = pnand %p507, %p508
      %p510 = pneg %p509
      // Predicated region
      $region85: #{codebert_forward.1} parent=5 // pred_check
        _
      $region86: #{codebert_forward.1} parent=5 // pred_check_branch
        %512 = sbr.rel (%p509) target = $region88
      $region87: #{codebert_forward.1} parent=5 // pred_region
        %s513 = ssub.s32 %s26, 1
        %p514 = scmp.lt.s32.totalorder %s31, 1
        %s515 = scalar_select %p514, %s31, 1
        %s516 = smul.addr %s515, 4
        %s517 = smul.addr %s516, 8
        %s518 = scalar_lea.vmem %s0, %s517
        %p519 = pneg %p52
        %p520 = pneg %p49
        %p521 = scmp.lt.s32.totalorder %s31, 1
        %s522 = scalar_select %p521, %s31, 1
        %s523 = smul.addr %s522, 4
        %s524 = smul.addr %s523, 8
        %s525 = scalar_lea.vmem %s1, %s524
        %p526 = pneg %p78
        %p527 = pneg %p75
        %p528 = pneg %p99
        %p529 = pneg %p96
        %p530 = scmp.lt.s32.totalorder %s31, 1
        %s531 = scalar_select %p530, %s31, 1
        %s532 = scalar_lea.vmem %s3, %s531
        %p533 = pneg %p125
        %p534 = pneg %p122
        %p535 = pneg %p146
        %p536 = pneg %p143
        %p537 = pneg %p167
        %p538 = pneg %p164
        %p539 = pneg %p188
        %p540 = pneg %p185
        %p541 = pneg %p209
        %p542 = pneg %p206
        %p543 = pneg %p230
        %p544 = pneg %p227
        %p545 = pneg %p251
        %p546 = pneg %p248
        %p547 = pneg %p272
        %p548 = pneg %p269
        %p549 = pneg %p293
        %p550 = pneg %p290
        %p551 = pneg %p314
        %p552 = pneg %p311
        %p553 = pneg %p335
        %p554 = pneg %p332
        %p555 = pneg %p356
        %p556 = pneg %p353
        %p557 = pneg %p377
        %p558 = pneg %p374
        %p559 = pneg %p398
        %p560 = pneg %p395
        %p561 = pneg %p424
        %p562 = pneg %p421
        %s563 = sand.u32 %s411, 1
        %s564 = scalar_lea.sflag [#allocation3], %s563
        %s565 = sand.u32 %s411, 1
        %s566 = scalar_lea.vmem [#allocation2], %s565
        %p567 = scmp.lt.s32.totalorder %s31, 1
        %s568 = scalar_select %p567, %s31, 1
        %s569 = smul.addr %s568, 4
        %s570 = smul.addr %s569, 8
        %s571 = scalar_lea.vmem %s0, %s570
        %p572 = scmp.lt.s32.totalorder %s31, 1
        %s573 = scalar_select %p572, %s31, 1
        %s574 = smul.addr %s573, 4
        %s575 = smul.addr %s574, 8
        %s576 = scalar_lea.vmem %s1, %s575
        %p577 = scmp.lt.s32.totalorder %s31, 1
        %s578 = scalar_select %p577, %s31, 1
        %s579 = scalar_lea.vmem %s3, %s578
        %v581 = vld [vmem:[%s576] sm:$0xff]
        %v582 = vld [vmem:[%s576 + $0x8] sm:$0xff]
        %v583 = vld [vmem:[%s576 + $0x10] sm:$0xff]
        %v584 = vld [vmem:[%s576 + $0x18] sm:$0xff]
        %v585 = vld [vmem:[%s571] sm:$0xff]
        %v586 = vld [vmem:[%s571 + $0x8] sm:$0xff]
        %v587 = vld [vmem:[%s571 + $0x10] sm:$0xff]
        %v588 = vld [vmem:[%s571 + $0x18] sm:$0xff]
        %590 = vset.pattern.permute.xlu0 0
        %591 = vperm.xlu0 %590, %v581
        %v592 = vpop.permute.xlu0 %591
        %595 = vset.pattern.permute.xlu0 0
        %596 = vperm.xlu0 %595, %v582
        %v597 = vpop.permute.xlu0 %596
        %600 = vset.pattern.permute.xlu0 0
        %601 = vperm.xlu0 %600, %v583
        %v602 = vpop.permute.xlu0 %601
        %605 = vset.pattern.permute.xlu0 0
        %606 = vperm.xlu0 %605, %v584
        %v607 = vpop.permute.xlu0 %606
        %v609 = vmul.f32 %v592, %v585
        %v610 = vmul.f32 %v597, %v586
        %v611 = vmul.f32 %v602, %v587
        %v612 = vmul.f32 %v607, %v588
        %vm613 = vcmask 261120
        %v614 = vsel %vm613, %v609, 0.0
        %v615 = vrot.slane %v614, 4
        %v616 = vadd.f32 %v614, %v615
        %v617 = vrot.slane %v616, 2
        %v618 = vadd.f32 %v616, %v617
        %v619 = vrot.slane %v618, 1
        %v620 = vadd.f32 %v618, %v619
        %v621 = vsel %vm613, %v610, 0.0
        %v622 = vrot.slane %v621, 4
        %v623 = vadd.f32 %v621, %v622
        %v624 = vrot.slane %v623, 2
        %v625 = vadd.f32 %v623, %v624
        %v626 = vrot.slane %v625, 1
        %v627 = vadd.f32 %v625, %v626
        %v628 = vsel %vm613, %v611, 0.0
        %v629 = vrot.slane %v628, 4
        %v630 = vadd.f32 %v628, %v629
        %v631 = vrot.slane %v630, 2
        %v632 = vadd.f32 %v630, %v631
        %v633 = vrot.slane %v632, 1
        %v634 = vadd.f32 %v632, %v633
        %v635 = vsel %vm613, %v612, 0.0
        %v636 = vrot.slane %v635, 4
        %v637 = vadd.f32 %v635, %v636
        %v638 = vrot.slane %v637, 2
        %v639 = vadd.f32 %v637, %v638
        %v640 = vrot.slane %v639, 1
        %v641 = vadd.f32 %v639, %v640
        %vm642 = vcmask 7168
        %v643 = vsel %vm642, %v581, 0.0
        %v644 = vrot.slane %v643, 4
        %v645 = vadd.f32 %v643, %v644
        %v646 = vrot.slane %v645, 2
        %v647 = vadd.f32 %v645, %v646
        %v648 = vrot.slane %v647, 1
        %v649 = vadd.f32 %v647, %v648
        %v650 = vsel %vm642, %v582, 0.0
        %v651 = vrot.slane %v650, 4
        %v652 = vadd.f32 %v650, %v651
        %v653 = vrot.slane %v652, 2
        %v654 = vadd.f32 %v652, %v653
        %v655 = vrot.slane %v654, 1
        %v656 = vadd.f32 %v654, %v655
        %v657 = vsel %vm642, %v583, 0.0
        %v658 = vrot.slane %v657, 4
        %v659 = vadd.f32 %v657, %v658
        %v660 = vrot.slane %v659, 2
        %v661 = vadd.f32 %v659, %v660
        %v662 = vrot.slane %v661, 1
        %v663 = vadd.f32 %v661, %v662
        %v664 = vsel %vm642, %v584, 0.0
        %v665 = vrot.slane %v664, 4
        %v666 = vadd.f32 %v664, %v665
        %v667 = vrot.slane %v666, 2
        %v668 = vadd.f32 %v666, %v667
        %v669 = vrot.slane %v668, 1
        %v670 = vadd.f32 %v668, %v669
        %v671 = vmax.f32 %v649, 1.0
        %v672 = vmax.f32 %v656, 1.0
        %v673 = vmax.f32 %v663, 1.0
        %v674 = vmax.f32 %v670, 1.0
        %676 = vset.pattern.permute.xlu0 0
        %677 = vperm.xlu0 %676, %v671
        %v678 = vpop.permute.xlu0 %677
        %681 = vset.pattern.permute.xlu0 0
        %682 = vperm.xlu0 %681, %v672
        %v683 = vpop.permute.xlu0 %682
        %686 = vset.pattern.permute.xlu0 0
        %687 = vperm.xlu0 %686, %v673
        %v688 = vpop.permute.xlu0 %687
        %691 = vset.pattern.permute.xlu0 0
        %692 = vperm.xlu0 %691, %v674
        %v693 = vpop.permute.xlu0 %692
        %v695 = vrcp.pop %v678
        %v696 = vmul.f32 %v620, %v695
        %v697 = vrcp.pop %v683
        %v698 = vmul.f32 %v627, %v697
        %v699 = vrcp.pop %v688
        %v700 = vmul.f32 %v634, %v699
        %v701 = vrcp.pop %v693
        %v702 = vmul.f32 %v641, %v701
        %v703 = vld [vmem:[%s2] sm:$0xf]
        %v705 = vrot.slane %v703, 1
        %v706 = vrot.slane %v703, 2
        %v707 = vrot.slane %v703, 3
        %v712 = vadd.f32 %v696, %v703
        %v713 = vadd.f32 %v698, %v705
        %v714 = vadd.f32 %v700, %v706
        %v715 = vadd.f32 %v702, %v707
        %v716 = vld [vmem:[%s579] sm:$0x1]
        loop: start=0, step=1, limit=12
        $region89: #{codebert_forward.1} parent=87 // loop_pre_header
          _
        $region90: #{codebert_forward.1} parent=87 // loop_header
          %s718 = sphi 0, %s722
          %p719 = scmp.ge.s32.totalorder %s718, 12
          %v723 = vphi %v712, %v4964
          %v724 = vphi %v713, %v4965
          %v725 = vphi %v714, %v4966
          %v726 = vphi %v715, %v4967
        $region91: #{codebert_forward.1} parent=87 // loop_header_branch
          %721 = sbr.rel (%p719) target = $region95
        $region92: #{codebert_forward.1} parent=87 // loop_body
          %v727 = vpack.c.bf16 %v723, %v723
          %v728 = vpack.c.bf16 %v724, %v724
          %v729 = vpack.c.bf16 %v725, %v725
          %v730 = vpack.c.bf16 %v726, %v726
          %s731 = smul.u32 %s718, 32
          %s732 = smul.addr %s731, 4
          %s733 = scalar_lea.vmem %s6, %s732
          %v734 = vld [vmem:[%s733] sm:$0xf]
          %v735 = vld [vmem:[%s733 + $0x4] sm:$0xf]
          %v736 = vld [vmem:[%s733 + $0x8] sm:$0xf]
          %v737 = vld [vmem:[%s733 + $0xc] sm:$0xf]
          %v738 = vld [vmem:[%s733 + $0x10] sm:$0xf]
          %v739 = vld [vmem:[%s733 + $0x14] sm:$0xf]
          %v740 = vld [vmem:[%s733 + $0x18] sm:$0xf]
          %v741 = vld [vmem:[%s733 + $0x1c] sm:$0xf]
          %v742 = vld [vmem:[%s733 + $0x20] sm:$0xf]
          %v743 = vld [vmem:[%s733 + $0x24] sm:$0xf]
          %v744 = vld [vmem:[%s733 + $0x28] sm:$0xf]
          %v745 = vld [vmem:[%s733 + $0x2c] sm:$0xf]
          %v746 = vld [vmem:[%s733 + $0x30] sm:$0xf]
          %v747 = vld [vmem:[%s733 + $0x34] sm:$0xf]
          %v748 = vld [vmem:[%s733 + $0x38] sm:$0xf]
          %v749 = vld [vmem:[%s733 + $0x3c] sm:$0xf]
          %v750 = vld [vmem:[%s733 + $0x40] sm:$0xf]
          %v751 = vld [vmem:[%s733 + $0x44] sm:$0xf]
          %v752 = vld [vmem:[%s733 + $0x48] sm:$0xf]
          %v753 = vld [vmem:[%s733 + $0x4c] sm:$0xf]
          %v754 = vld [vmem:[%s733 + $0x50] sm:$0xf]
          %v755 = vld [vmem:[%s733 + $0x54] sm:$0xf]
          %v756 = vld [vmem:[%s733 + $0x58] sm:$0xf]
          %v757 = vld [vmem:[%s733 + $0x5c] sm:$0xf]
          %v758 = vld [vmem:[%s733 + $0x60] sm:$0xf]
          %v759 = vld [vmem:[%s733 + $0x64] sm:$0xf]
          %v760 = vld [vmem:[%s733 + $0x68] sm:$0xf]
          %v761 = vld [vmem:[%s733 + $0x6c] sm:$0xf]
          %v762 = vld [vmem:[%s733 + $0x70] sm:$0xf]
          %v763 = vld [vmem:[%s733 + $0x74] sm:$0xf]
          %v764 = vld [vmem:[%s733 + $0x78] sm:$0xf]
          %v765 = vld [vmem:[%s733 + $0x7c] sm:$0xf]
          %s766 = smul.u32 %s718, 8
          %s767 = scalar_lea.vmem %s9, %s766
          %v768 = vld [vmem:[%s767] sm:$0x1]
          %v769 = vld [vmem:[%s767 + $0x1] sm:$0x1]
          %v770 = vld [vmem:[%s767 + $0x2] sm:$0x1]
          %v771 = vld [vmem:[%s767 + $0x3] sm:$0x1]
          %v772 = vld [vmem:[%s767 + $0x4] sm:$0x1]
          %v773 = vld [vmem:[%s767 + $0x5] sm:$0x1]
          %v774 = vld [vmem:[%s767 + $0x6] sm:$0x1]
          %v775 = vld [vmem:[%s767 + $0x7] sm:$0x1]
          %v784 = vlaneseq
          %v785 = vshrl.u32 %v784, 7
          %v786 = vsub.s32 0, %v785
          %v787 = vrot.slane %v768, %v786
          %v788 = vlaneseq
          %v789 = vshrl.u32 %v788, 7
          %v790 = vsub.s32 0, %v789
          %v791 = vrot.slane %v769, %v790
          %v792 = vlaneseq
          %v793 = vshrl.u32 %v792, 7
          %v794 = vsub.s32 0, %v793
          %v795 = vrot.slane %v770, %v794
          %v796 = vlaneseq
          %v797 = vshrl.u32 %v796, 7
          %v798 = vsub.s32 0, %v797
          %v799 = vrot.slane %v771, %v798
          %v800 = vlaneseq
          %v801 = vshrl.u32 %v800, 7
          %v802 = vsub.s32 0, %v801
          %v803 = vrot.slane %v772, %v802
          %v804 = vlaneseq
          %v805 = vshrl.u32 %v804, 7
          %v806 = vsub.s32 0, %v805
          %v807 = vrot.slane %v773, %v806
          %v808 = vlaneseq
          %v809 = vshrl.u32 %v808, 7
          %v810 = vsub.s32 0, %v809
          %v811 = vrot.slane %v774, %v810
          %v812 = vlaneseq
          %v813 = vshrl.u32 %v812, 7
          %v814 = vsub.s32 0, %v813
          %v815 = vrot.slane %v775, %v814
          %v828 = vunpack.c.l.b16 %v727
          %v829 = vunpack.c.l.b16 %v728
          %v830 = vunpack.c.l.b16 %v729
          %v831 = vunpack.c.l.b16 %v730
          %v832 = vrot.slane %v829, 7
          %vm833 = vcmask 1041409
          %v834 = vsel %vm833, %v832, %v828
          %v835 = vrot.slane %v830, 6
          %vm836 = vcmask 1042434
          %v837 = vsel %vm836, %v835, %v834
          %v838 = vrot.slane %v831, 5
          %vm839 = vcmask 1043459
          %v840 = vsel %vm839, %v838, %v837
          %v841 = vpack.c.b16 %v840, %v840
          %v846 = vunpack.c.l.b16 %v734
          %v847 = vunpack.c.l.b16 %v735
          %v848 = vunpack.c.l.b16 %v736
          %v849 = vunpack.c.l.b16 %v737
          %v850 = vpack.c.b16 %v847, %v846
          %v851 = vpack.c.b16 %v849, %v848
          %v855 = vsel %vm613, %v841, 0
          %857 = vmatprep.subr.bf16.mxu0 0
          %858 = vmatpush1.bf16.msra.mxu0 %v850
          %859 = vmatprep.subr.bf16.mxu0 0
          %860 = vmatpush1.bf16.msra.mxu0 %v851
          %861 = vmatprep.subr.bf16.mxu0 0
          %862 = vmatpush1.bf16.msra.mxu0 0
          %863 = vmatprep.subr.bf16.mxu0 0
          %864 = vmatpush1.bf16.msra.mxu0 0
          %865 = vmatprep.subr.bf16.mxu0 0
          %866 = vmatpush1.bf16.msra.mxu0 0
          %867 = vmatprep.subr.bf16.mxu0 0
          %868 = vmatpush1.bf16.msra.mxu0 0
          %869 = vmatprep.subr.bf16.mxu0 0
          %870 = vmatpush1.bf16.msra.mxu0 0
          %871 = vmatprep.subr.bf16.mxu0 0
          %872 = vmatpush1.bf16.msra.mxu0 0
          %873 = vmatprep.subr.bf16.mxu0 0
          %874 = vmatpush1.bf16.msra.mxu0 0
          %875 = vmatprep.subr.bf16.mxu0 0
          %876 = vmatpush1.bf16.msra.mxu0 0
          %877 = vmatprep.subr.bf16.mxu0 0
          %878 = vmatpush1.bf16.msra.mxu0 0
          %879 = vmatprep.subr.bf16.mxu0 0
          %880 = vmatpush1.bf16.msra.mxu0 0
          %881 = vmatprep.subr.bf16.mxu0 0
          %882 = vmatpush1.bf16.msra.mxu0 0
          %883 = vmatprep.subr.bf16.mxu0 0
          %884 = vmatpush1.bf16.msra.mxu0 0
          %885 = vmatprep.subr.bf16.mxu0 0
          %886 = vmatpush1.bf16.msra.mxu0 0
          %887 = vmatprep.subr.bf16.mxu0 0
          %888 = vmatpush1.bf16.msra.mxu0 0
          %889 = vmatprep.mubr.bf16.mxu0 0
          %890 = vmatmul.mubr.bf16.gmra.mrb[0].mxu0 %v855
          %v891 = vpop.f32.mrb[0].mxu0
          %v892 = vadd.f32 %v787, %v891
          %v893 = vpop.f32.mrb[0].mxu0
          %v894 = vpop.f32.mrb[0].mxu0
          %v895 = vpop.f32.mrb[0].mxu0
          %896 = vdwg.mxu0
          %v901 = vunpack.c.l.b16 %v738
          %v902 = vunpack.c.l.b16 %v739
          %v903 = vunpack.c.l.b16 %v740
          %v904 = vunpack.c.l.b16 %v741
          %v905 = vpack.c.b16 %v902, %v901
          %v906 = vpack.c.b16 %v904, %v903
          %909 = vmatprep.subr.bf16.mxu0 0
          %910 = vmatpush1.bf16.msra.mxu0 %v905
          %911 = vmatprep.subr.bf16.mxu0 0
          %912 = vmatpush1.bf16.msra.mxu0 %v906
          %913 = vmatprep.subr.bf16.mxu0 0
          %914 = vmatpush1.bf16.msra.mxu0 0
          %915 = vmatprep.subr.bf16.mxu0 0
          %916 = vmatpush1.bf16.msra.mxu0 0
          %917 = vmatprep.subr.bf16.mxu0 0
          %918 = vmatpush1.bf16.msra.mxu0 0
          %919 = vmatprep.subr.bf16.mxu0 0
          %920 = vmatpush1.bf16.msra.mxu0 0
          %921 = vmatprep.subr.bf16.mxu0 0
          %922 = vmatpush1.bf16.msra.mxu0 0
          %923 = vmatprep.subr.bf16.mxu0 0
          %924 = vmatpush1.bf16.msra.mxu0 0
          %925 = vmatprep.subr.bf16.mxu0 0
          %926 = vmatpush1.bf16.msra.mxu0 0
          %927 = vmatprep.subr.bf16.mxu0 0
          %928 = vmatpush1.bf16.msra.mxu0 0
          %929 = vmatprep.subr.bf16.mxu0 0
          %930 = vmatpush1.bf16.msra.mxu0 0
          %931 = vmatprep.subr.bf16.mxu0 0
          %932 = vmatpush1.bf16.msra.mxu0 0
          %933 = vmatprep.subr.bf16.mxu0 0
          %934 = vmatpush1.bf16.msra.mxu0 0
          %935 = vmatprep.subr.bf16.mxu0 0
          %936 = vmatpush1.bf16.msra.mxu0 0
          %937 = vmatprep.subr.bf16.mxu0 0
          %938 = vmatpush1.bf16.msra.mxu0 0
          %939 = vmatprep.subr.bf16.mxu0 0
          %940 = vmatpush1.bf16.msra.mxu0 0
          %941 = vmatprep.mubr.bf16.mxu0 0
          %942 = vmatmul.mubr.bf16.gmra.mrb[0].mxu0 %v855
          %v943 = vpop.f32.mrb[0].mxu0
          %v944 = vadd.f32 %v791, %v943
          %v945 = vpop.f32.mrb[0].mxu0
          %v946 = vpop.f32.mrb[0].mxu0
          %v947 = vpop.f32.mrb[0].mxu0
          %948 = vdwg.mxu0
          %v953 = vunpack.c.l.b16 %v742
          %v954 = vunpack.c.l.b16 %v743
          %v955 = vunpack.c.l.b16 %v744
          %v956 = vunpack.c.l.b16 %v745
          %v957 = vpack.c.b16 %v954, %v953
          %v958 = vpack.c.b16 %v956, %v955
          %961 = vmatprep.subr.bf16.mxu0 0
          %962 = vmatpush1.bf16.msra.mxu0 %v957
          %963 = vmatprep.subr.bf16.mxu0 0
          %964 = vmatpush1.bf16.msra.mxu0 %v958
          %965 = vmatprep.subr.bf16.mxu0 0
          %966 = vmatpush1.bf16.msra.mxu0 0
          %967 = vmatprep.subr.bf16.mxu0 0
          %968 = vmatpush1.bf16.msra.mxu0 0
          %969 = vmatprep.subr.bf16.mxu0 0
          %970 = vmatpush1.bf16.msra.mxu0 0
          %971 = vmatprep.subr.bf16.mxu0 0
          %972 = vmatpush1.bf16.msra.mxu0 0
          %973 = vmatprep.subr.bf16.mxu0 0
          %974 = vmatpush1.bf16.msra.mxu0 0
          %975 = vmatprep.subr.bf16.mxu0 0
          %976 = vmatpush1.bf16.msra.mxu0 0
          %977 = vmatprep.subr.bf16.mxu0 0
          %978 = vmatpush1.bf16.msra.mxu0 0
          %979 = vmatprep.subr.bf16.mxu0 0
          %980 = vmatpush1.bf16.msra.mxu0 0
          %981 = vmatprep.subr.bf16.mxu0 0
          %982 = vmatpush1.bf16.msra.mxu0 0
          %983 = vmatprep.subr.bf16.mxu0 0
          %984 = vmatpush1.bf16.msra.mxu0 0
          %985 = vmatprep.subr.bf16.mxu0 0
          %986 = vmatpush1.bf16.msra.mxu0 0
          %987 = vmatprep.subr.bf16.mxu0 0
          %988 = vmatpush1.bf16.msra.mxu0 0
          %989 = vmatprep.subr.bf16.mxu0 0
          %990 = vmatpush1.bf16.msra.mxu0 0
          %991 = vmatprep.subr.bf16.mxu0 0
          %992 = vmatpush1.bf16.msra.mxu0 0
          %993 = vmatprep.mubr.bf16.mxu0 0
          %994 = vmatmul.mubr.bf16.gmra.mrb[0].mxu0 %v855
          %v995 = vpop.f32.mrb[0].mxu0
          %v996 = vadd.f32 %v795, %v995
          %v997 = vpop.f32.mrb[0].mxu0
          %v998 = vpop.f32.mrb[0].mxu0
          %v999 = vpop.f32.mrb[0].mxu0
          %1000 = vdwg.mxu0
          %v1005 = vunpack.c.l.b16 %v746
          %v1006 = vunpack.c.l.b16 %v747
          %v1007 = vunpack.c.l.b16 %v748
          %v1008 = vunpack.c.l.b16 %v749
          %v1009 = vpack.c.b16 %v1006, %v1005
          %v1010 = vpack.c.b16 %v1008, %v1007
          %1013 = vmatprep.subr.bf16.mxu0 0
          %1014 = vmatpush1.bf16.msra.mxu0 %v1009
          %1015 = vmatprep.subr.bf16.mxu0 0
          %1016 = vmatpush1.bf16.msra.mxu0 %v1010
          %1017 = vmatprep.subr.bf16.mxu0 0
          %1018 = vmatpush1.bf16.msra.mxu0 0
          %1019 = vmatprep.subr.bf16.mxu0 0
          %1020 = vmatpush1.bf16.msra.mxu0 0
          %1021 = vmatprep.subr.bf16.mxu0 0
          %1022 = vmatpush1.bf16.msra.mxu0 0
          %1023 = vmatprep.subr.bf16.mxu0 0
          %1024 = vmatpush1.bf16.msra.mxu0 0
          %1025 = vmatprep.subr.bf16.mxu0 0
          %1026 = vmatpush1.bf16.msra.mxu0 0
          %1027 = vmatprep.subr.bf16.mxu0 0
          %1028 = vmatpush1.bf16.msra.mxu0 0
          %1029 = vmatprep.subr.bf16.mxu0 0
          %1030 = vmatpush1.bf16.msra.mxu0 0
          %1031 = vmatprep.subr.bf16.mxu0 0
          %1032 = vmatpush1.bf16.msra.mxu0 0
          %1033 = vmatprep.subr.bf16.mxu0 0
          %1034 = vmatpush1.bf16.msra.mxu0 0
          %1035 = vmatprep.subr.bf16.mxu0 0
          %1036 = vmatpush1.bf16.msra.mxu0 0
          %1037 = vmatprep.subr.bf16.mxu0 0
          %1038 = vmatpush1.bf16.msra.mxu0 0
          %1039 = vmatprep.subr.bf16.mxu0 0
          %1040 = vmatpush1.bf16.msra.mxu0 0
          %1041 = vmatprep.subr.bf16.mxu0 0
          %1042 = vmatpush1.bf16.msra.mxu0 0
          %1043 = vmatprep.subr.bf16.mxu0 0
          %1044 = vmatpush1.bf16.msra.mxu0 0
          %1045 = vmatprep.mubr.bf16.mxu0 0
          %1046 = vmatmul.mubr.bf16.gmra.mrb[0].mxu0 %v855
          %v1047 = vpop.f32.mrb[0].mxu0
          %v1048 = vadd.f32 %v799, %v1047
          %v1049 = vpop.f32.mrb[0].mxu0
          %v1050 = vpop.f32.mrb[0].mxu0
          %v1051 = vpop.f32.mrb[0].mxu0
          %1052 = vdwg.mxu0
          %v1057 = vunpack.c.l.b16 %v750
          %v1058 = vunpack.c.l.b16 %v751
          %v1059 = vunpack.c.l.b16 %v752
          %v1060 = vunpack.c.l.b16 %v753
          %v1061 = vpack.c.b16 %v1058, %v1057
          %v1062 = vpack.c.b16 %v1060, %v1059
          %1065 = vmatprep.subr.bf16.mxu0 0
          %1066 = vmatpush1.bf16.msra.mxu0 %v1061
          %1067 = vmatprep.subr.bf16.mxu0 0
          %1068 = vmatpush1.bf16.msra.mxu0 %v1062
          %1069 = vmatprep.subr.bf16.mxu0 0
          %1070 = vmatpush1.bf16.msra.mxu0 0
          %1071 = vmatprep.subr.bf16.mxu0 0
          %1072 = vmatpush1.bf16.msra.mxu0 0
          %1073 = vmatprep.subr.bf16.mxu0 0
          %1074 = vmatpush1.bf16.msra.mxu0 0
          %1075 = vmatprep.subr.bf16.mxu0 0
          %1076 = vmatpush1.bf16.msra.mxu0 0
          %1077 = vmatprep.subr.bf16.mxu0 0
          %1078 = vmatpush1.bf16.msra.mxu0 0
          %1079 = vmatprep.subr.bf16.mxu0 0
          %1080 = vmatpush1.bf16.msra.mxu0 0
          %1081 = vmatprep.subr.bf16.mxu0 0
          %1082 = vmatpush1.bf16.msra.mxu0 0
          %1083 = vmatprep.subr.bf16.mxu0 0
          %1084 = vmatpush1.bf16.msra.mxu0 0
          %1085 = vmatprep.subr.bf16.mxu0 0
          %1086 = vmatpush1.bf16.msra.mxu0 0
          %1087 = vmatprep.subr.bf16.mxu0 0
          %1088 = vmatpush1.bf16.msra.mxu0 0
          %1089 = vmatprep.subr.bf16.mxu0 0
          %1090 = vmatpush1.bf16.msra.mxu0 0
          %1091 = vmatprep.subr.bf16.mxu0 0
          %1092 = vmatpush1.bf16.msra.mxu0 0
          %1093 = vmatprep.subr.bf16.mxu0 0
          %1094 = vmatpush1.bf16.msra.mxu0 0
          %1095 = vmatprep.subr.bf16.mxu0 0
          %1096 = vmatpush1.bf16.msra.mxu0 0
          %1097 = vmatprep.mubr.bf16.mxu0 0
          %1098 = vmatmul.mubr.bf16.gmra.mrb[0].mxu0 %v855
          %v1099 = vpop.f32.mrb[0].mxu0
          %v1100 = vadd.f32 %v803, %v1099
          %v1101 = vpop.f32.mrb[0].mxu0
          %v1102 = vpop.f32.mrb[0].mxu0
          %v1103 = vpop.f32.mrb[0].mxu0
          %1104 = vdwg.mxu0
          %v1109 = vunpack.c.l.b16 %v754
          %v1110 = vunpack.c.l.b16 %v755
          %v1111 = vunpack.c.l.b16 %v756
          %v1112 = vunpack.c.l.b16 %v757
          %v1113 = vpack.c.b16 %v1110, %v1109
          %v1114 = vpack.c.b16 %v1112, %v1111
          %1117 = vmatprep.subr.bf16.mxu0 0
          %1118 = vmatpush1.bf16.msra.mxu0 %v1113
          %1119 = vmatprep.subr.bf16.mxu0 0
          %1120 = vmatpush1.bf16.msra.mxu0 %v1114
          %1121 = vmatprep.subr.bf16.mxu0 0
          %1122 = vmatpush1.bf16.msra.mxu0 0
          %1123 = vmatprep.subr.bf16.mxu0 0
          %1124 = vmatpush1.bf16.msra.mxu0 0
          %1125 = vmatprep.subr.bf16.mxu0 0
          %1126 = vmatpush1.bf16.msra.mxu0 0
          %1127 = vmatprep.subr.bf16.mxu0 0
          %1128 = vmatpush1.bf16.msra.mxu0 0
          %1129 = vmatprep.subr.bf16.mxu0 0
          %1130 = vmatpush1.bf16.msra.mxu0 0
          %1131 = vmatprep.subr.bf16.mxu0 0
          %1132 = vmatpush1.bf16.msra.mxu0 0
          %1133 = vmatprep.subr.bf16.mxu0 0
          %1134 = vmatpush1.bf16.msra.mxu0 0
          %1135 = vmatprep.subr.bf16.mxu0 0
          %1136 = vmatpush1.bf16.msra.mxu0 0
          %1137 = vmatprep.subr.bf16.mxu0 0
          %1138 = vmatpush1.bf16.msra.mxu0 0
          %1139 = vmatprep.subr.bf16.mxu0 0
          %1140 = vmatpush1.bf16.msra.mxu0 0
          %1141 = vmatprep.subr.bf16.mxu0 0
          %1142 = vmatpush1.bf16.msra.mxu0 0
          %1143 = vmatprep.subr.bf16.mxu0 0
          %1144 = vmatpush1.bf16.msra.mxu0 0
          %1145 = vmatprep.subr.bf16.mxu0 0
          %1146 = vmatpush1.bf16.msra.mxu0 0
          %1147 = vmatprep.subr.bf16.mxu0 0
          %1148 = vmatpush1.bf16.msra.mxu0 0
          %1149 = vmatprep.mubr.bf16.mxu0 0
          %1150 = vmatmul.mubr.bf16.gmra.mrb[0].mxu0 %v855
          %v1151 = vpop.f32.mrb[0].mxu0
          %v1152 = vadd.f32 %v807, %v1151
          %v1153 = vpop.f32.mrb[0].mxu0
          %v1154 = vpop.f32.mrb[0].mxu0
          %v1155 = vpop.f32.mrb[0].mxu0
          %1156 = vdwg.mxu0
          %v1161 = vunpack.c.l.b16 %v758
          %v1162 = vunpack.c.l.b16 %v759
          %v1163 = vunpack.c.l.b16 %v760
          %v1164 = vunpack.c.l.b16 %v761
          %v1165 = vpack.c.b16 %v1162, %v1161
          %v1166 = vpack.c.b16 %v1164, %v1163
          %1169 = vmatprep.subr.bf16.mxu0 0
          %1170 = vmatpush1.bf16.msra.mxu0 %v1165
          %1171 = vmatprep.subr.bf16.mxu0 0
          %1172 = vmatpush1.bf16.msra.mxu0 %v1166
          %1173 = vmatprep.subr.bf16.mxu0 0
          %1174 = vmatpush1.bf16.msra.mxu0 0
          %1175 = vmatprep.subr.bf16.mxu0 0
          %1176 = vmatpush1.bf16.msra.mxu0 0
          %1177 = vmatprep.subr.bf16.mxu0 0
          %1178 = vmatpush1.bf16.msra.mxu0 0
          %1179 = vmatprep.subr.bf16.mxu0 0
          %1180 = vmatpush1.bf16.msra.mxu0 0
          %1181 = vmatprep.subr.bf16.mxu0 0
          %1182 = vmatpush1.bf16.msra.mxu0 0
          %1183 = vmatprep.subr.bf16.mxu0 0
          %1184 = vmatpush1.bf16.msra.mxu0 0
          %1185 = vmatprep.subr.bf16.mxu0 0
          %1186 = vmatpush1.bf16.msra.mxu0 0
          %1187 = vmatprep.subr.bf16.mxu0 0
          %1188 = vmatpush1.bf16.msra.mxu0 0
          %1189 = vmatprep.subr.bf16.mxu0 0
          %1190 = vmatpush1.bf16.msra.mxu0 0
          %1191 = vmatprep.subr.bf16.mxu0 0
          %1192 = vmatpush1.bf16.msra.mxu0 0
          %1193 = vmatprep.subr.bf16.mxu0 0
          %1194 = vmatpush1.bf16.msra.mxu0 0
          %1195 = vmatprep.subr.bf16.mxu0 0
          %1196 = vmatpush1.bf16.msra.mxu0 0
          %1197 = vmatprep.subr.bf16.mxu0 0
          %1198 = vmatpush1.bf16.msra.mxu0 0
          %1199 = vmatprep.subr.bf16.mxu0 0
          %1200 = vmatpush1.bf16.msra.mxu0 0
          %1201 = vmatprep.mubr.bf16.mxu0 0
          %1202 = vmatmul.mubr.bf16.gmra.mrb[0].mxu0 %v855
          %v1203 = vpop.f32.mrb[0].mxu0
          %v1204 = vadd.f32 %v811, %v1203
          %v1205 = vpop.f32.mrb[0].mxu0
          %v1206 = vpop.f32.mrb[0].mxu0
          %v1207 = vpop.f32.mrb[0].mxu0
          %1208 = vdwg.mxu0
          %v1213 = vunpack.c.l.b16 %v762
          %v1214 = vunpack.c.l.b16 %v763
          %v1215 = vunpack.c.l.b16 %v764
          %v1216 = vunpack.c.l.b16 %v765
          %v1217 = vpack.c.b16 %v1214, %v1213
          %v1218 = vpack.c.b16 %v1216, %v1215
          %1221 = vmatprep.subr.bf16.mxu0 0
          %1222 = vmatpush1.bf16.msra.mxu0 %v1217
          %1223 = vmatprep.subr.bf16.mxu0 0
          %1224 = vmatpush1.bf16.msra.mxu0 %v1218
          %1225 = vmatprep.subr.bf16.mxu0 0
          %1226 = vmatpush1.bf16.msra.mxu0 0
          %1227 = vmatprep.subr.bf16.mxu0 0
          %1228 = vmatpush1.bf16.msra.mxu0 0
          %1229 = vmatprep.subr.bf16.mxu0 0
          %1230 = vmatpush1.bf16.msra.mxu0 0
          %1231 = vmatprep.subr.bf16.mxu0 0
          %1232 = vmatpush1.bf16.msra.mxu0 0
          %1233 = vmatprep.subr.bf16.mxu0 0
          %1234 = vmatpush1.bf16.msra.mxu0 0
          %1235 = vmatprep.subr.bf16.mxu0 0
          %1236 = vmatpush1.bf16.msra.mxu0 0
          %1237 = vmatprep.subr.bf16.mxu0 0
          %1238 = vmatpush1.bf16.msra.mxu0 0
          %1239 = vmatprep.subr.bf16.mxu0 0
          %1240 = vmatpush1.bf16.msra.mxu0 0
          %1241 = vmatprep.subr.bf16.mxu0 0
          %1242 = vmatpush1.bf16.msra.mxu0 0
          %1243 = vmatprep.subr.bf16.mxu0 0
          %1244 = vmatpush1.bf16.msra.mxu0 0
          %1245 = vmatprep.subr.bf16.mxu0 0
          %1246 = vmatpush1.bf16.msra.mxu0 0
          %1247 = vmatprep.subr.bf16.mxu0 0
          %1248 = vmatpush1.bf16.msra.mxu0 0
          %1249 = vmatprep.subr.bf16.mxu0 0
          %1250 = vmatpush1.bf16.msra.mxu0 0
          %1251 = vmatprep.subr.bf16.mxu0 0
          %1252 = vmatpush1.bf16.msra.mxu0 0
          %1253 = vmatprep.mubr.bf16.mxu0 0
          %1254 = vmatmul.mubr.bf16.gmra.mrb[0].mxu0 %v855
          %v1255 = vpop.f32.mrb[0].mxu0
          %v1256 = vadd.f32 %v815, %v1255
          %v1257 = vpop.f32.mrb[0].mxu0
          %v1258 = vpop.f32.mrb[0].mxu0
          %v1259 = vpop.f32.mrb[0].mxu0
          %1260 = vdwg.mxu0
          %s1261 = smul.addr %s731, 4
          %s1262 = scalar_lea.vmem %s7, %s1261
          %v1263 = vld [vmem:[%s1262] sm:$0xf]
          %v1264 = vld [vmem:[%s1262 + $0x4] sm:$0xf]
          %v1265 = vld [vmem:[%s1262 + $0x8] sm:$0xf]
          %v1266 = vld [vmem:[%s1262 + $0xc] sm:$0xf]
          %v1267 = vld [vmem:[%s1262 + $0x10] sm:$0xf]
          %v1268 = vld [vmem:[%s1262 + $0x14] sm:$0xf]
          %v1269 = vld [vmem:[%s1262 + $0x18] sm:$0xf]
          %v1270 = vld [vmem:[%s1262 + $0x1c] sm:$0xf]
          %v1271 = vld [vmem:[%s1262 + $0x20] sm:$0xf]
          %v1272 = vld [vmem:[%s1262 + $0x24] sm:$0xf]
          %v1273 = vld [vmem:[%s1262 + $0x28] sm:$0xf]
          %v1274 = vld [vmem:[%s1262 + $0x2c] sm:$0xf]
          %v1275 = vld [vmem:[%s1262 + $0x30] sm:$0xf]
          %v1276 = vld [vmem:[%s1262 + $0x34] sm:$0xf]
          %v1277 = vld [vmem:[%s1262 + $0x38] sm:$0xf]
          %v1278 = vld [vmem:[%s1262 + $0x3c] sm:$0xf]
          %v1279 = vld [vmem:[%s1262 + $0x40] sm:$0xf]
          %v1280 = vld [vmem:[%s1262 + $0x44] sm:$0xf]
          %v1281 = vld [vmem:[%s1262 + $0x48] sm:$0xf]
          %v1282 = vld [vmem:[%s1262 + $0x4c] sm:$0xf]
          %v1283 = vld [vmem:[%s1262 + $0x50] sm:$0xf]
          %v1284 = vld [vmem:[%s1262 + $0x54] sm:$0xf]
          %v1285 = vld [vmem:[%s1262 + $0x58] sm:$0xf]
          %v1286 = vld [vmem:[%s1262 + $0x5c] sm:$0xf]
          %v1287 = vld [vmem:[%s1262 + $0x60] sm:$0xf]
          %v1288 = vld [vmem:[%s1262 + $0x64] sm:$0xf]
          %v1289 = vld [vmem:[%s1262 + $0x68] sm:$0xf]
          %v1290 = vld [vmem:[%s1262 + $0x6c] sm:$0xf]
          %v1291 = vld [vmem:[%s1262 + $0x70] sm:$0xf]
          %v1292 = vld [vmem:[%s1262 + $0x74] sm:$0xf]
          %v1293 = vld [vmem:[%s1262 + $0x78] sm:$0xf]
          %v1294 = vld [vmem:[%s1262 + $0x7c] sm:$0xf]
          %s1295 = scalar_lea.vmem %s10, %s766
          %v1296 = vld [vmem:[%s1295] sm:$0x1]
          %v1297 = vld [vmem:[%s1295 + $0x1] sm:$0x1]
          %v1298 = vld [vmem:[%s1295 + $0x2] sm:$0x1]
          %v1299 = vld [vmem:[%s1295 + $0x3] sm:$0x1]
          %v1300 = vld [vmem:[%s1295 + $0x4] sm:$0x1]
          %v1301 = vld [vmem:[%s1295 + $0x5] sm:$0x1]
          %v1302 = vld [vmem:[%s1295 + $0x6] sm:$0x1]
          %v1303 = vld [vmem:[%s1295 + $0x7] sm:$0x1]
          %v1312 = vlaneseq
          %v1313 = vshrl.u32 %v1312, 7
          %v1314 = vsub.s32 0, %v1313
          %v1315 = vrot.slane %v1296, %v1314
          %v1316 = vlaneseq
          %v1317 = vshrl.u32 %v1316, 7
          %v1318 = vsub.s32 0, %v1317
          %v1319 = vrot.slane %v1297, %v1318
          %v1320 = vlaneseq
          %v1321 = vshrl.u32 %v1320, 7
          %v1322 = vsub.s32 0, %v1321
          %v1323 = vrot.slane %v1298, %v1322
          %v1324 = vlaneseq
          %v1325 = vshrl.u32 %v1324, 7
          %v1326 = vsub.s32 0, %v1325
          %v1327 = vrot.slane %v1299, %v1326
          %v1328 = vlaneseq
          %v1329 = vshrl.u32 %v1328, 7
          %v1330 = vsub.s32 0, %v1329
          %v1331 = vrot.slane %v1300, %v1330
          %v1332 = vlaneseq
          %v1333 = vshrl.u32 %v1332, 7
          %v1334 = vsub.s32 0, %v1333
          %v1335 = vrot.slane %v1301, %v1334
          %v1336 = vlaneseq
          %v1337 = vshrl.u32 %v1336, 7
          %v1338 = vsub.s32 0, %v1337
          %v1339 = vrot.slane %v1302, %v1338
          %v1340 = vlaneseq
          %v1341 = vshrl.u32 %v1340, 7
          %v1342 = vsub.s32 0, %v1341
          %v1343 = vrot.slane %v1303, %v1342
          %v1356 = vunpack.c.l.b16 %v1263
          %v1357 = vunpack.c.l.b16 %v1264
          %v1358 = vunpack.c.l.b16 %v1265
          %v1359 = vunpack.c.l.b16 %v1266
          %v1360 = vpack.c.b16 %v1357, %v1356
          %v1361 = vpack.c.b16 %v1359, %v1358
          %1364 = vmatprep.subr.bf16.mxu0 0
          %1365 = vmatpush1.bf16.msra.mxu0 %v1360
          %1366 = vmatprep.subr.bf16.mxu0 0
          %1367 = vmatpush1.bf16.msra.mxu0 %v1361
          %1368 = vmatprep.subr.bf16.mxu0 0
          %1369 = vmatpush1.bf16.msra.mxu0 0
          %1370 = vmatprep.subr.bf16.mxu0 0
          %1371 = vmatpush1.bf16.msra.mxu0 0
          %1372 = vmatprep.subr.bf16.mxu0 0
          %1373 = vmatpush1.bf16.msra.mxu0 0
          %1374 = vmatprep.subr.bf16.mxu0 0
          %1375 = vmatpush1.bf16.msra.mxu0 0
          %1376 = vmatprep.subr.bf16.mxu0 0
          %1377 = vmatpush1.bf16.msra.mxu0 0
          %1378 = vmatprep.subr.bf16.mxu0 0
          %1379 = vmatpush1.bf16.msra.mxu0 0
          %1380 = vmatprep.subr.bf16.mxu0 0
          %1381 = vmatpush1.bf16.msra.mxu0 0
          %1382 = vmatprep.subr.bf16.mxu0 0
          %1383 = vmatpush1.bf16.msra.mxu0 0
          %1384 = vmatprep.subr.bf16.mxu0 0
          %1385 = vmatpush1.bf16.msra.mxu0 0
          %1386 = vmatprep.subr.bf16.mxu0 0
          %1387 = vmatpush1.bf16.msra.mxu0 0
          %1388 = vmatprep.subr.bf16.mxu0 0
          %1389 = vmatpush1.bf16.msra.mxu0 0
          %1390 = vmatprep.subr.bf16.mxu0 0
          %1391 = vmatpush1.bf16.msra.mxu0 0
          %1392 = vmatprep.subr.bf16.mxu0 0
          %1393 = vmatpush1.bf16.msra.mxu0 0
          %1394 = vmatprep.subr.bf16.mxu0 0
          %1395 = vmatpush1.bf16.msra.mxu0 0
          %1396 = vmatprep.mubr.bf16.mxu0 0
          %1397 = vmatmul.mubr.bf16.gmra.mrb[0].mxu0 %v855
          %v1398 = vpop.f32.mrb[0].mxu0
          %v1399 = vadd.f32 %v1315, %v1398
          %v1400 = vpop.f32.mrb[0].mxu0
          %v1401 = vpop.f32.mrb[0].mxu0
          %v1402 = vpop.f32.mrb[0].mxu0
          %1403 = vdwg.mxu0
          %v1408 = vunpack.c.l.b16 %v1267
          %v1409 = vunpack.c.l.b16 %v1268
          %v1410 = vunpack.c.l.b16 %v1269
          %v1411 = vunpack.c.l.b16 %v1270
          %v1412 = vpack.c.b16 %v1409, %v1408
          %v1413 = vpack.c.b16 %v1411, %v1410
          %1416 = vmatprep.subr.bf16.mxu0 0
          %1417 = vmatpush1.bf16.msra.mxu0 %v1412
          %1418 = vmatprep.subr.bf16.mxu0 0
          %1419 = vmatpush1.bf16.msra.mxu0 %v1413
          %1420 = vmatprep.subr.bf16.mxu0 0
          %1421 = vmatpush1.bf16.msra.mxu0 0
          %1422 = vmatprep.subr.bf16.mxu0 0
          %1423 = vmatpush1.bf16.msra.mxu0 0
          %1424 = vmatprep.subr.bf16.mxu0 0
          %1425 = vmatpush1.bf16.msra.mxu0 0
          %1426 = vmatprep.subr.bf16.mxu0 0
          %1427 = vmatpush1.bf16.msra.mxu0 0
          %1428 = vmatprep.subr.bf16.mxu0 0
          %1429 = vmatpush1.bf16.msra.mxu0 0
          %1430 = vmatprep.subr.bf16.mxu0 0
          %1431 = vmatpush1.bf16.msra.mxu0 0
          %1432 = vmatprep.subr.bf16.mxu0 0
          %1433 = vmatpush1.bf16.msra.mxu0 0
          %1434 = vmatprep.subr.bf16.mxu0 0
          %1435 = vmatpush1.bf16.msra.mxu0 0
          %1436 = vmatprep.subr.bf16.mxu0 0
          %1437 = vmatpush1.bf16.msra.mxu0 0
          %1438 = vmatprep.subr.bf16.mxu0 0
          %1439 = vmatpush1.bf16.msra.mxu0 0
          %1440 = vmatprep.subr.bf16.mxu0 0
          %1441 = vmatpush1.bf16.msra.mxu0 0
          %1442 = vmatprep.subr.bf16.mxu0 0
          %1443 = vmatpush1.bf16.msra.mxu0 0
          %1444 = vmatprep.subr.bf16.mxu0 0
          %1445 = vmatpush1.bf16.msra.mxu0 0
          %1446 = vmatprep.subr.bf16.mxu0 0
          %1447 = vmatpush1.bf16.msra.mxu0 0
          %1448 = vmatprep.mubr.bf16.mxu0 0
          %1449 = vmatmul.mubr.bf16.gmra.mrb[0].mxu0 %v855
          %v1450 = vpop.f32.mrb[0].mxu0
          %v1451 = vadd.f32 %v1319, %v1450
          %v1452 = vpop.f32.mrb[0].mxu0
          %v1453 = vpop.f32.mrb[0].mxu0
          %v1454 = vpop.f32.mrb[0].mxu0
          %1455 = vdwg.mxu0
          %v1460 = vunpack.c.l.b16 %v1271
          %v1461 = vunpack.c.l.b16 %v1272
          %v1462 = vunpack.c.l.b16 %v1273
          %v1463 = vunpack.c.l.b16 %v1274
          %v1464 = vpack.c.b16 %v1461, %v1460
          %v1465 = vpack.c.b16 %v1463, %v1462
          %1468 = vmatprep.subr.bf16.mxu0 0
          %1469 = vmatpush1.bf16.msra.mxu0 %v1464
          %1470 = vmatprep.subr.bf16.mxu0 0
          %1471 = vmatpush1.bf16.msra.mxu0 %v1465
          %1472 = vmatprep.subr.bf16.mxu0 0
          %1473 = vmatpush1.bf16.msra.mxu0 0
          %1474 = vmatprep.subr.bf16.mxu0 0
          %1475 = vmatpush1.bf16.msra.mxu0 0
          %1476 = vmatprep.subr.bf16.mxu0 0
          %1477 = vmatpush1.bf16.msra.mxu0 0
          %1478 = vmatprep.subr.bf16.mxu0 0
          %1479 = vmatpush1.bf16.msra.mxu0 0
          %1480 = vmatprep.subr.bf16.mxu0 0
          %1481 = vmatpush1.bf16.msra.mxu0 0
          %1482 = vmatprep.subr.bf16.mxu0 0
          %1483 = vmatpush1.bf16.msra.mxu0 0
          %1484 = vmatprep.subr.bf16.mxu0 0
          %1485 = vmatpush1.bf16.msra.mxu0 0
          %1486 = vmatprep.subr.bf16.mxu0 0
          %1487 = vmatpush1.bf16.msra.mxu0 0
          %1488 = vmatprep.subr.bf16.mxu0 0
          %1489 = vmatpush1.bf16.msra.mxu0 0
          %1490 = vmatprep.subr.bf16.mxu0 0
          %1491 = vmatpush1.bf16.msra.mxu0 0
          %1492 = vmatprep.subr.bf16.mxu0 0
          %1493 = vmatpush1.bf16.msra.mxu0 0
          %1494 = vmatprep.subr.bf16.mxu0 0
          %1495 = vmatpush1.bf16.msra.mxu0 0
          %1496 = vmatprep.subr.bf16.mxu0 0
          %1497 = vmatpush1.bf16.msra.mxu0 0
          %1498 = vmatprep.subr.bf16.mxu0 0
          %1499 = vmatpush1.bf16.msra.mxu0 0
          %1500 = vmatprep.mubr.bf16.mxu0 0
          %1501 = vmatmul.mubr.bf16.gmra.mrb[0].mxu0 %v855
          %v1502 = vpop.f32.mrb[0].mxu0
          %v1503 = vadd.f32 %v1323, %v1502
          %v1504 = vpop.f32.mrb[0].mxu0
          %v1505 = vpop.f32.mrb[0].mxu0
          %v1506 = vpop.f32.mrb[0].mxu0
          %1507 = vdwg.mxu0
          %v1512 = vunpack.c.l.b16 %v1275
          %v1513 = vunpack.c.l.b16 %v1276
          %v1514 = vunpack.c.l.b16 %v1277
          %v1515 = vunpack.c.l.b16 %v1278
          %v1516 = vpack.c.b16 %v1513, %v1512
          %v1517 = vpack.c.b16 %v1515, %v1514
          %1520 = vmatprep.subr.bf16.mxu0 0
          %1521 = vmatpush1.bf16.msra.mxu0 %v1516
          %1522 = vmatprep.subr.bf16.mxu0 0
          %1523 = vmatpush1.bf16.msra.mxu0 %v1517
          %1524 = vmatprep.subr.bf16.mxu0 0
          %1525 = vmatpush1.bf16.msra.mxu0 0
          %1526 = vmatprep.subr.bf16.mxu0 0
          %1527 = vmatpush1.bf16.msra.mxu0 0
          %1528 = vmatprep.subr.bf16.mxu0 0
          %1529 = vmatpush1.bf16.msra.mxu0 0
          %1530 = vmatprep.subr.bf16.mxu0 0
          %1531 = vmatpush1.bf16.msra.mxu0 0
          %1532 = vmatprep.subr.bf16.mxu0 0
          %1533 = vmatpush1.bf16.msra.mxu0 0
          %1534 = vmatprep.subr.bf16.mxu0 0
          %1535 = vmatpush1.bf16.msra.mxu0 0
          %1536 = vmatprep.subr.bf16.mxu0 0
          %1537 = vmatpush1.bf16.msra.mxu0 0
          %1538 = vmatprep.subr.bf16.mxu0 0
          %1539 = vmatpush1.bf16.msra.mxu0 0
          %1540 = vmatprep.subr.bf16.mxu0 0
          %1541 = vmatpush1.bf16.msra.mxu0 0
          %1542 = vmatprep.subr.bf16.mxu0 0
          %1543 = vmatpush1.bf16.msra.mxu0 0
          %1544 = vmatprep.subr.bf16.mxu0 0
          %1545 = vmatpush1.bf16.msra.mxu0 0
          %1546 = vmatprep.subr.bf16.mxu0 0
          %1547 = vmatpush1.bf16.msra.mxu0 0
          %1548 = vmatprep.subr.bf16.mxu0 0
          %1549 = vmatpush1.bf16.msra.mxu0 0
          %1550 = vmatprep.subr.bf16.mxu0 0
          %1551 = vmatpush1.bf16.msra.mxu0 0
          %1552 = vmatprep.mubr.bf16.mxu0 0
          %1553 = vmatmul.mubr.bf16.gmra.mrb[0].mxu0 %v855
          %v1554 = vpop.f32.mrb[0].mxu0
          %v1555 = vadd.f32 %v1327, %v1554
          %v1556 = vpop.f32.mrb[0].mxu0
          %v1557 = vpop.f32.mrb[0].mxu0
          %v1558 = vpop.f32.mrb[0].mxu0
          %1559 = vdwg.mxu0
          %v1564 = vunpack.c.l.b16 %v1279
          %v1565 = vunpack.c.l.b16 %v1280
          %v1566 = vunpack.c.l.b16 %v1281
          %v1567 = vunpack.c.l.b16 %v1282
          %v1568 = vpack.c.b16 %v1565, %v1564
          %v1569 = vpack.c.b16 %v1567, %v1566
          %1572 = vmatprep.subr.bf16.mxu0 0
          %1573 = vmatpush1.bf16.msra.mxu0 %v1568
          %1574 = vmatprep.subr.bf16.mxu0 0
          %1575 = vmatpush1.bf16.msra.mxu0 %v1569
          %1576 = vmatprep.subr.bf16.mxu0 0
          %1577 = vmatpush1.bf16.msra.mxu0 0
          %1578 = vmatprep.subr.bf16.mxu0 0
          %1579 = vmatpush1.bf16.msra.mxu0 0
          %1580 = vmatprep.subr.bf16.mxu0 0
          %1581 = vmatpush1.bf16.msra.mxu0 0
          %1582 = vmatprep.subr.bf16.mxu0 0
          %1583 = vmatpush1.bf16.msra.mxu0 0
          %1584 = vmatprep.subr.bf16.mxu0 0
          %1585 = vmatpush1.bf16.msra.mxu0 0
          %1586 = vmatprep.subr.bf16.mxu0 0
          %1587 = vmatpush1.bf16.msra.mxu0 0
          %1588 = vmatprep.subr.bf16.mxu0 0
          %1589 = vmatpush1.bf16.msra.mxu0 0
          %1590 = vmatprep.subr.bf16.mxu0 0
          %1591 = vmatpush1.bf16.msra.mxu0 0
          %1592 = vmatprep.subr.bf16.mxu0 0
          %1593 = vmatpush1.bf16.msra.mxu0 0
          %1594 = vmatprep.subr.bf16.mxu0 0
          %1595 = vmatpush1.bf16.msra.mxu0 0
          %1596 = vmatprep.subr.bf16.mxu0 0
          %1597 = vmatpush1.bf16.msra.mxu0 0
          %1598 = vmatprep.subr.bf16.mxu0 0
          %1599 = vmatpush1.bf16.msra.mxu0 0
          %1600 = vmatprep.subr.bf16.mxu0 0
          %1601 = vmatpush1.bf16.msra.mxu0 0
          %1602 = vmatprep.subr.bf16.mxu0 0
          %1603 = vmatpush1.bf16.msra.mxu0 0
          %1604 = vmatprep.mubr.bf16.mxu0 0
          %1605 = vmatmul.mubr.bf16.gmra.mrb[0].mxu0 %v855
          %v1606 = vpop.f32.mrb[0].mxu0
          %v1607 = vadd.f32 %v1331, %v1606
          %v1608 = vpop.f32.mrb[0].mxu0
          %v1609 = vpop.f32.mrb[0].mxu0
          %v1610 = vpop.f32.mrb[0].mxu0
          %1611 = vdwg.mxu0
          %v1616 = vunpack.c.l.b16 %v1283
          %v1617 = vunpack.c.l.b16 %v1284
          %v1618 = vunpack.c.l.b16 %v1285
          %v1619 = vunpack.c.l.b16 %v1286
          %v1620 = vpack.c.b16 %v1617, %v1616
          %v1621 = vpack.c.b16 %v1619, %v1618
          %1624 = vmatprep.subr.bf16.mxu0 0
          %1625 = vmatpush1.bf16.msra.mxu0 %v1620
          %1626 = vmatprep.subr.bf16.mxu0 0
          %1627 = vmatpush1.bf16.msra.mxu0 %v1621
          %1628 = vmatprep.subr.bf16.mxu0 0
          %1629 = vmatpush1.bf16.msra.mxu0 0
          %1630 = vmatprep.subr.bf16.mxu0 0
          %1631 = vmatpush1.bf16.msra.mxu0 0
          %1632 = vmatprep.subr.bf16.mxu0 0
          %1633 = vmatpush1.bf16.msra.mxu0 0
          %1634 = vmatprep.subr.bf16.mxu0 0
          %1635 = vmatpush1.bf16.msra.mxu0 0
          %1636 = vmatprep.subr.bf16.mxu0 0
          %1637 = vmatpush1.bf16.msra.mxu0 0
          %1638 = vmatprep.subr.bf16.mxu0 0
          %1639 = vmatpush1.bf16.msra.mxu0 0
          %1640 = vmatprep.subr.bf16.mxu0 0
          %1641 = vmatpush1.bf16.msra.mxu0 0
          %1642 = vmatprep.subr.bf16.mxu0 0
          %1643 = vmatpush1.bf16.msra.mxu0 0
          %1644 = vmatprep.subr.bf16.mxu0 0
          %1645 = vmatpush1.bf16.msra.mxu0 0
          %1646 = vmatprep.subr.bf16.mxu0 0
          %1647 = vmatpush1.bf16.msra.mxu0 0
          %1648 = vmatprep.subr.bf16.mxu0 0
          %1649 = vmatpush1.bf16.msra.mxu0 0
          %1650 = vmatprep.subr.bf16.mxu0 0
          %1651 = vmatpush1.bf16.msra.mxu0 0
          %1652 = vmatprep.subr.bf16.mxu0 0
          %1653 = vmatpush1.bf16.msra.mxu0 0
          %1654 = vmatprep.subr.bf16.mxu0 0
          %1655 = vmatpush1.bf16.msra.mxu0 0
          %1656 = vmatprep.mubr.bf16.mxu0 0
          %1657 = vmatmul.mubr.bf16.gmra.mrb[0].mxu0 %v855
          %v1658 = vpop.f32.mrb[0].mxu0
          %v1659 = vadd.f32 %v1335, %v1658
          %v1660 = vpop.f32.mrb[0].mxu0
          %v1661 = vpop.f32.mrb[0].mxu0
          %v1662 = vpop.f32.mrb[0].mxu0
          %1663 = vdwg.mxu0
          %v1668 = vunpack.c.l.b16 %v1287
          %v1669 = vunpack.c.l.b16 %v1288
          %v1670 = vunpack.c.l.b16 %v1289
          %v1671 = vunpack.c.l.b16 %v1290
          %v1672 = vpack.c.b16 %v1669, %v1668
          %v1673 = vpack.c.b16 %v1671, %v1670
          %1676 = vmatprep.subr.bf16.mxu0 0
          %1677 = vmatpush1.bf16.msra.mxu0 %v1672
          %1678 = vmatprep.subr.bf16.mxu0 0
          %1679 = vmatpush1.bf16.msra.mxu0 %v1673
          %1680 = vmatprep.subr.bf16.mxu0 0
          %1681 = vmatpush1.bf16.msra.mxu0 0
          %1682 = vmatprep.subr.bf16.mxu0 0
          %1683 = vmatpush1.bf16.msra.mxu0 0
          %1684 = vmatprep.subr.bf16.mxu0 0
          %1685 = vmatpush1.bf16.msra.mxu0 0
          %1686 = vmatprep.subr.bf16.mxu0 0
          %1687 = vmatpush1.bf16.msra.mxu0 0
          %1688 = vmatprep.subr.bf16.mxu0 0
          %1689 = vmatpush1.bf16.msra.mxu0 0
          %1690 = vmatprep.subr.bf16.mxu0 0
          %1691 = vmatpush1.bf16.msra.mxu0 0
          %1692 = vmatprep.subr.bf16.mxu0 0
          %1693 = vmatpush1.bf16.msra.mxu0 0
          %1694 = vmatprep.subr.bf16.mxu0 0
          %1695 = vmatpush1.bf16.msra.mxu0 0
          %1696 = vmatprep.subr.bf16.mxu0 0
          %1697 = vmatpush1.bf16.msra.mxu0 0
          %1698 = vmatprep.subr.bf16.mxu0 0
          %1699 = vmatpush1.bf16.msra.mxu0 0
          %1700 = vmatprep.subr.bf16.mxu0 0
          %1701 = vmatpush1.bf16.msra.mxu0 0
          %1702 = vmatprep.subr.bf16.mxu0 0
          %1703 = vmatpush1.bf16.msra.mxu0 0
          %1704 = vmatprep.subr.bf16.mxu0 0
          %1705 = vmatpush1.bf16.msra.mxu0 0
          %1706 = vmatprep.subr.bf16.mxu0 0
          %1707 = vmatpush1.bf16.msra.mxu0 0
          %1708 = vmatprep.mubr.bf16.mxu0 0
          %1709 = vmatmul.mubr.bf16.gmra.mrb[0].mxu0 %v855
          %v1710 = vpop.f32.mrb[0].mxu0
          %v1711 = vadd.f32 %v1339, %v1710
          %v1712 = vpop.f32.mrb[0].mxu0
          %v1713 = vpop.f32.mrb[0].mxu0
          %v1714 = vpop.f32.mrb[0].mxu0
          %1715 = vdwg.mxu0
          %v1720 = vunpack.c.l.b16 %v1291
          %v1721 = vunpack.c.l.b16 %v1292
          %v1722 = vunpack.c.l.b16 %v1293
          %v1723 = vunpack.c.l.b16 %v1294
          %v1724 = vpack.c.b16 %v1721, %v1720
          %v1725 = vpack.c.b16 %v1723, %v1722
          %1728 = vmatprep.subr.bf16.mxu0 0
          %1729 = vmatpush1.bf16.msra.mxu0 %v1724
          %1730 = vmatprep.subr.bf16.mxu0 0
          %1731 = vmatpush1.bf16.msra.mxu0 %v1725
          %1732 = vmatprep.subr.bf16.mxu0 0
          %1733 = vmatpush1.bf16.msra.mxu0 0
          %1734 = vmatprep.subr.bf16.mxu0 0
          %1735 = vmatpush1.bf16.msra.mxu0 0
          %1736 = vmatprep.subr.bf16.mxu0 0
          %1737 = vmatpush1.bf16.msra.mxu0 0
          %1738 = vmatprep.subr.bf16.mxu0 0
          %1739 = vmatpush1.bf16.msra.mxu0 0
          %1740 = vmatprep.subr.bf16.mxu0 0
          %1741 = vmatpush1.bf16.msra.mxu0 0
          %1742 = vmatprep.subr.bf16.mxu0 0
          %1743 = vmatpush1.bf16.msra.mxu0 0
          %1744 = vmatprep.subr.bf16.mxu0 0
          %1745 = vmatpush1.bf16.msra.mxu0 0
          %1746 = vmatprep.subr.bf16.mxu0 0
          %1747 = vmatpush1.bf16.msra.mxu0 0
          %1748 = vmatprep.subr.bf16.mxu0 0
          %1749 = vmatpush1.bf16.msra.mxu0 0
          %1750 = vmatprep.subr.bf16.mxu0 0
          %1751 = vmatpush1.bf16.msra.mxu0 0
          %1752 = vmatprep.subr.bf16.mxu0 0
          %1753 = vmatpush1.bf16.msra.mxu0 0
          %1754 = vmatprep.subr.bf16.mxu0 0
          %1755 = vmatpush1.bf16.msra.mxu0 0
          %1756 = vmatprep.subr.bf16.mxu0 0
          %1757 = vmatpush1.bf16.msra.mxu0 0
          %1758 = vmatprep.subr.bf16.mxu0 0
          %1759 = vmatpush1.bf16.msra.mxu0 0
          %1760 = vmatprep.mubr.bf16.mxu0 0
          %1761 = vmatmul.mubr.bf16.gmra.mrb[0].mxu0 %v855
          %v1762 = vpop.f32.mrb[0].mxu0
          %v1763 = vadd.f32 %v1343, %v1762
          %v1764 = vpop.f32.mrb[0].mxu0
          %v1765 = vpop.f32.mrb[0].mxu0
          %v1766 = vpop.f32.mrb[0].mxu0
          %1767 = vdwg.mxu0
          %s1768 = smul.addr %s731, 4
          %s1769 = scalar_lea.vmem %s8, %s1768
          %v1770 = vld [vmem:[%s1769] sm:$0xf]
          %v1771 = vld [vmem:[%s1769 + $0x4] sm:$0xf]
          %v1772 = vld [vmem:[%s1769 + $0x8] sm:$0xf]
          %v1773 = vld [vmem:[%s1769 + $0xc] sm:$0xf]
          %v1774 = vld [vmem:[%s1769 + $0x10] sm:$0xf]
          %v1775 = vld [vmem:[%s1769 + $0x14] sm:$0xf]
          %v1776 = vld [vmem:[%s1769 + $0x18] sm:$0xf]
          %v1777 = vld [vmem:[%s1769 + $0x1c] sm:$0xf]
          %v1778 = vld [vmem:[%s1769 + $0x20] sm:$0xf]
          %v1779 = vld [vmem:[%s1769 + $0x24] sm:$0xf]
          %v1780 = vld [vmem:[%s1769 + $0x28] sm:$0xf]
          %v1781 = vld [vmem:[%s1769 + $0x2c] sm:$0xf]
          %v1782 = vld [vmem:[%s1769 + $0x30] sm:$0xf]
          %v1783 = vld [vmem:[%s1769 + $0x34] sm:$0xf]
          %v1784 = vld [vmem:[%s1769 + $0x38] sm:$0xf]
          %v1785 = vld [vmem:[%s1769 + $0x3c] sm:$0xf]
          %v1786 = vld [vmem:[%s1769 + $0x40] sm:$0xf]
          %v1787 = vld [vmem:[%s1769 + $0x44] sm:$0xf]
          %v1788 = vld [vmem:[%s1769 + $0x48] sm:$0xf]
          %v1789 = vld [vmem:[%s1769 + $0x4c] sm:$0xf]
          %v1790 = vld [vmem:[%s1769 + $0x50] sm:$0xf]
          %v1791 = vld [vmem:[%s1769 + $0x54] sm:$0xf]
          %v1792 = vld [vmem:[%s1769 + $0x58] sm:$0xf]
          %v1793 = vld [vmem:[%s1769 + $0x5c] sm:$0xf]
          %v1794 = vld [vmem:[%s1769 + $0x60] sm:$0xf]
          %v1795 = vld [vmem:[%s1769 + $0x64] sm:$0xf]
          %v1796 = vld [vmem:[%s1769 + $0x68] sm:$0xf]
          %v1797 = vld [vmem:[%s1769 + $0x6c] sm:$0xf]
          %v1798 = vld [vmem:[%s1769 + $0x70] sm:$0xf]
          %v1799 = vld [vmem:[%s1769 + $0x74] sm:$0xf]
          %v1800 = vld [vmem:[%s1769 + $0x78] sm:$0xf]
          %v1801 = vld [vmem:[%s1769 + $0x7c] sm:$0xf]
          %s1802 = scalar_lea.vmem %s11, %s766
          %v1803 = vld [vmem:[%s1802] sm:$0x1]
          %v1804 = vld [vmem:[%s1802 + $0x1] sm:$0x1]
          %v1805 = vld [vmem:[%s1802 + $0x2] sm:$0x1]
          %v1806 = vld [vmem:[%s1802 + $0x3] sm:$0x1]
          %v1807 = vld [vmem:[%s1802 + $0x4] sm:$0x1]
          %v1808 = vld [vmem:[%s1802 + $0x5] sm:$0x1]
          %v1809 = vld [vmem:[%s1802 + $0x6] sm:$0x1]
          %v1810 = vld [vmem:[%s1802 + $0x7] sm:$0x1]
          %v1819 = vlaneseq
          %v1820 = vshrl.u32 %v1819, 7
          %v1821 = vsub.s32 0, %v1820
          %v1822 = vrot.slane %v1803, %v1821
          %v1823 = vlaneseq
          %v1824 = vshrl.u32 %v1823, 7
          %v1825 = vsub.s32 0, %v1824
          %v1826 = vrot.slane %v1804, %v1825
          %v1827 = vlaneseq
          %v1828 = vshrl.u32 %v1827, 7
          %v1829 = vsub.s32 0, %v1828
          %v1830 = vrot.slane %v1805, %v1829
          %v1831 = vlaneseq
          %v1832 = vshrl.u32 %v1831, 7
          %v1833 = vsub.s32 0, %v1832
          %v1834 = vrot.slane %v1806, %v1833
          %v1835 = vlaneseq
          %v1836 = vshrl.u32 %v1835, 7
          %v1837 = vsub.s32 0, %v1836
          %v1838 = vrot.slane %v1807, %v1837
          %v1839 = vlaneseq
          %v1840 = vshrl.u32 %v1839, 7
          %v1841 = vsub.s32 0, %v1840
          %v1842 = vrot.slane %v1808, %v1841
          %v1843 = vlaneseq
          %v1844 = vshrl.u32 %v1843, 7
          %v1845 = vsub.s32 0, %v1844
          %v1846 = vrot.slane %v1809, %v1845
          %v1847 = vlaneseq
          %v1848 = vshrl.u32 %v1847, 7
          %v1849 = vsub.s32 0, %v1848
          %v1850 = vrot.slane %v1810, %v1849
          %v1863 = vunpack.c.l.b16 %v1770
          %v1864 = vunpack.c.l.b16 %v1771
          %v1865 = vunpack.c.l.b16 %v1772
          %v1866 = vunpack.c.l.b16 %v1773
          %v1867 = vpack.c.b16 %v1864, %v1863
          %v1868 = vpack.c.b16 %v1866, %v1865
          %1871 = vmatprep.subr.bf16.mxu0 0
          %1872 = vmatpush1.bf16.msra.mxu0 %v1867
          %1873 = vmatprep.subr.bf16.mxu0 0
          %1874 = vmatpush1.bf16.msra.mxu0 %v1868
          %1875 = vmatprep.subr.bf16.mxu0 0
          %1876 = vmatpush1.bf16.msra.mxu0 0
          %1877 = vmatprep.subr.bf16.mxu0 0
          %1878 = vmatpush1.bf16.msra.mxu0 0
          %1879 = vmatprep.subr.bf16.mxu0 0
          %1880 = vmatpush1.bf16.msra.mxu0 0
          %1881 = vmatprep.subr.bf16.mxu0 0
          %1882 = vmatpush1.bf16.msra.mxu0 0
          %1883 = vmatprep.subr.bf16.mxu0 0
          %1884 = vmatpush1.bf16.msra.mxu0 0
          %1885 = vmatprep.subr.bf16.mxu0 0
          %1886 = vmatpush1.bf16.msra.mxu0 0
          %1887 = vmatprep.subr.bf16.mxu0 0
          %1888 = vmatpush1.bf16.msra.mxu0 0
          %1889 = vmatprep.subr.bf16.mxu0 0
          %1890 = vmatpush1.bf16.msra.mxu0 0
          %1891 = vmatprep.subr.bf16.mxu0 0
          %1892 = vmatpush1.bf16.msra.mxu0 0
          %1893 = vmatprep.subr.bf16.mxu0 0
          %1894 = vmatpush1.bf16.msra.mxu0 0
          %1895 = vmatprep.subr.bf16.mxu0 0
          %1896 = vmatpush1.bf16.msra.mxu0 0
          %1897 = vmatprep.subr.bf16.mxu0 0
          %1898 = vmatpush1.bf16.msra.mxu0 0
          %1899 = vmatprep.subr.bf16.mxu0 0
          %1900 = vmatpush1.bf16.msra.mxu0 0
          %1901 = vmatprep.subr.bf16.mxu0 0
          %1902 = vmatpush1.bf16.msra.mxu0 0
          %1903 = vmatprep.mubr.bf16.mxu0 0
          %1904 = vmatmul.mubr.bf16.gmra.mrb[0].mxu0 %v855
          %v1905 = vpop.f32.mrb[0].mxu0
          %v1906 = vadd.f32 %v1822, %v1905
          %v1907 = vpop.f32.mrb[0].mxu0
          %v1908 = vpop.f32.mrb[0].mxu0
          %v1909 = vpop.f32.mrb[0].mxu0
          %1910 = vdwg.mxu0
          %v1915 = vunpack.c.l.b16 %v1774
          %v1916 = vunpack.c.l.b16 %v1775
          %v1917 = vunpack.c.l.b16 %v1776
          %v1918 = vunpack.c.l.b16 %v1777
          %v1919 = vpack.c.b16 %v1916, %v1915
          %v1920 = vpack.c.b16 %v1918, %v1917
          %1923 = vmatprep.subr.bf16.mxu0 0
          %1924 = vmatpush1.bf16.msra.mxu0 %v1919
          %1925 = vmatprep.subr.bf16.mxu0 0
          %1926 = vmatpush1.bf16.msra.mxu0 %v1920
          %1927 = vmatprep.subr.bf16.mxu0 0
          %1928 = vmatpush1.bf16.msra.mxu0 0
          %1929 = vmatprep.subr.bf16.mxu0 0
          %1930 = vmatpush1.bf16.msra.mxu0 0
          %1931 = vmatprep.subr.bf16.mxu0 0
          %1932 = vmatpush1.bf16.msra.mxu0 0
          %1933 = vmatprep.subr.bf16.mxu0 0
          %1934 = vmatpush1.bf16.msra.mxu0 0
          %1935 = vmatprep.subr.bf16.mxu0 0
          %1936 = vmatpush1.bf16.msra.mxu0 0
          %1937 = vmatprep.subr.bf16.mxu0 0
          %1938 = vmatpush1.bf16.msra.mxu0 0
          %1939 = vmatprep.subr.bf16.mxu0 0
          %1940 = vmatpush1.bf16.msra.mxu0 0
          %1941 = vmatprep.subr.bf16.mxu0 0
          %1942 = vmatpush1.bf16.msra.mxu0 0
          %1943 = vmatprep.subr.bf16.mxu0 0
          %1944 = vmatpush1.bf16.msra.mxu0 0
          %1945 = vmatprep.subr.bf16.mxu0 0
          %1946 = vmatpush1.bf16.msra.mxu0 0
          %1947 = vmatprep.subr.bf16.mxu0 0
          %1948 = vmatpush1.bf16.msra.mxu0 0
          %1949 = vmatprep.subr.bf16.mxu0 0
          %1950 = vmatpush1.bf16.msra.mxu0 0
          %1951 = vmatprep.subr.bf16.mxu0 0
          %1952 = vmatpush1.bf16.msra.mxu0 0
          %1953 = vmatprep.subr.bf16.mxu0 0
          %1954 = vmatpush1.bf16.msra.mxu0 0
          %1955 = vmatprep.mubr.bf16.mxu0 0
          %1956 = vmatmul.mubr.bf16.gmra.mrb[0].mxu0 %v855
          %v1957 = vpop.f32.mrb[0].mxu0
          %v1958 = vadd.f32 %v1826, %v1957
          %v1959 = vpop.f32.mrb[0].mxu0
          %v1960 = vpop.f32.mrb[0].mxu0
          %v1961 = vpop.f32.mrb[0].mxu0
          %1962 = vdwg.mxu0
          %v1967 = vunpack.c.l.b16 %v1778
          %v1968 = vunpack.c.l.b16 %v1779
          %v1969 = vunpack.c.l.b16 %v1780
          %v1970 = vunpack.c.l.b16 %v1781
          %v1971 = vpack.c.b16 %v1968, %v1967
          %v1972 = vpack.c.b16 %v1970, %v1969
          %1975 = vmatprep.subr.bf16.mxu0 0
          %1976 = vmatpush1.bf16.msra.mxu0 %v1971
          %1977 = vmatprep.subr.bf16.mxu0 0
          %1978 = vmatpush1.bf16.msra.mxu0 %v1972
          %1979 = vmatprep.subr.bf16.mxu0 0
          %1980 = vmatpush1.bf16.msra.mxu0 0
          %1981 = vmatprep.subr.bf16.mxu0 0
          %1982 = vmatpush1.bf16.msra.mxu0 0
          %1983 = vmatprep.subr.bf16.mxu0 0
          %1984 = vmatpush1.bf16.msra.mxu0 0
          %1985 = vmatprep.subr.bf16.mxu0 0
          %1986 = vmatpush1.bf16.msra.mxu0 0
          %1987 = vmatprep.subr.bf16.mxu0 0
          %1988 = vmatpush1.bf16.msra.mxu0 0
          %1989 = vmatprep.subr.bf16.mxu0 0
          %1990 = vmatpush1.bf16.msra.mxu0 0
          %1991 = vmatprep.subr.bf16.mxu0 0
          %1992 = vmatpush1.bf16.msra.mxu0 0
          %1993 = vmatprep.subr.bf16.mxu0 0
          %1994 = vmatpush1.bf16.msra.mxu0 0
          %1995 = vmatprep.subr.bf16.mxu0 0
          %1996 = vmatpush1.bf16.msra.mxu0 0
          %1997 = vmatprep.subr.bf16.mxu0 0
          %1998 = vmatpush1.bf16.msra.mxu0 0
          %1999 = vmatprep.subr.bf16.mxu0 0
          %2000 = vmatpush1.bf16.msra.mxu0 0
          %2001 = vmatprep.subr.bf16.mxu0 0
          %2002 = vmatpush1.bf16.msra.mxu0 0
          %2003 = vmatprep.subr.bf16.mxu0 0
          %2004 = vmatpush1.bf16.msra.mxu0 0
          %2005 = vmatprep.subr.bf16.mxu0 0
          %2006 = vmatpush1.bf16.msra.mxu0 0
          %2007 = vmatprep.mubr.bf16.mxu0 0
          %2008 = vmatmul.mubr.bf16.gmra.mrb[0].mxu0 %v855
          %v2009 = vpop.f32.mrb[0].mxu0
          %v2010 = vadd.f32 %v1830, %v2009
          %v2011 = vpop.f32.mrb[0].mxu0
          %v2012 = vpop.f32.mrb[0].mxu0
          %v2013 = vpop.f32.mrb[0].mxu0
          %2014 = vdwg.mxu0
          %v2019 = vunpack.c.l.b16 %v1782
          %v2020 = vunpack.c.l.b16 %v1783
          %v2021 = vunpack.c.l.b16 %v1784
          %v2022 = vunpack.c.l.b16 %v1785
          %v2023 = vpack.c.b16 %v2020, %v2019
          %v2024 = vpack.c.b16 %v2022, %v2021
          %2027 = vmatprep.subr.bf16.mxu0 0
          %2028 = vmatpush1.bf16.msra.mxu0 %v2023
          %2029 = vmatprep.subr.bf16.mxu0 0
          %2030 = vmatpush1.bf16.msra.mxu0 %v2024
          %2031 = vmatprep.subr.bf16.mxu0 0
          %2032 = vmatpush1.bf16.msra.mxu0 0
          %2033 = vmatprep.subr.bf16.mxu0 0
          %2034 = vmatpush1.bf16.msra.mxu0 0
          %2035 = vmatprep.subr.bf16.mxu0 0
          %2036 = vmatpush1.bf16.msra.mxu0 0
          %2037 = vmatprep.subr.bf16.mxu0 0
          %2038 = vmatpush1.bf16.msra.mxu0 0
          %2039 = vmatprep.subr.bf16.mxu0 0
          %2040 = vmatpush1.bf16.msra.mxu0 0
          %2041 = vmatprep.subr.bf16.mxu0 0
          %2042 = vmatpush1.bf16.msra.mxu0 0
          %2043 = vmatprep.subr.bf16.mxu0 0
          %2044 = vmatpush1.bf16.msra.mxu0 0
          %2045 = vmatprep.subr.bf16.mxu0 0
          %2046 = vmatpush1.bf16.msra.mxu0 0
          %2047 = vmatprep.subr.bf16.mxu0 0
          %2048 = vmatpush1.bf16.msra.mxu0 0
          %2049 = vmatprep.subr.bf16.mxu0 0
          %2050 = vmatpush1.bf16.msra.mxu0 0
          %2051 = vmatprep.subr.bf16.mxu0 0
          %2052 = vmatpush1.bf16.msra.mxu0 0
          %2053 = vmatprep.subr.bf16.mxu0 0
          %2054 = vmatpush1.bf16.msra.mxu0 0
          %2055 = vmatprep.subr.bf16.mxu0 0
          %2056 = vmatpush1.bf16.msra.mxu0 0
          %2057 = vmatprep.subr.bf16.mxu0 0
          %2058 = vmatpush1.bf16.msra.mxu0 0
          %2059 = vmatprep.mubr.bf16.mxu0 0
          %2060 = vmatmul.mubr.bf16.gmra.mrb[0].mxu0 %v855
          %v2061 = vpop.f32.mrb[0].mxu0
          %v2062 = vadd.f32 %v1834, %v2061
          %v2063 = vpop.f32.mrb[0].mxu0
          %v2064 = vpop.f32.mrb[0].mxu0
          %v2065 = vpop.f32.mrb[0].mxu0
          %2066 = vdwg.mxu0
          %v2071 = vunpack.c.l.b16 %v1786
          %v2072 = vunpack.c.l.b16 %v1787
          %v2073 = vunpack.c.l.b16 %v1788
          %v2074 = vunpack.c.l.b16 %v1789
          %v2075 = vpack.c.b16 %v2072, %v2071
          %v2076 = vpack.c.b16 %v2074, %v2073
          %2079 = vmatprep.subr.bf16.mxu0 0
          %2080 = vmatpush1.bf16.msra.mxu0 %v2075
          %2081 = vmatprep.subr.bf16.mxu0 0
          %2082 = vmatpush1.bf16.msra.mxu0 %v2076
          %2083 = vmatprep.subr.bf16.mxu0 0
          %2084 = vmatpush1.bf16.msra.mxu0 0
          %2085 = vmatprep.subr.bf16.mxu0 0
          %2086 = vmatpush1.bf16.msra.mxu0 0
          %2087 = vmatprep.subr.bf16.mxu0 0
          %2088 = vmatpush1.bf16.msra.mxu0 0
          %2089 = vmatprep.subr.bf16.mxu0 0
          %2090 = vmatpush1.bf16.msra.mxu0 0
          %2091 = vmatprep.subr.bf16.mxu0 0
          %2092 = vmatpush1.bf16.msra.mxu0 0
          %2093 = vmatprep.subr.bf16.mxu0 0
          %2094 = vmatpush1.bf16.msra.mxu0 0
          %2095 = vmatprep.subr.bf16.mxu0 0
          %2096 = vmatpush1.bf16.msra.mxu0 0
          %2097 = vmatprep.subr.bf16.mxu0 0
          %2098 = vmatpush1.bf16.msra.mxu0 0
          %2099 = vmatprep.subr.bf16.mxu0 0
          %2100 = vmatpush1.bf16.msra.mxu0 0
          %2101 = vmatprep.subr.bf16.mxu0 0
          %2102 = vmatpush1.bf16.msra.mxu0 0
          %2103 = vmatprep.subr.bf16.mxu0 0
          %2104 = vmatpush1.bf16.msra.mxu0 0
          %2105 = vmatprep.subr.bf16.mxu0 0
          %2106 = vmatpush1.bf16.msra.mxu0 0
          %2107 = vmatprep.subr.bf16.mxu0 0
          %2108 = vmatpush1.bf16.msra.mxu0 0
          %2109 = vmatprep.subr.bf16.mxu0 0
          %2110 = vmatpush1.bf16.msra.mxu0 0
          %2111 = vmatprep.mubr.bf16.mxu0 0
          %2112 = vmatmul.mubr.bf16.gmra.mrb[0].mxu0 %v855
          %v2113 = vpop.f32.mrb[0].mxu0
          %v2114 = vadd.f32 %v1838, %v2113
          %v2115 = vpop.f32.mrb[0].mxu0
          %v2116 = vpop.f32.mrb[0].mxu0
          %v2117 = vpop.f32.mrb[0].mxu0
          %2118 = vdwg.mxu0
          %v2123 = vunpack.c.l.b16 %v1790
          %v2124 = vunpack.c.l.b16 %v1791
          %v2125 = vunpack.c.l.b16 %v1792
          %v2126 = vunpack.c.l.b16 %v1793
          %v2127 = vpack.c.b16 %v2124, %v2123
          %v2128 = vpack.c.b16 %v2126, %v2125
          %2131 = vmatprep.subr.bf16.mxu0 0
          %2132 = vmatpush1.bf16.msra.mxu0 %v2127
          %2133 = vmatprep.subr.bf16.mxu0 0
          %2134 = vmatpush1.bf16.msra.mxu0 %v2128
          %2135 = vmatprep.subr.bf16.mxu0 0
          %2136 = vmatpush1.bf16.msra.mxu0 0
          %2137 = vmatprep.subr.bf16.mxu0 0
          %2138 = vmatpush1.bf16.msra.mxu0 0
          %2139 = vmatprep.subr.bf16.mxu0 0
          %2140 = vmatpush1.bf16.msra.mxu0 0
          %2141 = vmatprep.subr.bf16.mxu0 0
          %2142 = vmatpush1.bf16.msra.mxu0 0
          %2143 = vmatprep.subr.bf16.mxu0 0
          %2144 = vmatpush1.bf16.msra.mxu0 0
          %2145 = vmatprep.subr.bf16.mxu0 0
          %2146 = vmatpush1.bf16.msra.mxu0 0
          %2147 = vmatprep.subr.bf16.mxu0 0
          %2148 = vmatpush1.bf16.msra.mxu0 0
          %2149 = vmatprep.subr.bf16.mxu0 0
          %2150 = vmatpush1.bf16.msra.mxu0 0
          %2151 = vmatprep.subr.bf16.mxu0 0
          %2152 = vmatpush1.bf16.msra.mxu0 0
          %2153 = vmatprep.subr.bf16.mxu0 0
          %2154 = vmatpush1.bf16.msra.mxu0 0
          %2155 = vmatprep.subr.bf16.mxu0 0
          %2156 = vmatpush1.bf16.msra.mxu0 0
          %2157 = vmatprep.subr.bf16.mxu0 0
          %2158 = vmatpush1.bf16.msra.mxu0 0
          %2159 = vmatprep.subr.bf16.mxu0 0
          %2160 = vmatpush1.bf16.msra.mxu0 0
          %2161 = vmatprep.subr.bf16.mxu0 0
          %2162 = vmatpush1.bf16.msra.mxu0 0
          %2163 = vmatprep.mubr.bf16.mxu0 0
          %2164 = vmatmul.mubr.bf16.gmra.mrb[0].mxu0 %v855
          %v2165 = vpop.f32.mrb[0].mxu0
          %v2166 = vadd.f32 %v1842, %v2165
          %v2167 = vpop.f32.mrb[0].mxu0
          %v2168 = vpop.f32.mrb[0].mxu0
          %v2169 = vpop.f32.mrb[0].mxu0
          %2170 = vdwg.mxu0
          %v2175 = vunpack.c.l.b16 %v1794
          %v2176 = vunpack.c.l.b16 %v1795
          %v2177 = vunpack.c.l.b16 %v1796
          %v2178 = vunpack.c.l.b16 %v1797
          %v2179 = vpack.c.b16 %v2176, %v2175
          %v2180 = vpack.c.b16 %v2178, %v2177
          %2183 = vmatprep.subr.bf16.mxu0 0
          %2184 = vmatpush1.bf16.msra.mxu0 %v2179
          %2185 = vmatprep.subr.bf16.mxu0 0
          %2186 = vmatpush1.bf16.msra.mxu0 %v2180
          %2187 = vmatprep.subr.bf16.mxu0 0
          %2188 = vmatpush1.bf16.msra.mxu0 0
          %2189 = vmatprep.subr.bf16.mxu0 0
          %2190 = vmatpush1.bf16.msra.mxu0 0
          %2191 = vmatprep.subr.bf16.mxu0 0
          %2192 = vmatpush1.bf16.msra.mxu0 0
          %2193 = vmatprep.subr.bf16.mxu0 0
          %2194 = vmatpush1.bf16.msra.mxu0 0
          %2195 = vmatprep.subr.bf16.mxu0 0
          %2196 = vmatpush1.bf16.msra.mxu0 0
          %2197 = vmatprep.subr.bf16.mxu0 0
          %2198 = vmatpush1.bf16.msra.mxu0 0
          %2199 = vmatprep.subr.bf16.mxu0 0
          %2200 = vmatpush1.bf16.msra.mxu0 0
          %2201 = vmatprep.subr.bf16.mxu0 0
          %2202 = vmatpush1.bf16.msra.mxu0 0
          %2203 = vmatprep.subr.bf16.mxu0 0
          %2204 = vmatpush1.bf16.msra.mxu0 0
          %2205 = vmatprep.subr.bf16.mxu0 0
          %2206 = vmatpush1.bf16.msra.mxu0 0
          %2207 = vmatprep.subr.bf16.mxu0 0
          %2208 = vmatpush1.bf16.msra.mxu0 0
          %2209 = vmatprep.subr.bf16.mxu0 0
          %2210 = vmatpush1.bf16.msra.mxu0 0
          %2211 = vmatprep.subr.bf16.mxu0 0
          %2212 = vmatpush1.bf16.msra.mxu0 0
          %2213 = vmatprep.subr.bf16.mxu0 0
          %2214 = vmatpush1.bf16.msra.mxu0 0
          %2215 = vmatprep.mubr.bf16.mxu0 0
          %2216 = vmatmul.mubr.bf16.gmra.mrb[0].mxu0 %v855
          %v2217 = vpop.f32.mrb[0].mxu0
          %v2218 = vadd.f32 %v1846, %v2217
          %v2219 = vpop.f32.mrb[0].mxu0
          %v2220 = vpop.f32.mrb[0].mxu0
          %v2221 = vpop.f32.mrb[0].mxu0
          %2222 = vdwg.mxu0
          %v2227 = vunpack.c.l.b16 %v1798
          %v2228 = vunpack.c.l.b16 %v1799
          %v2229 = vunpack.c.l.b16 %v1800
          %v2230 = vunpack.c.l.b16 %v1801
          %v2231 = vpack.c.b16 %v2228, %v2227
          %v2232 = vpack.c.b16 %v2230, %v2229
          %2235 = vmatprep.subr.bf16.mxu0 0
          %2236 = vmatpush1.bf16.msra.mxu0 %v2231
          %2237 = vmatprep.subr.bf16.mxu0 0
          %2238 = vmatpush1.bf16.msra.mxu0 %v2232
          %2239 = vmatprep.subr.bf16.mxu0 0
          %2240 = vmatpush1.bf16.msra.mxu0 0
          %2241 = vmatprep.subr.bf16.mxu0 0
          %2242 = vmatpush1.bf16.msra.mxu0 0
          %2243 = vmatprep.subr.bf16.mxu0 0
          %2244 = vmatpush1.bf16.msra.mxu0 0
          %2245 = vmatprep.subr.bf16.mxu0 0
          %2246 = vmatpush1.bf16.msra.mxu0 0
          %2247 = vmatprep.subr.bf16.mxu0 0
          %2248 = vmatpush1.bf16.msra.mxu0 0
          %2249 = vmatprep.subr.bf16.mxu0 0
          %2250 = vmatpush1.bf16.msra.mxu0 0
          %2251 = vmatprep.subr.bf16.mxu0 0
          %2252 = vmatpush1.bf16.msra.mxu0 0
          %2253 = vmatprep.subr.bf16.mxu0 0
          %2254 = vmatpush1.bf16.msra.mxu0 0
          %2255 = vmatprep.subr.bf16.mxu0 0
          %2256 = vmatpush1.bf16.msra.mxu0 0
          %2257 = vmatprep.subr.bf16.mxu0 0
          %2258 = vmatpush1.bf16.msra.mxu0 0
          %2259 = vmatprep.subr.bf16.mxu0 0
          %2260 = vmatpush1.bf16.msra.mxu0 0
          %2261 = vmatprep.subr.bf16.mxu0 0
          %2262 = vmatpush1.bf16.msra.mxu0 0
          %2263 = vmatprep.subr.bf16.mxu0 0
          %2264 = vmatpush1.bf16.msra.mxu0 0
          %2265 = vmatprep.subr.bf16.mxu0 0
          %2266 = vmatpush1.bf16.msra.mxu0 0
          %2267 = vmatprep.mubr.bf16.mxu0 0
          %2268 = vmatmul.mubr.bf16.gmra.mrb[0].mxu0 %v855
          %v2269 = vpop.f32.mrb[0].mxu0
          %v2270 = vadd.f32 %v1850, %v2269
          %v2271 = vpop.f32.mrb[0].mxu0
          %v2272 = vpop.f32.mrb[0].mxu0
          %v2273 = vpop.f32.mrb[0].mxu0
          %2274 = vdwg.mxu0
          %vm2275 = vcmask 31744
          %v2277 = vsel %vm2275, %v892, 0
          %v2280 = vsel %vm2275, %v1399, 0
          %2282 = vmatprep.subr.mxu0 0.0
          %2283 = vmatpush1.xpose.msra.mxu0 %v2280
          %2284 = vmatprep.subr.mxu0 0.0
          %2285 = vmatpush1.xpose.msra.mxu0 0.0
          %2286 = vmatprep.subr.mxu0 0.0
          %2287 = vmatpush1.xpose.msra.mxu0 0.0
          %2288 = vmatprep.subr.mxu0 0.0
          %2289 = vmatpush1.xpose.msra.mxu0 0.0
          %2290 = vmatprep.subr.mxu0 0.0
          %2291 = vmatpush1.xpose.msra.mxu0 0.0
          %2292 = vmatprep.subr.mxu0 0.0
          %2293 = vmatpush1.xpose.msra.mxu0 0.0
          %2294 = vmatprep.subr.mxu0 0.0
          %2295 = vmatpush1.xpose.msra.mxu0 0.0
          %2296 = vmatprep.subr.mxu0 0.0
          %2297 = vmatpush1.xpose.msra.mxu0 0.0
          %2298 = vmatprep.subr.mxu0 0.0
          %2299 = vmatpush1.xpose.msra.mxu0 0.0
          %2300 = vmatprep.subr.mxu0 0.0
          %2301 = vmatpush1.xpose.msra.mxu0 0.0
          %2302 = vmatprep.subr.mxu0 0.0
          %2303 = vmatpush1.xpose.msra.mxu0 0.0
          %2304 = vmatprep.subr.mxu0 0.0
          %2305 = vmatpush1.xpose.msra.mxu0 0.0
          %2306 = vmatprep.subr.mxu0 0.0
          %2307 = vmatpush1.xpose.msra.mxu0 0.0
          %2308 = vmatprep.subr.mxu0 0.0
          %2309 = vmatpush1.xpose.msra.mxu0 0.0
          %2310 = vmatprep.subr.mxu0 0.0
          %2311 = vmatpush1.xpose.msra.mxu0 0.0
          %2312 = vmatprep.subr.mxu0 0.0
          %2313 = vmatpush1.xpose.msra.mxu0 0.0
          %2314 = vmatprep.subr.mxu0 0.0
          %2315 = vmatpush1.xpose.msra.mxu0 0.0
          %2316 = vmatprep.subr.mxu0 0.0
          %2317 = vmatpush1.xpose.msra.mxu0 0.0
          %2318 = vmatprep.subr.mxu0 0.0
          %2319 = vmatpush1.xpose.msra.mxu0 0.0
          %2320 = vmatprep.subr.mxu0 0.0
          %2321 = vmatpush1.xpose.msra.mxu0 0.0
          %2322 = vmatprep.subr.mxu0 0.0
          %2323 = vmatpush1.xpose.msra.mxu0 0.0
          %2324 = vmatprep.subr.mxu0 0.0
          %2325 = vmatpush1.xpose.msra.mxu0 0.0
          %2326 = vmatprep.subr.mxu0 0.0
          %2327 = vmatpush1.xpose.msra.mxu0 0.0
          %2328 = vmatprep.subr.mxu0 0.0
          %2329 = vmatpush1.xpose.msra.mxu0 0.0
          %2330 = vmatprep.subr.mxu0 0.0
          %2331 = vmatpush1.xpose.msra.mxu0 0.0
          %2332 = vmatprep.subr.mxu0 0.0
          %2333 = vmatpush1.xpose.msra.mxu0 0.0
          %2334 = vmatprep.subr.mxu0 0.0
          %2335 = vmatpush1.xpose.msra.mxu0 0.0
          %2336 = vmatprep.subr.mxu0 0.0
          %2337 = vmatpush1.xpose.msra.mxu0 0.0
          %2338 = vmatprep.subr.mxu0 0.0
          %2339 = vmatpush1.xpose.msra.mxu0 0.0
          %2340 = vmatprep.subr.mxu0 0.0
          %2341 = vmatpush1.xpose.msra.mxu0 0.0
          %2342 = vmatprep.subr.mxu0 0.0
          %2343 = vmatpush1.xpose.msra.mxu0 0.0
          %2344 = vmatprep.subr.mxu0 0.0
          %2345 = vmatpush1.xpose.msra.mxu0 0.0
          %2346 = vmatprep.mubr.f32.mxu0 0.0
          %2347 = vmatmul.mubr.f32.gmra.mrb[0].mxu0 %v2277
          %v2348 = vpop.f32.mrb[0].mxu0
          %v2349 = vadd.f32 0.0, %v2348
          %v2350 = vpop.f32.mrb[0].mxu0
          %2351 = vdwg.mxu0
          %v2353 = vsel %vm2275, %v944, 0
          %v2356 = vsel %vm2275, %v1451, 0
          %2358 = vmatprep.subr.mxu0 0.0
          %2359 = vmatpush1.xpose.msra.mxu0 %v2356
          %2360 = vmatprep.subr.mxu0 0.0
          %2361 = vmatpush1.xpose.msra.mxu0 0.0
          %2362 = vmatprep.subr.mxu0 0.0
          %2363 = vmatpush1.xpose.msra.mxu0 0.0
          %2364 = vmatprep.subr.mxu0 0.0
          %2365 = vmatpush1.xpose.msra.mxu0 0.0
          %2366 = vmatprep.subr.mxu0 0.0
          %2367 = vmatpush1.xpose.msra.mxu0 0.0
          %2368 = vmatprep.subr.mxu0 0.0
          %2369 = vmatpush1.xpose.msra.mxu0 0.0
          %2370 = vmatprep.subr.mxu0 0.0
          %2371 = vmatpush1.xpose.msra.mxu0 0.0
          %2372 = vmatprep.subr.mxu0 0.0
          %2373 = vmatpush1.xpose.msra.mxu0 0.0
          %2374 = vmatprep.subr.mxu0 0.0
          %2375 = vmatpush1.xpose.msra.mxu0 0.0
          %2376 = vmatprep.subr.mxu0 0.0
          %2377 = vmatpush1.xpose.msra.mxu0 0.0
          %2378 = vmatprep.subr.mxu0 0.0
          %2379 = vmatpush1.xpose.msra.mxu0 0.0
          %2380 = vmatprep.subr.mxu0 0.0
          %2381 = vmatpush1.xpose.msra.mxu0 0.0
          %2382 = vmatprep.subr.mxu0 0.0
          %2383 = vmatpush1.xpose.msra.mxu0 0.0
          %2384 = vmatprep.subr.mxu0 0.0
          %2385 = vmatpush1.xpose.msra.mxu0 0.0
          %2386 = vmatprep.subr.mxu0 0.0
          %2387 = vmatpush1.xpose.msra.mxu0 0.0
          %2388 = vmatprep.subr.mxu0 0.0
          %2389 = vmatpush1.xpose.msra.mxu0 0.0
          %2390 = vmatprep.subr.mxu0 0.0
          %2391 = vmatpush1.xpose.msra.mxu0 0.0
          %2392 = vmatprep.subr.mxu0 0.0
          %2393 = vmatpush1.xpose.msra.mxu0 0.0
          %2394 = vmatprep.subr.mxu0 0.0
          %2395 = vmatpush1.xpose.msra.mxu0 0.0
          %2396 = vmatprep.subr.mxu0 0.0
          %2397 = vmatpush1.xpose.msra.mxu0 0.0
          %2398 = vmatprep.subr.mxu0 0.0
          %2399 = vmatpush1.xpose.msra.mxu0 0.0
          %2400 = vmatprep.subr.mxu0 0.0
          %2401 = vmatpush1.xpose.msra.mxu0 0.0
          %2402 = vmatprep.subr.mxu0 0.0
          %2403 = vmatpush1.xpose.msra.mxu0 0.0
          %2404 = vmatprep.subr.mxu0 0.0
          %2405 = vmatpush1.xpose.msra.mxu0 0.0
          %2406 = vmatprep.subr.mxu0 0.0
          %2407 = vmatpush1.xpose.msra.mxu0 0.0
          %2408 = vmatprep.subr.mxu0 0.0
          %2409 = vmatpush1.xpose.msra.mxu0 0.0
          %2410 = vmatprep.subr.mxu0 0.0
          %2411 = vmatpush1.xpose.msra.mxu0 0.0
          %2412 = vmatprep.subr.mxu0 0.0
          %2413 = vmatpush1.xpose.msra.mxu0 0.0
          %2414 = vmatprep.subr.mxu0 0.0
          %2415 = vmatpush1.xpose.msra.mxu0 0.0
          %2416 = vmatprep.subr.mxu0 0.0
          %2417 = vmatpush1.xpose.msra.mxu0 0.0
          %2418 = vmatprep.subr.mxu0 0.0
          %2419 = vmatpush1.xpose.msra.mxu0 0.0
          %2420 = vmatprep.subr.mxu0 0.0
          %2421 = vmatpush1.xpose.msra.mxu0 0.0
          %2422 = vmatprep.mubr.f32.mxu0 0.0
          %2423 = vmatmul.mubr.f32.gmra.mrb[0].mxu0 %v2353
          %v2424 = vpop.f32.mrb[0].mxu0
          %v2425 = vadd.f32 0.0, %v2424
          %v2426 = vpop.f32.mrb[0].mxu0
          %2427 = vdwg.mxu0
          %v2429 = vsel %vm2275, %v996, 0
          %v2432 = vsel %vm2275, %v1503, 0
          %2434 = vmatprep.subr.mxu0 0.0
          %2435 = vmatpush1.xpose.msra.mxu0 %v2432
          %2436 = vmatprep.subr.mxu0 0.0
          %2437 = vmatpush1.xpose.msra.mxu0 0.0
          %2438 = vmatprep.subr.mxu0 0.0
          %2439 = vmatpush1.xpose.msra.mxu0 0.0
          %2440 = vmatprep.subr.mxu0 0.0
          %2441 = vmatpush1.xpose.msra.mxu0 0.0
          %2442 = vmatprep.subr.mxu0 0.0
          %2443 = vmatpush1.xpose.msra.mxu0 0.0
          %2444 = vmatprep.subr.mxu0 0.0
          %2445 = vmatpush1.xpose.msra.mxu0 0.0
          %2446 = vmatprep.subr.mxu0 0.0
          %2447 = vmatpush1.xpose.msra.mxu0 0.0
          %2448 = vmatprep.subr.mxu0 0.0
          %2449 = vmatpush1.xpose.msra.mxu0 0.0
          %2450 = vmatprep.subr.mxu0 0.0
          %2451 = vmatpush1.xpose.msra.mxu0 0.0
          %2452 = vmatprep.subr.mxu0 0.0
          %2453 = vmatpush1.xpose.msra.mxu0 0.0
          %2454 = vmatprep.subr.mxu0 0.0
          %2455 = vmatpush1.xpose.msra.mxu0 0.0
          %2456 = vmatprep.subr.mxu0 0.0
          %2457 = vmatpush1.xpose.msra.mxu0 0.0
          %2458 = vmatprep.subr.mxu0 0.0
          %2459 = vmatpush1.xpose.msra.mxu0 0.0
          %2460 = vmatprep.subr.mxu0 0.0
          %2461 = vmatpush1.xpose.msra.mxu0 0.0
          %2462 = vmatprep.subr.mxu0 0.0
          %2463 = vmatpush1.xpose.msra.mxu0 0.0
          %2464 = vmatprep.subr.mxu0 0.0
          %2465 = vmatpush1.xpose.msra.mxu0 0.0
          %2466 = vmatprep.subr.mxu0 0.0
          %2467 = vmatpush1.xpose.msra.mxu0 0.0
          %2468 = vmatprep.subr.mxu0 0.0
          %2469 = vmatpush1.xpose.msra.mxu0 0.0
          %2470 = vmatprep.subr.mxu0 0.0
          %2471 = vmatpush1.xpose.msra.mxu0 0.0
          %2472 = vmatprep.subr.mxu0 0.0
          %2473 = vmatpush1.xpose.msra.mxu0 0.0
          %2474 = vmatprep.subr.mxu0 0.0
          %2475 = vmatpush1.xpose.msra.mxu0 0.0
          %2476 = vmatprep.subr.mxu0 0.0
          %2477 = vmatpush1.xpose.msra.mxu0 0.0
          %2478 = vmatprep.subr.mxu0 0.0
          %2479 = vmatpush1.xpose.msra.mxu0 0.0
          %2480 = vmatprep.subr.mxu0 0.0
          %2481 = vmatpush1.xpose.msra.mxu0 0.0
          %2482 = vmatprep.subr.mxu0 0.0
          %2483 = vmatpush1.xpose.msra.mxu0 0.0
          %2484 = vmatprep.subr.mxu0 0.0
          %2485 = vmatpush1.xpose.msra.mxu0 0.0
          %2486 = vmatprep.subr.mxu0 0.0
          %2487 = vmatpush1.xpose.msra.mxu0 0.0
          %2488 = vmatprep.subr.mxu0 0.0
          %2489 = vmatpush1.xpose.msra.mxu0 0.0
          %2490 = vmatprep.subr.mxu0 0.0
          %2491 = vmatpush1.xpose.msra.mxu0 0.0
          %2492 = vmatprep.subr.mxu0 0.0
          %2493 = vmatpush1.xpose.msra.mxu0 0.0
          %2494 = vmatprep.subr.mxu0 0.0
          %2495 = vmatpush1.xpose.msra.mxu0 0.0
          %2496 = vmatprep.subr.mxu0 0.0
          %2497 = vmatpush1.xpose.msra.mxu0 0.0
          %2498 = vmatprep.mubr.f32.mxu0 0.0
          %2499 = vmatmul.mubr.f32.gmra.mrb[0].mxu0 %v2429
          %v2500 = vpop.f32.mrb[0].mxu0
          %v2501 = vadd.f32 0.0, %v2500
          %v2502 = vpop.f32.mrb[0].mxu0
          %2503 = vdwg.mxu0
          %v2505 = vsel %vm2275, %v1048, 0
          %v2508 = vsel %vm2275, %v1555, 0
          %2510 = vmatprep.subr.mxu0 0.0
          %2511 = vmatpush1.xpose.msra.mxu0 %v2508
          %2512 = vmatprep.subr.mxu0 0.0
          %2513 = vmatpush1.xpose.msra.mxu0 0.0
          %2514 = vmatprep.subr.mxu0 0.0
          %2515 = vmatpush1.xpose.msra.mxu0 0.0
          %2516 = vmatprep.subr.mxu0 0.0
          %2517 = vmatpush1.xpose.msra.mxu0 0.0
          %2518 = vmatprep.subr.mxu0 0.0
          %2519 = vmatpush1.xpose.msra.mxu0 0.0
          %2520 = vmatprep.subr.mxu0 0.0
          %2521 = vmatpush1.xpose.msra.mxu0 0.0
          %2522 = vmatprep.subr.mxu0 0.0
          %2523 = vmatpush1.xpose.msra.mxu0 0.0
          %2524 = vmatprep.subr.mxu0 0.0
          %2525 = vmatpush1.xpose.msra.mxu0 0.0
          %2526 = vmatprep.subr.mxu0 0.0
          %2527 = vmatpush1.xpose.msra.mxu0 0.0
          %2528 = vmatprep.subr.mxu0 0.0
          %2529 = vmatpush1.xpose.msra.mxu0 0.0
          %2530 = vmatprep.subr.mxu0 0.0
          %2531 = vmatpush1.xpose.msra.mxu0 0.0
          %2532 = vmatprep.subr.mxu0 0.0
          %2533 = vmatpush1.xpose.msra.mxu0 0.0
          %2534 = vmatprep.subr.mxu0 0.0
          %2535 = vmatpush1.xpose.msra.mxu0 0.0
          %2536 = vmatprep.subr.mxu0 0.0
          %2537 = vmatpush1.xpose.msra.mxu0 0.0
          %2538 = vmatprep.subr.mxu0 0.0
          %2539 = vmatpush1.xpose.msra.mxu0 0.0
          %2540 = vmatprep.subr.mxu0 0.0
          %2541 = vmatpush1.xpose.msra.mxu0 0.0
          %2542 = vmatprep.subr.mxu0 0.0
          %2543 = vmatpush1.xpose.msra.mxu0 0.0
          %2544 = vmatprep.subr.mxu0 0.0
          %2545 = vmatpush1.xpose.msra.mxu0 0.0
          %2546 = vmatprep.subr.mxu0 0.0
          %2547 = vmatpush1.xpose.msra.mxu0 0.0
          %2548 = vmatprep.subr.mxu0 0.0
          %2549 = vmatpush1.xpose.msra.mxu0 0.0
          %2550 = vmatprep.subr.mxu0 0.0
          %2551 = vmatpush1.xpose.msra.mxu0 0.0
          %2552 = vmatprep.subr.mxu0 0.0
          %2553 = vmatpush1.xpose.msra.mxu0 0.0
          %2554 = vmatprep.subr.mxu0 0.0
          %2555 = vmatpush1.xpose.msra.mxu0 0.0
          %2556 = vmatprep.subr.mxu0 0.0
          %2557 = vmatpush1.xpose.msra.mxu0 0.0
          %2558 = vmatprep.subr.mxu0 0.0
          %2559 = vmatpush1.xpose.msra.mxu0 0.0
          %2560 = vmatprep.subr.mxu0 0.0
          %2561 = vmatpush1.xpose.msra.mxu0 0.0
          %2562 = vmatprep.subr.mxu0 0.0
          %2563 = vmatpush1.xpose.msra.mxu0 0.0
          %2564 = vmatprep.subr.mxu0 0.0
          %2565 = vmatpush1.xpose.msra.mxu0 0.0
          %2566 = vmatprep.subr.mxu0 0.0
          %2567 = vmatpush1.xpose.msra.mxu0 0.0
          %2568 = vmatprep.subr.mxu0 0.0
          %2569 = vmatpush1.xpose.msra.mxu0 0.0
          %2570 = vmatprep.subr.mxu0 0.0
          %2571 = vmatpush1.xpose.msra.mxu0 0.0
          %2572 = vmatprep.subr.mxu0 0.0
          %2573 = vmatpush1.xpose.msra.mxu0 0.0
          %2574 = vmatprep.mubr.f32.mxu0 0.0
          %2575 = vmatmul.mubr.f32.gmra.mrb[0].mxu0 %v2505
          %v2576 = vpop.f32.mrb[0].mxu0
          %v2577 = vadd.f32 0.0, %v2576
          %v2578 = vpop.f32.mrb[0].mxu0
          %2579 = vdwg.mxu0
          %v2581 = vsel %vm2275, %v1100, 0
          %v2584 = vsel %vm2275, %v1607, 0
          %2586 = vmatprep.subr.mxu0 0.0
          %2587 = vmatpush1.xpose.msra.mxu0 %v2584
          %2588 = vmatprep.subr.mxu0 0.0
          %2589 = vmatpush1.xpose.msra.mxu0 0.0
          %2590 = vmatprep.subr.mxu0 0.0
          %2591 = vmatpush1.xpose.msra.mxu0 0.0
          %2592 = vmatprep.subr.mxu0 0.0
          %2593 = vmatpush1.xpose.msra.mxu0 0.0
          %2594 = vmatprep.subr.mxu0 0.0
          %2595 = vmatpush1.xpose.msra.mxu0 0.0
          %2596 = vmatprep.subr.mxu0 0.0
          %2597 = vmatpush1.xpose.msra.mxu0 0.0
          %2598 = vmatprep.subr.mxu0 0.0
          %2599 = vmatpush1.xpose.msra.mxu0 0.0
          %2600 = vmatprep.subr.mxu0 0.0
          %2601 = vmatpush1.xpose.msra.mxu0 0.0
          %2602 = vmatprep.subr.mxu0 0.0
          %2603 = vmatpush1.xpose.msra.mxu0 0.0
          %2604 = vmatprep.subr.mxu0 0.0
          %2605 = vmatpush1.xpose.msra.mxu0 0.0
          %2606 = vmatprep.subr.mxu0 0.0
          %2607 = vmatpush1.xpose.msra.mxu0 0.0
          %2608 = vmatprep.subr.mxu0 0.0
          %2609 = vmatpush1.xpose.msra.mxu0 0.0
          %2610 = vmatprep.subr.mxu0 0.0
          %2611 = vmatpush1.xpose.msra.mxu0 0.0
          %2612 = vmatprep.subr.mxu0 0.0
          %2613 = vmatpush1.xpose.msra.mxu0 0.0
          %2614 = vmatprep.subr.mxu0 0.0
          %2615 = vmatpush1.xpose.msra.mxu0 0.0
          %2616 = vmatprep.subr.mxu0 0.0
          %2617 = vmatpush1.xpose.msra.mxu0 0.0
          %2618 = vmatprep.subr.mxu0 0.0
          %2619 = vmatpush1.xpose.msra.mxu0 0.0
          %2620 = vmatprep.subr.mxu0 0.0
          %2621 = vmatpush1.xpose.msra.mxu0 0.0
          %2622 = vmatprep.subr.mxu0 0.0
          %2623 = vmatpush1.xpose.msra.mxu0 0.0
          %2624 = vmatprep.subr.mxu0 0.0
          %2625 = vmatpush1.xpose.msra.mxu0 0.0
          %2626 = vmatprep.subr.mxu0 0.0
          %2627 = vmatpush1.xpose.msra.mxu0 0.0
          %2628 = vmatprep.subr.mxu0 0.0
          %2629 = vmatpush1.xpose.msra.mxu0 0.0
          %2630 = vmatprep.subr.mxu0 0.0
          %2631 = vmatpush1.xpose.msra.mxu0 0.0
          %2632 = vmatprep.subr.mxu0 0.0
          %2633 = vmatpush1.xpose.msra.mxu0 0.0
          %2634 = vmatprep.subr.mxu0 0.0
          %2635 = vmatpush1.xpose.msra.mxu0 0.0
          %2636 = vmatprep.subr.mxu0 0.0
          %2637 = vmatpush1.xpose.msra.mxu0 0.0
          %2638 = vmatprep.subr.mxu0 0.0
          %2639 = vmatpush1.xpose.msra.mxu0 0.0
          %2640 = vmatprep.subr.mxu0 0.0
          %2641 = vmatpush1.xpose.msra.mxu0 0.0
          %2642 = vmatprep.subr.mxu0 0.0
          %2643 = vmatpush1.xpose.msra.mxu0 0.0
          %2644 = vmatprep.subr.mxu0 0.0
          %2645 = vmatpush1.xpose.msra.mxu0 0.0
          %2646 = vmatprep.subr.mxu0 0.0
          %2647 = vmatpush1.xpose.msra.mxu0 0.0
          %2648 = vmatprep.subr.mxu0 0.0
          %2649 = vmatpush1.xpose.msra.mxu0 0.0
          %2650 = vmatprep.mubr.f32.mxu0 0.0
          %2651 = vmatmul.mubr.f32.gmra.mrb[0].mxu0 %v2581
          %v2652 = vpop.f32.mrb[0].mxu0
          %v2653 = vadd.f32 0.0, %v2652
          %v2654 = vpop.f32.mrb[0].mxu0
          %2655 = vdwg.mxu0
          %v2657 = vsel %vm2275, %v1152, 0
          %v2660 = vsel %vm2275, %v1659, 0
          %2662 = vmatprep.subr.mxu0 0.0
          %2663 = vmatpush1.xpose.msra.mxu0 %v2660
          %2664 = vmatprep.subr.mxu0 0.0
          %2665 = vmatpush1.xpose.msra.mxu0 0.0
          %2666 = vmatprep.subr.mxu0 0.0
          %2667 = vmatpush1.xpose.msra.mxu0 0.0
          %2668 = vmatprep.subr.mxu0 0.0
          %2669 = vmatpush1.xpose.msra.mxu0 0.0
          %2670 = vmatprep.subr.mxu0 0.0
          %2671 = vmatpush1.xpose.msra.mxu0 0.0
          %2672 = vmatprep.subr.mxu0 0.0
          %2673 = vmatpush1.xpose.msra.mxu0 0.0
          %2674 = vmatprep.subr.mxu0 0.0
          %2675 = vmatpush1.xpose.msra.mxu0 0.0
          %2676 = vmatprep.subr.mxu0 0.0
          %2677 = vmatpush1.xpose.msra.mxu0 0.0
          %2678 = vmatprep.subr.mxu0 0.0
          %2679 = vmatpush1.xpose.msra.mxu0 0.0
          %2680 = vmatprep.subr.mxu0 0.0
          %2681 = vmatpush1.xpose.msra.mxu0 0.0
          %2682 = vmatprep.subr.mxu0 0.0
          %2683 = vmatpush1.xpose.msra.mxu0 0.0
          %2684 = vmatprep.subr.mxu0 0.0
          %2685 = vmatpush1.xpose.msra.mxu0 0.0
          %2686 = vmatprep.subr.mxu0 0.0
          %2687 = vmatpush1.xpose.msra.mxu0 0.0
          %2688 = vmatprep.subr.mxu0 0.0
          %2689 = vmatpush1.xpose.msra.mxu0 0.0
          %2690 = vmatprep.subr.mxu0 0.0
          %2691 = vmatpush1.xpose.msra.mxu0 0.0
          %2692 = vmatprep.subr.mxu0 0.0
          %2693 = vmatpush1.xpose.msra.mxu0 0.0
          %2694 = vmatprep.subr.mxu0 0.0
          %2695 = vmatpush1.xpose.msra.mxu0 0.0
          %2696 = vmatprep.subr.mxu0 0.0
          %2697 = vmatpush1.xpose.msra.mxu0 0.0
          %2698 = vmatprep.subr.mxu0 0.0
          %2699 = vmatpush1.xpose.msra.mxu0 0.0
          %2700 = vmatprep.subr.mxu0 0.0
          %2701 = vmatpush1.xpose.msra.mxu0 0.0
          %2702 = vmatprep.subr.mxu0 0.0
          %2703 = vmatpush1.xpose.msra.mxu0 0.0
          %2704 = vmatprep.subr.mxu0 0.0
          %2705 = vmatpush1.xpose.msra.mxu0 0.0
          %2706 = vmatprep.subr.mxu0 0.0
          %2707 = vmatpush1.xpose.msra.mxu0 0.0
          %2708 = vmatprep.subr.mxu0 0.0
          %2709 = vmatpush1.xpose.msra.mxu0 0.0
          %2710 = vmatprep.subr.mxu0 0.0
          %2711 = vmatpush1.xpose.msra.mxu0 0.0
          %2712 = vmatprep.subr.mxu0 0.0
          %2713 = vmatpush1.xpose.msra.mxu0 0.0
          %2714 = vmatprep.subr.mxu0 0.0
          %2715 = vmatpush1.xpose.msra.mxu0 0.0
          %2716 = vmatprep.subr.mxu0 0.0
          %2717 = vmatpush1.xpose.msra.mxu0 0.0
          %2718 = vmatprep.subr.mxu0 0.0
          %2719 = vmatpush1.xpose.msra.mxu0 0.0
          %2720 = vmatprep.subr.mxu0 0.0
          %2721 = vmatpush1.xpose.msra.mxu0 0.0
          %2722 = vmatprep.subr.mxu0 0.0
          %2723 = vmatpush1.xpose.msra.mxu0 0.0
          %2724 = vmatprep.subr.mxu0 0.0
          %2725 = vmatpush1.xpose.msra.mxu0 0.0
          %2726 = vmatprep.mubr.f32.mxu0 0.0
          %2727 = vmatmul.mubr.f32.gmra.mrb[0].mxu0 %v2657
          %v2728 = vpop.f32.mrb[0].mxu0
          %v2729 = vadd.f32 0.0, %v2728
          %v2730 = vpop.f32.mrb[0].mxu0
          %2731 = vdwg.mxu0
          %v2733 = vsel %vm2275, %v1204, 0
          %v2736 = vsel %vm2275, %v1711, 0
          %2738 = vmatprep.subr.mxu0 0.0
          %2739 = vmatpush1.xpose.msra.mxu0 %v2736
          %2740 = vmatprep.subr.mxu0 0.0
          %2741 = vmatpush1.xpose.msra.mxu0 0.0
          %2742 = vmatprep.subr.mxu0 0.0
          %2743 = vmatpush1.xpose.msra.mxu0 0.0
          %2744 = vmatprep.subr.mxu0 0.0
          %2745 = vmatpush1.xpose.msra.mxu0 0.0
          %2746 = vmatprep.subr.mxu0 0.0
          %2747 = vmatpush1.xpose.msra.mxu0 0.0
          %2748 = vmatprep.subr.mxu0 0.0
          %2749 = vmatpush1.xpose.msra.mxu0 0.0
          %2750 = vmatprep.subr.mxu0 0.0
          %2751 = vmatpush1.xpose.msra.mxu0 0.0
          %2752 = vmatprep.subr.mxu0 0.0
          %2753 = vmatpush1.xpose.msra.mxu0 0.0
          %2754 = vmatprep.subr.mxu0 0.0
          %2755 = vmatpush1.xpose.msra.mxu0 0.0
          %2756 = vmatprep.subr.mxu0 0.0
          %2757 = vmatpush1.xpose.msra.mxu0 0.0
          %2758 = vmatprep.subr.mxu0 0.0
          %2759 = vmatpush1.xpose.msra.mxu0 0.0
          %2760 = vmatprep.subr.mxu0 0.0
          %2761 = vmatpush1.xpose.msra.mxu0 0.0
          %2762 = vmatprep.subr.mxu0 0.0
          %2763 = vmatpush1.xpose.msra.mxu0 0.0
          %2764 = vmatprep.subr.mxu0 0.0
          %2765 = vmatpush1.xpose.msra.mxu0 0.0
          %2766 = vmatprep.subr.mxu0 0.0
          %2767 = vmatpush1.xpose.msra.mxu0 0.0
          %2768 = vmatprep.subr.mxu0 0.0
          %2769 = vmatpush1.xpose.msra.mxu0 0.0
          %2770 = vmatprep.subr.mxu0 0.0
          %2771 = vmatpush1.xpose.msra.mxu0 0.0
          %2772 = vmatprep.subr.mxu0 0.0
          %2773 = vmatpush1.xpose.msra.mxu0 0.0
          %2774 = vmatprep.subr.mxu0 0.0
          %2775 = vmatpush1.xpose.msra.mxu0 0.0
          %2776 = vmatprep.subr.mxu0 0.0
          %2777 = vmatpush1.xpose.msra.mxu0 0.0
          %2778 = vmatprep.subr.mxu0 0.0
          %2779 = vmatpush1.xpose.msra.mxu0 0.0
          %2780 = vmatprep.subr.mxu0 0.0
          %2781 = vmatpush1.xpose.msra.mxu0 0.0
          %2782 = vmatprep.subr.mxu0 0.0
          %2783 = vmatpush1.xpose.msra.mxu0 0.0
          %2784 = vmatprep.subr.mxu0 0.0
          %2785 = vmatpush1.xpose.msra.mxu0 0.0
          %2786 = vmatprep.subr.mxu0 0.0
          %2787 = vmatpush1.xpose.msra.mxu0 0.0
          %2788 = vmatprep.subr.mxu0 0.0
          %2789 = vmatpush1.xpose.msra.mxu0 0.0
          %2790 = vmatprep.subr.mxu0 0.0
          %2791 = vmatpush1.xpose.msra.mxu0 0.0
          %2792 = vmatprep.subr.mxu0 0.0
          %2793 = vmatpush1.xpose.msra.mxu0 0.0
          %2794 = vmatprep.subr.mxu0 0.0
          %2795 = vmatpush1.xpose.msra.mxu0 0.0
          %2796 = vmatprep.subr.mxu0 0.0
          %2797 = vmatpush1.xpose.msra.mxu0 0.0
          %2798 = vmatprep.subr.mxu0 0.0
          %2799 = vmatpush1.xpose.msra.mxu0 0.0
          %2800 = vmatprep.subr.mxu0 0.0
          %2801 = vmatpush1.xpose.msra.mxu0 0.0
          %2802 = vmatprep.mubr.f32.mxu0 0.0
          %2803 = vmatmul.mubr.f32.gmra.mrb[0].mxu0 %v2733
          %v2804 = vpop.f32.mrb[0].mxu0
          %v2805 = vadd.f32 0.0, %v2804
          %v2806 = vpop.f32.mrb[0].mxu0
          %2807 = vdwg.mxu0
          %v2809 = vsel %vm2275, %v1256, 0
          %v2812 = vsel %vm2275, %v1763, 0
          %2814 = vmatprep.subr.mxu0 0.0
          %2815 = vmatpush1.xpose.msra.mxu0 %v2812
          %2816 = vmatprep.subr.mxu0 0.0
          %2817 = vmatpush1.xpose.msra.mxu0 0.0
          %2818 = vmatprep.subr.mxu0 0.0
          %2819 = vmatpush1.xpose.msra.mxu0 0.0
          %2820 = vmatprep.subr.mxu0 0.0
          %2821 = vmatpush1.xpose.msra.mxu0 0.0
          %2822 = vmatprep.subr.mxu0 0.0
          %2823 = vmatpush1.xpose.msra.mxu0 0.0
          %2824 = vmatprep.subr.mxu0 0.0
          %2825 = vmatpush1.xpose.msra.mxu0 0.0
          %2826 = vmatprep.subr.mxu0 0.0
          %2827 = vmatpush1.xpose.msra.mxu0 0.0
          %2828 = vmatprep.subr.mxu0 0.0
          %2829 = vmatpush1.xpose.msra.mxu0 0.0
          %2830 = vmatprep.subr.mxu0 0.0
          %2831 = vmatpush1.xpose.msra.mxu0 0.0
          %2832 = vmatprep.subr.mxu0 0.0
          %2833 = vmatpush1.xpose.msra.mxu0 0.0
          %2834 = vmatprep.subr.mxu0 0.0
          %2835 = vmatpush1.xpose.msra.mxu0 0.0
          %2836 = vmatprep.subr.mxu0 0.0
          %2837 = vmatpush1.xpose.msra.mxu0 0.0
          %2838 = vmatprep.subr.mxu0 0.0
          %2839 = vmatpush1.xpose.msra.mxu0 0.0
          %2840 = vmatprep.subr.mxu0 0.0
          %2841 = vmatpush1.xpose.msra.mxu0 0.0
          %2842 = vmatprep.subr.mxu0 0.0
          %2843 = vmatpush1.xpose.msra.mxu0 0.0
          %2844 = vmatprep.subr.mxu0 0.0
          %2845 = vmatpush1.xpose.msra.mxu0 0.0
          %2846 = vmatprep.subr.mxu0 0.0
          %2847 = vmatpush1.xpose.msra.mxu0 0.0
          %2848 = vmatprep.subr.mxu0 0.0
          %2849 = vmatpush1.xpose.msra.mxu0 0.0
          %2850 = vmatprep.subr.mxu0 0.0
          %2851 = vmatpush1.xpose.msra.mxu0 0.0
          %2852 = vmatprep.subr.mxu0 0.0
          %2853 = vmatpush1.xpose.msra.mxu0 0.0
          %2854 = vmatprep.subr.mxu0 0.0
          %2855 = vmatpush1.xpose.msra.mxu0 0.0
          %2856 = vmatprep.subr.mxu0 0.0
          %2857 = vmatpush1.xpose.msra.mxu0 0.0
          %2858 = vmatprep.subr.mxu0 0.0
          %2859 = vmatpush1.xpose.msra.mxu0 0.0
          %2860 = vmatprep.subr.mxu0 0.0
          %2861 = vmatpush1.xpose.msra.mxu0 0.0
          %2862 = vmatprep.subr.mxu0 0.0
          %2863 = vmatpush1.xpose.msra.mxu0 0.0
          %2864 = vmatprep.subr.mxu0 0.0
          %2865 = vmatpush1.xpose.msra.mxu0 0.0
          %2866 = vmatprep.subr.mxu0 0.0
          %2867 = vmatpush1.xpose.msra.mxu0 0.0
          %2868 = vmatprep.subr.mxu0 0.0
          %2869 = vmatpush1.xpose.msra.mxu0 0.0
          %2870 = vmatprep.subr.mxu0 0.0
          %2871 = vmatpush1.xpose.msra.mxu0 0.0
          %2872 = vmatprep.subr.mxu0 0.0
          %2873 = vmatpush1.xpose.msra.mxu0 0.0
          %2874 = vmatprep.subr.mxu0 0.0
          %2875 = vmatpush1.xpose.msra.mxu0 0.0
          %2876 = vmatprep.subr.mxu0 0.0
          %2877 = vmatpush1.xpose.msra.mxu0 0.0
          %2878 = vmatprep.mubr.f32.mxu0 0.0
          %2879 = vmatmul.mubr.f32.gmra.mrb[0].mxu0 %v2809
          %v2880 = vpop.f32.mrb[0].mxu0
          %v2881 = vadd.f32 0.0, %v2880
          %v2882 = vpop.f32.mrb[0].mxu0
          %2883 = vdwg.mxu0
          %v2884 = vmul.f32 %v2349, 0.5
          %v2885 = vmul.f32 %v2425, 0.5
          %v2886 = vmul.f32 %v2501, 0.5
          %v2887 = vmul.f32 %v2577, 0.5
          %v2888 = vmul.f32 %v2653, 0.5
          %v2889 = vmul.f32 %v2729, 0.5
          %v2890 = vmul.f32 %v2805, 0.5
          %v2891 = vmul.f32 %v2881, 0.5
          %v2893 = vlaneseq
          %v2894 = vshrl.u32 %v2893, 7
          %v2895 = vsub.s32 0, %v2894
          %v2896 = vrot.slane %v716, %v2895
          %v2898 = vadd.f32 %v2884, %v2896
          %v2899 = vadd.f32 %v2885, %v2896
          %v2900 = vadd.f32 %v2886, %v2896
          %v2901 = vadd.f32 %v2887, %v2896
          %v2902 = vadd.f32 %v2888, %v2896
          %v2903 = vadd.f32 %v2889, %v2896
          %v2904 = vadd.f32 %v2890, %v2896
          %v2905 = vadd.f32 %v2891, %v2896
          %vm2906 = vcmask 27648
          %v2907 = vsel %vm2906, %v2898, -inf
          %2908 = vmax.xlane.f32.xlu0 %v2907
          %v2909 = vpop.xlane.xlu0 %2908
          %v2910 = vsel %vm2906, %v2899, -inf
          %2911 = vmax.xlane.f32.xlu0 %v2910
          %v2912 = vpop.xlane.xlu0 %2911
          %v2913 = vsel %vm2906, %v2900, -inf
          %2914 = vmax.xlane.f32.xlu0 %v2913
          %v2915 = vpop.xlane.xlu0 %2914
          %v2916 = vsel %vm2906, %v2901, -inf
          %2917 = vmax.xlane.f32.xlu0 %v2916
          %v2918 = vpop.xlane.xlu0 %2917
          %v2919 = vsel %vm2906, %v2902, -inf
          %2920 = vmax.xlane.f32.xlu0 %v2919
          %v2921 = vpop.xlane.xlu0 %2920
          %v2922 = vsel %vm2906, %v2903, -inf
          %2923 = vmax.xlane.f32.xlu0 %v2922
          %v2924 = vpop.xlane.xlu0 %2923
          %v2925 = vsel %vm2906, %v2904, -inf
          %2926 = vmax.xlane.f32.xlu0 %v2925
          %v2927 = vpop.xlane.xlu0 %2926
          %v2928 = vsel %vm2906, %v2905, -inf
          %2929 = vmax.xlane.f32.xlu0 %v2928
          %v2930 = vpop.xlane.xlu0 %2929
          %v2931 = vsub.f32 %v2898, %v2909
          %v2932 = vsub.f32 %v2899, %v2912
          %v2933 = vsub.f32 %v2900, %v2915
          %v2934 = vsub.f32 %v2901, %v2918
          %v2935 = vsub.f32 %v2902, %v2921
          %v2936 = vsub.f32 %v2903, %v2924
          %v2937 = vsub.f32 %v2904, %v2927
          %v2938 = vsub.f32 %v2905, %v2930
          %v2939 = vmul.f32 %v2931, 1.442695
          %v2940 = vpow.pop %v2939
          %v2941 = vmul.f32 %v2932, 1.442695
          %v2942 = vpow.pop %v2941
          %v2943 = vmul.f32 %v2933, 1.442695
          %v2944 = vpow.pop %v2943
          %v2945 = vmul.f32 %v2934, 1.442695
          %v2946 = vpow.pop %v2945
          %v2947 = vmul.f32 %v2935, 1.442695
          %v2948 = vpow.pop %v2947
          %v2949 = vmul.f32 %v2936, 1.442695
          %v2950 = vpow.pop %v2949
          %v2951 = vmul.f32 %v2937, 1.442695
          %v2952 = vpow.pop %v2951
          %v2953 = vmul.f32 %v2938, 1.442695
          %v2954 = vpow.pop %v2953
          %v2955 = vsel %vm2906, %v2940, 0.0
          %2956 = vadd.xlane.f32.xlu0 %v2955
          %v2957 = vpop.xlane.xlu0 %2956
          %v2958 = vsel %vm2906, %v2942, 0.0
          %2959 = vadd.xlane.f32.xlu0 %v2958
          %v2960 = vpop.xlane.xlu0 %2959
          %v2961 = vsel %vm2906, %v2944, 0.0
          %2962 = vadd.xlane.f32.xlu0 %v2961
          %v2963 = vpop.xlane.xlu0 %2962
          %v2964 = vsel %vm2906, %v2946, 0.0
          %2965 = vadd.xlane.f32.xlu0 %v2964
          %v2966 = vpop.xlane.xlu0 %2965
          %v2967 = vsel %vm2906, %v2948, 0.0
          %2968 = vadd.xlane.f32.xlu0 %v2967
          %v2969 = vpop.xlane.xlu0 %2968
          %v2970 = vsel %vm2906, %v2950, 0.0
          %2971 = vadd.xlane.f32.xlu0 %v2970
          %v2972 = vpop.xlane.xlu0 %2971
          %v2973 = vsel %vm2906, %v2952, 0.0
          %2974 = vadd.xlane.f32.xlu0 %v2973
          %v2975 = vpop.xlane.xlu0 %2974
          %v2976 = vsel %vm2906, %v2954, 0.0
          %2977 = vadd.xlane.f32.xlu0 %v2976
          %v2978 = vpop.xlane.xlu0 %2977
          %v2979 = vrcp.pop %v2957
          %v2980 = vrcp.pop %v2960
          %v2981 = vrcp.pop %v2963
          %v2982 = vrcp.pop %v2966
          %v2983 = vrcp.pop %v2969
          %v2984 = vrcp.pop %v2972
          %v2985 = vrcp.pop %v2975
          %v2986 = vrcp.pop %v2978
          %v2987 = vmul.f32 %v2940, %v2979
          %v2988 = vmul.f32 %v2942, %v2980
          %v2989 = vmul.f32 %v2944, %v2981
          %v2990 = vmul.f32 %v2946, %v2982
          %v2991 = vmul.f32 %v2948, %v2983
          %v2992 = vmul.f32 %v2950, %v2984
          %v2993 = vmul.f32 %v2952, %v2985
          %v2994 = vmul.f32 %v2954, %v2986
          %v2996 = vsel %vm2275, %v2987, 0
          %vm2998 = vcmask 1043456
          %v3000 = vsel %vm2998, %v1906, 0
          %3002 = vmatprep.subr.mxu0 0.0
          %3003 = vmatpush1.msra.mxu0 %v3000
          %3004 = vmatprep.subr.mxu0 0.0
          %3005 = vmatpush1.msra.mxu0 0.0
          %3006 = vmatprep.subr.mxu0 0.0
          %3007 = vmatpush1.msra.mxu0 0.0
          %3008 = vmatprep.subr.mxu0 0.0
          %3009 = vmatpush1.msra.mxu0 0.0
          %3010 = vmatprep.subr.mxu0 0.0
          %3011 = vmatpush1.msra.mxu0 0.0
          %3012 = vmatprep.subr.mxu0 0.0
          %3013 = vmatpush1.msra.mxu0 0.0
          %3014 = vmatprep.subr.mxu0 0.0
          %3015 = vmatpush1.msra.mxu0 0.0
          %3016 = vmatprep.subr.mxu0 0.0
          %3017 = vmatpush1.msra.mxu0 0.0
          %3018 = vmatprep.subr.mxu0 0.0
          %3019 = vmatpush1.msra.mxu0 0.0
          %3020 = vmatprep.subr.mxu0 0.0
          %3021 = vmatpush1.msra.mxu0 0.0
          %3022 = vmatprep.subr.mxu0 0.0
          %3023 = vmatpush1.msra.mxu0 0.0
          %3024 = vmatprep.subr.mxu0 0.0
          %3025 = vmatpush1.msra.mxu0 0.0
          %3026 = vmatprep.subr.mxu0 0.0
          %3027 = vmatpush1.msra.mxu0 0.0
          %3028 = vmatprep.subr.mxu0 0.0
          %3029 = vmatpush1.msra.mxu0 0.0
          %3030 = vmatprep.subr.mxu0 0.0
          %3031 = vmatpush1.msra.mxu0 0.0
          %3032 = vmatprep.subr.mxu0 0.0
          %3033 = vmatpush1.msra.mxu0 0.0
          %3034 = vmatprep.subr.mxu0 0.0
          %3035 = vmatpush1.msra.mxu0 0.0
          %3036 = vmatprep.subr.mxu0 0.0
          %3037 = vmatpush1.msra.mxu0 0.0
          %3038 = vmatprep.subr.mxu0 0.0
          %3039 = vmatpush1.msra.mxu0 0.0
          %3040 = vmatprep.subr.mxu0 0.0
          %3041 = vmatpush1.msra.mxu0 0.0
          %3042 = vmatprep.subr.mxu0 0.0
          %3043 = vmatpush1.msra.mxu0 0.0
          %3044 = vmatprep.subr.mxu0 0.0
          %3045 = vmatpush1.msra.mxu0 0.0
          %3046 = vmatprep.subr.mxu0 0.0
          %3047 = vmatpush1.msra.mxu0 0.0
          %3048 = vmatprep.subr.mxu0 0.0
          %3049 = vmatpush1.msra.mxu0 0.0
          %3050 = vmatprep.subr.mxu0 0.0
          %3051 = vmatpush1.msra.mxu0 0.0
          %3052 = vmatprep.subr.mxu0 0.0
          %3053 = vmatpush1.msra.mxu0 0.0
          %3054 = vmatprep.subr.mxu0 0.0
          %3055 = vmatpush1.msra.mxu0 0.0
          %3056 = vmatprep.subr.mxu0 0.0
          %3057 = vmatpush1.msra.mxu0 0.0
          %3058 = vmatprep.subr.mxu0 0.0
          %3059 = vmatpush1.msra.mxu0 0.0
          %3060 = vmatprep.subr.mxu0 0.0
          %3061 = vmatpush1.msra.mxu0 0.0
          %3062 = vmatprep.subr.mxu0 0.0
          %3063 = vmatpush1.msra.mxu0 0.0
          %3064 = vmatprep.subr.mxu0 0.0
          %3065 = vmatpush1.msra.mxu0 0.0
          %3066 = vmatprep.mubr.f32.mxu0 0.0
          %3067 = vmatmul.mubr.f32.gmra.mrb[0].mxu0 %v2996
          %v3068 = vpop.f32.mrb[0].mxu0
          %v3069 = vadd.f32 0.0, %v3068
          %v3070 = vpop.f32.mrb[0].mxu0
          %3071 = vdwg.mxu0
          %v3073 = vsel %vm2275, %v2988, 0
          %v3076 = vsel %vm2998, %v1958, 0
          %3078 = vmatprep.subr.mxu0 0.0
          %3079 = vmatpush1.msra.mxu0 %v3076
          %3080 = vmatprep.subr.mxu0 0.0
          %3081 = vmatpush1.msra.mxu0 0.0
          %3082 = vmatprep.subr.mxu0 0.0
          %3083 = vmatpush1.msra.mxu0 0.0
          %3084 = vmatprep.subr.mxu0 0.0
          %3085 = vmatpush1.msra.mxu0 0.0
          %3086 = vmatprep.subr.mxu0 0.0
          %3087 = vmatpush1.msra.mxu0 0.0
          %3088 = vmatprep.subr.mxu0 0.0
          %3089 = vmatpush1.msra.mxu0 0.0
          %3090 = vmatprep.subr.mxu0 0.0
          %3091 = vmatpush1.msra.mxu0 0.0
          %3092 = vmatprep.subr.mxu0 0.0
          %3093 = vmatpush1.msra.mxu0 0.0
          %3094 = vmatprep.subr.mxu0 0.0
          %3095 = vmatpush1.msra.mxu0 0.0
          %3096 = vmatprep.subr.mxu0 0.0
          %3097 = vmatpush1.msra.mxu0 0.0
          %3098 = vmatprep.subr.mxu0 0.0
          %3099 = vmatpush1.msra.mxu0 0.0
          %3100 = vmatprep.subr.mxu0 0.0
          %3101 = vmatpush1.msra.mxu0 0.0
          %3102 = vmatprep.subr.mxu0 0.0
          %3103 = vmatpush1.msra.mxu0 0.0
          %3104 = vmatprep.subr.mxu0 0.0
          %3105 = vmatpush1.msra.mxu0 0.0
          %3106 = vmatprep.subr.mxu0 0.0
          %3107 = vmatpush1.msra.mxu0 0.0
          %3108 = vmatprep.subr.mxu0 0.0
          %3109 = vmatpush1.msra.mxu0 0.0
          %3110 = vmatprep.subr.mxu0 0.0
          %3111 = vmatpush1.msra.mxu0 0.0
          %3112 = vmatprep.subr.mxu0 0.0
          %3113 = vmatpush1.msra.mxu0 0.0
          %3114 = vmatprep.subr.mxu0 0.0
          %3115 = vmatpush1.msra.mxu0 0.0
          %3116 = vmatprep.subr.mxu0 0.0
          %3117 = vmatpush1.msra.mxu0 0.0
          %3118 = vmatprep.subr.mxu0 0.0
          %3119 = vmatpush1.msra.mxu0 0.0
          %3120 = vmatprep.subr.mxu0 0.0
          %3121 = vmatpush1.msra.mxu0 0.0
          %3122 = vmatprep.subr.mxu0 0.0
          %3123 = vmatpush1.msra.mxu0 0.0
          %3124 = vmatprep.subr.mxu0 0.0
          %3125 = vmatpush1.msra.mxu0 0.0
          %3126 = vmatprep.subr.mxu0 0.0
          %3127 = vmatpush1.msra.mxu0 0.0
          %3128 = vmatprep.subr.mxu0 0.0
          %3129 = vmatpush1.msra.mxu0 0.0
          %3130 = vmatprep.subr.mxu0 0.0
          %3131 = vmatpush1.msra.mxu0 0.0
          %3132 = vmatprep.subr.mxu0 0.0
          %3133 = vmatpush1.msra.mxu0 0.0
          %3134 = vmatprep.subr.mxu0 0.0
          %3135 = vmatpush1.msra.mxu0 0.0
          %3136 = vmatprep.subr.mxu0 0.0
          %3137 = vmatpush1.msra.mxu0 0.0
          %3138 = vmatprep.subr.mxu0 0.0
          %3139 = vmatpush1.msra.mxu0 0.0
          %3140 = vmatprep.subr.mxu0 0.0
          %3141 = vmatpush1.msra.mxu0 0.0
          %3142 = vmatprep.mubr.f32.mxu0 0.0
          %3143 = vmatmul.mubr.f32.gmra.mrb[0].mxu0 %v3073
          %v3144 = vpop.f32.mrb[0].mxu0
          %v3145 = vadd.f32 0.0, %v3144
          %v3146 = vpop.f32.mrb[0].mxu0
          %3147 = vdwg.mxu0
          %v3149 = vsel %vm2275, %v2989, 0
          %v3152 = vsel %vm2998, %v2010, 0
          %3154 = vmatprep.subr.mxu0 0.0
          %3155 = vmatpush1.msra.mxu0 %v3152
          %3156 = vmatprep.subr.mxu0 0.0
          %3157 = vmatpush1.msra.mxu0 0.0
          %3158 = vmatprep.subr.mxu0 0.0
          %3159 = vmatpush1.msra.mxu0 0.0
          %3160 = vmatprep.subr.mxu0 0.0
          %3161 = vmatpush1.msra.mxu0 0.0
          %3162 = vmatprep.subr.mxu0 0.0
          %3163 = vmatpush1.msra.mxu0 0.0
          %3164 = vmatprep.subr.mxu0 0.0
          %3165 = vmatpush1.msra.mxu0 0.0
          %3166 = vmatprep.subr.mxu0 0.0
          %3167 = vmatpush1.msra.mxu0 0.0
          %3168 = vmatprep.subr.mxu0 0.0
          %3169 = vmatpush1.msra.mxu0 0.0
          %3170 = vmatprep.subr.mxu0 0.0
          %3171 = vmatpush1.msra.mxu0 0.0
          %3172 = vmatprep.subr.mxu0 0.0
          %3173 = vmatpush1.msra.mxu0 0.0
          %3174 = vmatprep.subr.mxu0 0.0
          %3175 = vmatpush1.msra.mxu0 0.0
          %3176 = vmatprep.subr.mxu0 0.0
          %3177 = vmatpush1.msra.mxu0 0.0
          %3178 = vmatprep.subr.mxu0 0.0
          %3179 = vmatpush1.msra.mxu0 0.0
          %3180 = vmatprep.subr.mxu0 0.0
          %3181 = vmatpush1.msra.mxu0 0.0
          %3182 = vmatprep.subr.mxu0 0.0
          %3183 = vmatpush1.msra.mxu0 0.0
          %3184 = vmatprep.subr.mxu0 0.0
          %3185 = vmatpush1.msra.mxu0 0.0
          %3186 = vmatprep.subr.mxu0 0.0
          %3187 = vmatpush1.msra.mxu0 0.0
          %3188 = vmatprep.subr.mxu0 0.0
          %3189 = vmatpush1.msra.mxu0 0.0
          %3190 = vmatprep.subr.mxu0 0.0
          %3191 = vmatpush1.msra.mxu0 0.0
          %3192 = vmatprep.subr.mxu0 0.0
          %3193 = vmatpush1.msra.mxu0 0.0
          %3194 = vmatprep.subr.mxu0 0.0
          %3195 = vmatpush1.msra.mxu0 0.0
          %3196 = vmatprep.subr.mxu0 0.0
          %3197 = vmatpush1.msra.mxu0 0.0
          %3198 = vmatprep.subr.mxu0 0.0
          %3199 = vmatpush1.msra.mxu0 0.0
          %3200 = vmatprep.subr.mxu0 0.0
          %3201 = vmatpush1.msra.mxu0 0.0
          %3202 = vmatprep.subr.mxu0 0.0
          %3203 = vmatpush1.msra.mxu0 0.0
          %3204 = vmatprep.subr.mxu0 0.0
          %3205 = vmatpush1.msra.mxu0 0.0
          %3206 = vmatprep.subr.mxu0 0.0
          %3207 = vmatpush1.msra.mxu0 0.0
          %3208 = vmatprep.subr.mxu0 0.0
          %3209 = vmatpush1.msra.mxu0 0.0
          %3210 = vmatprep.subr.mxu0 0.0
          %3211 = vmatpush1.msra.mxu0 0.0
          %3212 = vmatprep.subr.mxu0 0.0
          %3213 = vmatpush1.msra.mxu0 0.0
          %3214 = vmatprep.subr.mxu0 0.0
          %3215 = vmatpush1.msra.mxu0 0.0
          %3216 = vmatprep.subr.mxu0 0.0
          %3217 = vmatpush1.msra.mxu0 0.0
          %3218 = vmatprep.mubr.f32.mxu0 0.0
          %3219 = vmatmul.mubr.f32.gmra.mrb[0].mxu0 %v3149
          %v3220 = vpop.f32.mrb[0].mxu0
          %v3221 = vadd.f32 0.0, %v3220
          %v3222 = vpop.f32.mrb[0].mxu0
          %3223 = vdwg.mxu0
          %v3225 = vsel %vm2275, %v2990, 0
          %v3228 = vsel %vm2998, %v2062, 0
          %3230 = vmatprep.subr.mxu0 0.0
          %3231 = vmatpush1.msra.mxu0 %v3228
          %3232 = vmatprep.subr.mxu0 0.0
          %3233 = vmatpush1.msra.mxu0 0.0
          %3234 = vmatprep.subr.mxu0 0.0
          %3235 = vmatpush1.msra.mxu0 0.0
          %3236 = vmatprep.subr.mxu0 0.0
          %3237 = vmatpush1.msra.mxu0 0.0
          %3238 = vmatprep.subr.mxu0 0.0
          %3239 = vmatpush1.msra.mxu0 0.0
          %3240 = vmatprep.subr.mxu0 0.0
          %3241 = vmatpush1.msra.mxu0 0.0
          %3242 = vmatprep.subr.mxu0 0.0
          %3243 = vmatpush1.msra.mxu0 0.0
          %3244 = vmatprep.subr.mxu0 0.0
          %3245 = vmatpush1.msra.mxu0 0.0
          %3246 = vmatprep.subr.mxu0 0.0
          %3247 = vmatpush1.msra.mxu0 0.0
          %3248 = vmatprep.subr.mxu0 0.0
          %3249 = vmatpush1.msra.mxu0 0.0
          %3250 = vmatprep.subr.mxu0 0.0
          %3251 = vmatpush1.msra.mxu0 0.0
          %3252 = vmatprep.subr.mxu0 0.0
          %3253 = vmatpush1.msra.mxu0 0.0
          %3254 = vmatprep.subr.mxu0 0.0
          %3255 = vmatpush1.msra.mxu0 0.0
          %3256 = vmatprep.subr.mxu0 0.0
          %3257 = vmatpush1.msra.mxu0 0.0
          %3258 = vmatprep.subr.mxu0 0.0
          %3259 = vmatpush1.msra.mxu0 0.0
          %3260 = vmatprep.subr.mxu0 0.0
          %3261 = vmatpush1.msra.mxu0 0.0
          %3262 = vmatprep.subr.mxu0 0.0
          %3263 = vmatpush1.msra.mxu0 0.0
          %3264 = vmatprep.subr.mxu0 0.0
          %3265 = vmatpush1.msra.mxu0 0.0
          %3266 = vmatprep.subr.mxu0 0.0
          %3267 = vmatpush1.msra.mxu0 0.0
          %3268 = vmatprep.subr.mxu0 0.0
          %3269 = vmatpush1.msra.mxu0 0.0
          %3270 = vmatprep.subr.mxu0 0.0
          %3271 = vmatpush1.msra.mxu0 0.0
          %3272 = vmatprep.subr.mxu0 0.0
          %3273 = vmatpush1.msra.mxu0 0.0
          %3274 = vmatprep.subr.mxu0 0.0
          %3275 = vmatpush1.msra.mxu0 0.0
          %3276 = vmatprep.subr.mxu0 0.0
          %3277 = vmatpush1.msra.mxu0 0.0
          %3278 = vmatprep.subr.mxu0 0.0
          %3279 = vmatpush1.msra.mxu0 0.0
          %3280 = vmatprep.subr.mxu0 0.0
          %3281 = vmatpush1.msra.mxu0 0.0
          %3282 = vmatprep.subr.mxu0 0.0
          %3283 = vmatpush1.msra.mxu0 0.0
          %3284 = vmatprep.subr.mxu0 0.0
          %3285 = vmatpush1.msra.mxu0 0.0
          %3286 = vmatprep.subr.mxu0 0.0
          %3287 = vmatpush1.msra.mxu0 0.0
          %3288 = vmatprep.subr.mxu0 0.0
          %3289 = vmatpush1.msra.mxu0 0.0
          %3290 = vmatprep.subr.mxu0 0.0
          %3291 = vmatpush1.msra.mxu0 0.0
          %3292 = vmatprep.subr.mxu0 0.0
          %3293 = vmatpush1.msra.mxu0 0.0
          %3294 = vmatprep.mubr.f32.mxu0 0.0
          %3295 = vmatmul.mubr.f32.gmra.mrb[0].mxu0 %v3225
          %v3296 = vpop.f32.mrb[0].mxu0
          %v3297 = vadd.f32 0.0, %v3296
          %v3298 = vpop.f32.mrb[0].mxu0
          %3299 = vdwg.mxu0
          %v3301 = vsel %vm2275, %v2991, 0
          %v3304 = vsel %vm2998, %v2114, 0
          %3306 = vmatprep.subr.mxu0 0.0
          %3307 = vmatpush1.msra.mxu0 %v3304
          %3308 = vmatprep.subr.mxu0 0.0
          %3309 = vmatpush1.msra.mxu0 0.0
          %3310 = vmatprep.subr.mxu0 0.0
          %3311 = vmatpush1.msra.mxu0 0.0
          %3312 = vmatprep.subr.mxu0 0.0
          %3313 = vmatpush1.msra.mxu0 0.0
          %3314 = vmatprep.subr.mxu0 0.0
          %3315 = vmatpush1.msra.mxu0 0.0
          %3316 = vmatprep.subr.mxu0 0.0
          %3317 = vmatpush1.msra.mxu0 0.0
          %3318 = vmatprep.subr.mxu0 0.0
          %3319 = vmatpush1.msra.mxu0 0.0
          %3320 = vmatprep.subr.mxu0 0.0
          %3321 = vmatpush1.msra.mxu0 0.0
          %3322 = vmatprep.subr.mxu0 0.0
          %3323 = vmatpush1.msra.mxu0 0.0
          %3324 = vmatprep.subr.mxu0 0.0
          %3325 = vmatpush1.msra.mxu0 0.0
          %3326 = vmatprep.subr.mxu0 0.0
          %3327 = vmatpush1.msra.mxu0 0.0
          %3328 = vmatprep.subr.mxu0 0.0
          %3329 = vmatpush1.msra.mxu0 0.0
          %3330 = vmatprep.subr.mxu0 0.0
          %3331 = vmatpush1.msra.mxu0 0.0
          %3332 = vmatprep.subr.mxu0 0.0
          %3333 = vmatpush1.msra.mxu0 0.0
          %3334 = vmatprep.subr.mxu0 0.0
          %3335 = vmatpush1.msra.mxu0 0.0
          %3336 = vmatprep.subr.mxu0 0.0
          %3337 = vmatpush1.msra.mxu0 0.0
          %3338 = vmatprep.subr.mxu0 0.0
          %3339 = vmatpush1.msra.mxu0 0.0
          %3340 = vmatprep.subr.mxu0 0.0
          %3341 = vmatpush1.msra.mxu0 0.0
          %3342 = vmatprep.subr.mxu0 0.0
          %3343 = vmatpush1.msra.mxu0 0.0
          %3344 = vmatprep.subr.mxu0 0.0
          %3345 = vmatpush1.msra.mxu0 0.0
          %3346 = vmatprep.subr.mxu0 0.0
          %3347 = vmatpush1.msra.mxu0 0.0
          %3348 = vmatprep.subr.mxu0 0.0
          %3349 = vmatpush1.msra.mxu0 0.0
          %3350 = vmatprep.subr.mxu0 0.0
          %3351 = vmatpush1.msra.mxu0 0.0
          %3352 = vmatprep.subr.mxu0 0.0
          %3353 = vmatpush1.msra.mxu0 0.0
          %3354 = vmatprep.subr.mxu0 0.0
          %3355 = vmatpush1.msra.mxu0 0.0
          %3356 = vmatprep.subr.mxu0 0.0
          %3357 = vmatpush1.msra.mxu0 0.0
          %3358 = vmatprep.subr.mxu0 0.0
          %3359 = vmatpush1.msra.mxu0 0.0
          %3360 = vmatprep.subr.mxu0 0.0
          %3361 = vmatpush1.msra.mxu0 0.0
          %3362 = vmatprep.subr.mxu0 0.0
          %3363 = vmatpush1.msra.mxu0 0.0
          %3364 = vmatprep.subr.mxu0 0.0
          %3365 = vmatpush1.msra.mxu0 0.0
          %3366 = vmatprep.subr.mxu0 0.0
          %3367 = vmatpush1.msra.mxu0 0.0
          %3368 = vmatprep.subr.mxu0 0.0
          %3369 = vmatpush1.msra.mxu0 0.0
          %3370 = vmatprep.mubr.f32.mxu0 0.0
          %3371 = vmatmul.mubr.f32.gmra.mrb[0].mxu0 %v3301
          %v3372 = vpop.f32.mrb[0].mxu0
          %v3373 = vadd.f32 0.0, %v3372
          %v3374 = vpop.f32.mrb[0].mxu0
          %3375 = vdwg.mxu0
          %v3377 = vsel %vm2275, %v2992, 0
          %v3380 = vsel %vm2998, %v2166, 0
          %3382 = vmatprep.subr.mxu0 0.0
          %3383 = vmatpush1.msra.mxu0 %v3380
          %3384 = vmatprep.subr.mxu0 0.0
          %3385 = vmatpush1.msra.mxu0 0.0
          %3386 = vmatprep.subr.mxu0 0.0
          %3387 = vmatpush1.msra.mxu0 0.0
          %3388 = vmatprep.subr.mxu0 0.0
          %3389 = vmatpush1.msra.mxu0 0.0
          %3390 = vmatprep.subr.mxu0 0.0
          %3391 = vmatpush1.msra.mxu0 0.0
          %3392 = vmatprep.subr.mxu0 0.0
          %3393 = vmatpush1.msra.mxu0 0.0
          %3394 = vmatprep.subr.mxu0 0.0
          %3395 = vmatpush1.msra.mxu0 0.0
          %3396 = vmatprep.subr.mxu0 0.0
          %3397 = vmatpush1.msra.mxu0 0.0
          %3398 = vmatprep.subr.mxu0 0.0
          %3399 = vmatpush1.msra.mxu0 0.0
          %3400 = vmatprep.subr.mxu0 0.0
          %3401 = vmatpush1.msra.mxu0 0.0
          %3402 = vmatprep.subr.mxu0 0.0
          %3403 = vmatpush1.msra.mxu0 0.0
          %3404 = vmatprep.subr.mxu0 0.0
          %3405 = vmatpush1.msra.mxu0 0.0
          %3406 = vmatprep.subr.mxu0 0.0
          %3407 = vmatpush1.msra.mxu0 0.0
          %3408 = vmatprep.subr.mxu0 0.0
          %3409 = vmatpush1.msra.mxu0 0.0
          %3410 = vmatprep.subr.mxu0 0.0
          %3411 = vmatpush1.msra.mxu0 0.0
          %3412 = vmatprep.subr.mxu0 0.0
          %3413 = vmatpush1.msra.mxu0 0.0
          %3414 = vmatprep.subr.mxu0 0.0
          %3415 = vmatpush1.msra.mxu0 0.0
          %3416 = vmatprep.subr.mxu0 0.0
          %3417 = vmatpush1.msra.mxu0 0.0
          %3418 = vmatprep.subr.mxu0 0.0
          %3419 = vmatpush1.msra.mxu0 0.0
          %3420 = vmatprep.subr.mxu0 0.0
          %3421 = vmatpush1.msra.mxu0 0.0
          %3422 = vmatprep.subr.mxu0 0.0
          %3423 = vmatpush1.msra.mxu0 0.0
          %3424 = vmatprep.subr.mxu0 0.0
          %3425 = vmatpush1.msra.mxu0 0.0
          %3426 = vmatprep.subr.mxu0 0.0
          %3427 = vmatpush1.msra.mxu0 0.0
          %3428 = vmatprep.subr.mxu0 0.0
          %3429 = vmatpush1.msra.mxu0 0.0
          %3430 = vmatprep.subr.mxu0 0.0
          %3431 = vmatpush1.msra.mxu0 0.0
          %3432 = vmatprep.subr.mxu0 0.0
          %3433 = vmatpush1.msra.mxu0 0.0
          %3434 = vmatprep.subr.mxu0 0.0
          %3435 = vmatpush1.msra.mxu0 0.0
          %3436 = vmatprep.subr.mxu0 0.0
          %3437 = vmatpush1.msra.mxu0 0.0
          %3438 = vmatprep.subr.mxu0 0.0
          %3439 = vmatpush1.msra.mxu0 0.0
          %3440 = vmatprep.subr.mxu0 0.0
          %3441 = vmatpush1.msra.mxu0 0.0
          %3442 = vmatprep.subr.mxu0 0.0
          %3443 = vmatpush1.msra.mxu0 0.0
          %3444 = vmatprep.subr.mxu0 0.0
          %3445 = vmatpush1.msra.mxu0 0.0
          %3446 = vmatprep.mubr.f32.mxu0 0.0
          %3447 = vmatmul.mubr.f32.gmra.mrb[0].mxu0 %v3377
          %v3448 = vpop.f32.mrb[0].mxu0
          %v3449 = vadd.f32 0.0, %v3448
          %v3450 = vpop.f32.mrb[0].mxu0
          %3451 = vdwg.mxu0
          %v3453 = vsel %vm2275, %v2993, 0
          %v3456 = vsel %vm2998, %v2218, 0
          %3458 = vmatprep.subr.mxu0 0.0
          %3459 = vmatpush1.msra.mxu0 %v3456
          %3460 = vmatprep.subr.mxu0 0.0
          %3461 = vmatpush1.msra.mxu0 0.0
          %3462 = vmatprep.subr.mxu0 0.0
          %3463 = vmatpush1.msra.mxu0 0.0
          %3464 = vmatprep.subr.mxu0 0.0
          %3465 = vmatpush1.msra.mxu0 0.0
          %3466 = vmatprep.subr.mxu0 0.0
          %3467 = vmatpush1.msra.mxu0 0.0
          %3468 = vmatprep.subr.mxu0 0.0
          %3469 = vmatpush1.msra.mxu0 0.0
          %3470 = vmatprep.subr.mxu0 0.0
          %3471 = vmatpush1.msra.mxu0 0.0
          %3472 = vmatprep.subr.mxu0 0.0
          %3473 = vmatpush1.msra.mxu0 0.0
          %3474 = vmatprep.subr.mxu0 0.0
          %3475 = vmatpush1.msra.mxu0 0.0
          %3476 = vmatprep.subr.mxu0 0.0
          %3477 = vmatpush1.msra.mxu0 0.0
          %3478 = vmatprep.subr.mxu0 0.0
          %3479 = vmatpush1.msra.mxu0 0.0
          %3480 = vmatprep.subr.mxu0 0.0
          %3481 = vmatpush1.msra.mxu0 0.0
          %3482 = vmatprep.subr.mxu0 0.0
          %3483 = vmatpush1.msra.mxu0 0.0
          %3484 = vmatprep.subr.mxu0 0.0
          %3485 = vmatpush1.msra.mxu0 0.0
          %3486 = vmatprep.subr.mxu0 0.0
          %3487 = vmatpush1.msra.mxu0 0.0
          %3488 = vmatprep.subr.mxu0 0.0
          %3489 = vmatpush1.msra.mxu0 0.0
          %3490 = vmatprep.subr.mxu0 0.0
          %3491 = vmatpush1.msra.mxu0 0.0
          %3492 = vmatprep.subr.mxu0 0.0
          %3493 = vmatpush1.msra.mxu0 0.0
          %3494 = vmatprep.subr.mxu0 0.0
          %3495 = vmatpush1.msra.mxu0 0.0
          %3496 = vmatprep.subr.mxu0 0.0
          %3497 = vmatpush1.msra.mxu0 0.0
          %3498 = vmatprep.subr.mxu0 0.0
          %3499 = vmatpush1.msra.mxu0 0.0
          %3500 = vmatprep.subr.mxu0 0.0
          %3501 = vmatpush1.msra.mxu0 0.0
          %3502 = vmatprep.subr.mxu0 0.0
          %3503 = vmatpush1.msra.mxu0 0.0
          %3504 = vmatprep.subr.mxu0 0.0
          %3505 = vmatpush1.msra.mxu0 0.0
          %3506 = vmatprep.subr.mxu0 0.0
          %3507 = vmatpush1.msra.mxu0 0.0
          %3508 = vmatprep.subr.mxu0 0.0
          %3509 = vmatpush1.msra.mxu0 0.0
          %3510 = vmatprep.subr.mxu0 0.0
          %3511 = vmatpush1.msra.mxu0 0.0
          %3512 = vmatprep.subr.mxu0 0.0
          %3513 = vmatpush1.msra.mxu0 0.0
          %3514 = vmatprep.subr.mxu0 0.0
          %3515 = vmatpush1.msra.mxu0 0.0
          %3516 = vmatprep.subr.mxu0 0.0
          %3517 = vmatpush1.msra.mxu0 0.0
          %3518 = vmatprep.subr.mxu0 0.0
          %3519 = vmatpush1.msra.mxu0 0.0
          %3520 = vmatprep.subr.mxu0 0.0
          %3521 = vmatpush1.msra.mxu0 0.0
          %3522 = vmatprep.mubr.f32.mxu0 0.0
          %3523 = vmatmul.mubr.f32.gmra.mrb[0].mxu0 %v3453
          %v3524 = vpop.f32.mrb[0].mxu0
          %v3525 = vadd.f32 0.0, %v3524
          %v3526 = vpop.f32.mrb[0].mxu0
          %3527 = vdwg.mxu0
          %v3529 = vsel %vm2275, %v2994, 0
          %v3532 = vsel %vm2998, %v2270, 0
          %3534 = vmatprep.subr.mxu0 0.0
          %3535 = vmatpush1.msra.mxu0 %v3532
          %3536 = vmatprep.subr.mxu0 0.0
          %3537 = vmatpush1.msra.mxu0 0.0
          %3538 = vmatprep.subr.mxu0 0.0
          %3539 = vmatpush1.msra.mxu0 0.0
          %3540 = vmatprep.subr.mxu0 0.0
          %3541 = vmatpush1.msra.mxu0 0.0
          %3542 = vmatprep.subr.mxu0 0.0
          %3543 = vmatpush1.msra.mxu0 0.0
          %3544 = vmatprep.subr.mxu0 0.0
          %3545 = vmatpush1.msra.mxu0 0.0
          %3546 = vmatprep.subr.mxu0 0.0
          %3547 = vmatpush1.msra.mxu0 0.0
          %3548 = vmatprep.subr.mxu0 0.0
          %3549 = vmatpush1.msra.mxu0 0.0
          %3550 = vmatprep.subr.mxu0 0.0
          %3551 = vmatpush1.msra.mxu0 0.0
          %3552 = vmatprep.subr.mxu0 0.0
          %3553 = vmatpush1.msra.mxu0 0.0
          %3554 = vmatprep.subr.mxu0 0.0
          %3555 = vmatpush1.msra.mxu0 0.0
          %3556 = vmatprep.subr.mxu0 0.0
          %3557 = vmatpush1.msra.mxu0 0.0
          %3558 = vmatprep.subr.mxu0 0.0
          %3559 = vmatpush1.msra.mxu0 0.0
          %3560 = vmatprep.subr.mxu0 0.0
          %3561 = vmatpush1.msra.mxu0 0.0
          %3562 = vmatprep.subr.mxu0 0.0
          %3563 = vmatpush1.msra.mxu0 0.0
          %3564 = vmatprep.subr.mxu0 0.0
          %3565 = vmatpush1.msra.mxu0 0.0
          %3566 = vmatprep.subr.mxu0 0.0
          %3567 = vmatpush1.msra.mxu0 0.0
          %3568 = vmatprep.subr.mxu0 0.0
          %3569 = vmatpush1.msra.mxu0 0.0
          %3570 = vmatprep.subr.mxu0 0.0
          %3571 = vmatpush1.msra.mxu0 0.0
          %3572 = vmatprep.subr.mxu0 0.0
          %3573 = vmatpush1.msra.mxu0 0.0
          %3574 = vmatprep.subr.mxu0 0.0
          %3575 = vmatpush1.msra.mxu0 0.0
          %3576 = vmatprep.subr.mxu0 0.0
          %3577 = vmatpush1.msra.mxu0 0.0
          %3578 = vmatprep.subr.mxu0 0.0
          %3579 = vmatpush1.msra.mxu0 0.0
          %3580 = vmatprep.subr.mxu0 0.0
          %3581 = vmatpush1.msra.mxu0 0.0
          %3582 = vmatprep.subr.mxu0 0.0
          %3583 = vmatpush1.msra.mxu0 0.0
          %3584 = vmatprep.subr.mxu0 0.0
          %3585 = vmatpush1.msra.mxu0 0.0
          %3586 = vmatprep.subr.mxu0 0.0
          %3587 = vmatpush1.msra.mxu0 0.0
          %3588 = vmatprep.subr.mxu0 0.0
          %3589 = vmatpush1.msra.mxu0 0.0
          %3590 = vmatprep.subr.mxu0 0.0
          %3591 = vmatpush1.msra.mxu0 0.0
          %3592 = vmatprep.subr.mxu0 0.0
          %3593 = vmatpush1.msra.mxu0 0.0
          %3594 = vmatprep.subr.mxu0 0.0
          %3595 = vmatpush1.msra.mxu0 0.0
          %3596 = vmatprep.subr.mxu0 0.0
          %3597 = vmatpush1.msra.mxu0 0.0
          %3598 = vmatprep.mubr.f32.mxu0 0.0
          %3599 = vmatmul.mubr.f32.gmra.mrb[0].mxu0 %v3529
          %v3600 = vpop.f32.mrb[0].mxu0
          %v3601 = vadd.f32 0.0, %v3600
          %v3602 = vpop.f32.mrb[0].mxu0
          %3603 = vdwg.mxu0
          %s3604 = scalar_lea.vmem %s16, %s766
          %v3605 = vld [vmem:[%s3604] sm:$0x3f]
          %v3606 = vpack.c.bf16 %v3069, %v3069
          %v3607 = vpack.c.bf16 %v3145, %v3145
          %v3608 = vpack.c.bf16 %v3221, %v3221
          %v3609 = vpack.c.bf16 %v3297, %v3297
          %v3610 = vpack.c.bf16 %v3373, %v3373
          %v3611 = vpack.c.bf16 %v3449, %v3449
          %v3612 = vpack.c.bf16 %v3525, %v3525
          %v3613 = vpack.c.bf16 %v3601, %v3601
          %s3614 = smul.addr %s766, 2
          %s3615 = scalar_lea.vmem %s12, %s3614
          %v3616 = vld [vmem:[%s3615] sm:$0x3]
          %v3617 = vld [vmem:[%s3615 + $0x2] sm:$0x3]
          %v3618 = vld [vmem:[%s3615 + $0x4] sm:$0x3]
          %v3619 = vld [vmem:[%s3615 + $0x6] sm:$0x3]
          %v3620 = vld [vmem:[%s3615 + $0x8] sm:$0x3]
          %v3621 = vld [vmem:[%s3615 + $0xa] sm:$0x3]
          %v3622 = vld [vmem:[%s3615 + $0xc] sm:$0x3]
          %v3623 = vld [vmem:[%s3615 + $0xe] sm:$0x3]
          %v3625 = vsel %vm2275, %v3606, 0
          %vm3627 = vcmask 1041408
          %v3629 = vsel %vm3627, %v3616, 0
          %3631 = vmatprep.subr.bf16.mxu0 0
          %3632 = vmatpush1.bf16.msra.mxu0 %v3629
          %3633 = vmatprep.subr.bf16.mxu0 0
          %3634 = vmatpush1.bf16.msra.mxu0 0
          %3635 = vmatprep.subr.bf16.mxu0 0
          %3636 = vmatpush1.bf16.msra.mxu0 0
          %3637 = vmatprep.subr.bf16.mxu0 0
          %3638 = vmatpush1.bf16.msra.mxu0 0
          %3639 = vmatprep.subr.bf16.mxu0 0
          %3640 = vmatpush1.bf16.msra.mxu0 0
          %3641 = vmatprep.subr.bf16.mxu0 0
          %3642 = vmatpush1.bf16.msra.mxu0 0
          %3643 = vmatprep.subr.bf16.mxu0 0
          %3644 = vmatpush1.bf16.msra.mxu0 0
          %3645 = vmatprep.subr.bf16.mxu0 0
          %3646 = vmatpush1.bf16.msra.mxu0 0
          %3647 = vmatprep.subr.bf16.mxu0 0
          %3648 = vmatpush1.bf16.msra.mxu0 0
          %3649 = vmatprep.subr.bf16.mxu0 0
          %3650 = vmatpush1.bf16.msra.mxu0 0
          %3651 = vmatprep.subr.bf16.mxu0 0
          %3652 = vmatpush1.bf16.msra.mxu0 0
          %3653 = vmatprep.subr.bf16.mxu0 0
          %3654 = vmatpush1.bf16.msra.mxu0 0
          %3655 = vmatprep.subr.bf16.mxu0 0
          %3656 = vmatpush1.bf16.msra.mxu0 0
          %3657 = vmatprep.subr.bf16.mxu0 0
          %3658 = vmatpush1.bf16.msra.mxu0 0
          %3659 = vmatprep.subr.bf16.mxu0 0
          %3660 = vmatpush1.bf16.msra.mxu0 0
          %3661 = vmatprep.subr.bf16.mxu0 0
          %3662 = vmatpush1.bf16.msra.mxu0 0
          %3663 = vmatprep.mubr.bf16.mxu0 0
          %3664 = vmatmul.mubr.bf16.gmra.mrb[0].mxu0 %v3625
          %v3665 = vpop.f32.mrb[0].mxu0
          %v3666 = vadd.f32 0.0, %v3665
          %v3667 = vpop.f32.mrb[0].mxu0
          %v3668 = vpop.f32.mrb[0].mxu0
          %v3669 = vpop.f32.mrb[0].mxu0
          %3670 = vdwg.mxu0
          %v3672 = vsel %vm2275, %v3607, 0
          %v3675 = vsel %vm3627, %v3617, 0
          %3677 = vmatprep.subr.bf16.mxu0 0
          %3678 = vmatpush1.bf16.msra.mxu0 %v3675
          %3679 = vmatprep.subr.bf16.mxu0 0
          %3680 = vmatpush1.bf16.msra.mxu0 0
          %3681 = vmatprep.subr.bf16.mxu0 0
          %3682 = vmatpush1.bf16.msra.mxu0 0
          %3683 = vmatprep.subr.bf16.mxu0 0
          %3684 = vmatpush1.bf16.msra.mxu0 0
          %3685 = vmatprep.subr.bf16.mxu0 0
          %3686 = vmatpush1.bf16.msra.mxu0 0
          %3687 = vmatprep.subr.bf16.mxu0 0
          %3688 = vmatpush1.bf16.msra.mxu0 0
          %3689 = vmatprep.subr.bf16.mxu0 0
          %3690 = vmatpush1.bf16.msra.mxu0 0
          %3691 = vmatprep.subr.bf16.mxu0 0
          %3692 = vmatpush1.bf16.msra.mxu0 0
          %3693 = vmatprep.subr.bf16.mxu0 0
          %3694 = vmatpush1.bf16.msra.mxu0 0
          %3695 = vmatprep.subr.bf16.mxu0 0
          %3696 = vmatpush1.bf16.msra.mxu0 0
          %3697 = vmatprep.subr.bf16.mxu0 0
          %3698 = vmatpush1.bf16.msra.mxu0 0
          %3699 = vmatprep.subr.bf16.mxu0 0
          %3700 = vmatpush1.bf16.msra.mxu0 0
          %3701 = vmatprep.subr.bf16.mxu0 0
          %3702 = vmatpush1.bf16.msra.mxu0 0
          %3703 = vmatprep.subr.bf16.mxu0 0
          %3704 = vmatpush1.bf16.msra.mxu0 0
          %3705 = vmatprep.subr.bf16.mxu0 0
          %3706 = vmatpush1.bf16.msra.mxu0 0
          %3707 = vmatprep.subr.bf16.mxu0 0
          %3708 = vmatpush1.bf16.msra.mxu0 0
          %3709 = vmatprep.mubr.bf16.mxu0 0
          %3710 = vmatmul.mubr.bf16.gmra.mrb[0].mxu0 %v3672
          %v3711 = vpop.f32.mrb[0].mxu0
          %v3712 = vadd.f32 0.0, %v3711
          %v3713 = vpop.f32.mrb[0].mxu0
          %v3714 = vpop.f32.mrb[0].mxu0
          %v3715 = vpop.f32.mrb[0].mxu0
          %3716 = vdwg.mxu0
          %v3718 = vsel %vm2275, %v3608, 0
          %v3721 = vsel %vm3627, %v3618, 0
          %3723 = vmatprep.subr.bf16.mxu0 0
          %3724 = vmatpush1.bf16.msra.mxu0 %v3721
          %3725 = vmatprep.subr.bf16.mxu0 0
          %3726 = vmatpush1.bf16.msra.mxu0 0
          %3727 = vmatprep.subr.bf16.mxu0 0
          %3728 = vmatpush1.bf16.msra.mxu0 0
          %3729 = vmatprep.subr.bf16.mxu0 0
          %3730 = vmatpush1.bf16.msra.mxu0 0
          %3731 = vmatprep.subr.bf16.mxu0 0
          %3732 = vmatpush1.bf16.msra.mxu0 0
          %3733 = vmatprep.subr.bf16.mxu0 0
          %3734 = vmatpush1.bf16.msra.mxu0 0
          %3735 = vmatprep.subr.bf16.mxu0 0
          %3736 = vmatpush1.bf16.msra.mxu0 0
          %3737 = vmatprep.subr.bf16.mxu0 0
          %3738 = vmatpush1.bf16.msra.mxu0 0
          %3739 = vmatprep.subr.bf16.mxu0 0
          %3740 = vmatpush1.bf16.msra.mxu0 0
          %3741 = vmatprep.subr.bf16.mxu0 0
          %3742 = vmatpush1.bf16.msra.mxu0 0
          %3743 = vmatprep.subr.bf16.mxu0 0
          %3744 = vmatpush1.bf16.msra.mxu0 0
          %3745 = vmatprep.subr.bf16.mxu0 0
          %3746 = vmatpush1.bf16.msra.mxu0 0
          %3747 = vmatprep.subr.bf16.mxu0 0
          %3748 = vmatpush1.bf16.msra.mxu0 0
          %3749 = vmatprep.subr.bf16.mxu0 0
          %3750 = vmatpush1.bf16.msra.mxu0 0
          %3751 = vmatprep.subr.bf16.mxu0 0
          %3752 = vmatpush1.bf16.msra.mxu0 0
          %3753 = vmatprep.subr.bf16.mxu0 0
          %3754 = vmatpush1.bf16.msra.mxu0 0
          %3755 = vmatprep.mubr.bf16.mxu0 0
          %3756 = vmatmul.mubr.bf16.gmra.mrb[0].mxu0 %v3718
          %v3757 = vpop.f32.mrb[0].mxu0
          %v3758 = vadd.f32 0.0, %v3757
          %v3759 = vpop.f32.mrb[0].mxu0
          %v3760 = vpop.f32.mrb[0].mxu0
          %v3761 = vpop.f32.mrb[0].mxu0
          %3762 = vdwg.mxu0
          %v3764 = vsel %vm2275, %v3609, 0
          %v3767 = vsel %vm3627, %v3619, 0
          %3769 = vmatprep.subr.bf16.mxu0 0
          %3770 = vmatpush1.bf16.msra.mxu0 %v3767
          %3771 = vmatprep.subr.bf16.mxu0 0
          %3772 = vmatpush1.bf16.msra.mxu0 0
          %3773 = vmatprep.subr.bf16.mxu0 0
          %3774 = vmatpush1.bf16.msra.mxu0 0
          %3775 = vmatprep.subr.bf16.mxu0 0
          %3776 = vmatpush1.bf16.msra.mxu0 0
          %3777 = vmatprep.subr.bf16.mxu0 0
          %3778 = vmatpush1.bf16.msra.mxu0 0
          %3779 = vmatprep.subr.bf16.mxu0 0
          %3780 = vmatpush1.bf16.msra.mxu0 0
          %3781 = vmatprep.subr.bf16.mxu0 0
          %3782 = vmatpush1.bf16.msra.mxu0 0
          %3783 = vmatprep.subr.bf16.mxu0 0
          %3784 = vmatpush1.bf16.msra.mxu0 0
          %3785 = vmatprep.subr.bf16.mxu0 0
          %3786 = vmatpush1.bf16.msra.mxu0 0
          %3787 = vmatprep.subr.bf16.mxu0 0
          %3788 = vmatpush1.bf16.msra.mxu0 0
          %3789 = vmatprep.subr.bf16.mxu0 0
          %3790 = vmatpush1.bf16.msra.mxu0 0
          %3791 = vmatprep.subr.bf16.mxu0 0
          %3792 = vmatpush1.bf16.msra.mxu0 0
          %3793 = vmatprep.subr.bf16.mxu0 0
          %3794 = vmatpush1.bf16.msra.mxu0 0
          %3795 = vmatprep.subr.bf16.mxu0 0
          %3796 = vmatpush1.bf16.msra.mxu0 0
          %3797 = vmatprep.subr.bf16.mxu0 0
          %3798 = vmatpush1.bf16.msra.mxu0 0
          %3799 = vmatprep.subr.bf16.mxu0 0
          %3800 = vmatpush1.bf16.msra.mxu0 0
          %3801 = vmatprep.mubr.bf16.mxu0 0
          %3802 = vmatmul.mubr.bf16.gmra.mrb[0].mxu0 %v3764
          %v3803 = vpop.f32.mrb[0].mxu0
          %v3804 = vadd.f32 0.0, %v3803
          %v3805 = vpop.f32.mrb[0].mxu0
          %v3806 = vpop.f32.mrb[0].mxu0
          %v3807 = vpop.f32.mrb[0].mxu0
          %3808 = vdwg.mxu0
          %v3810 = vsel %vm2275, %v3610, 0
          %v3813 = vsel %vm3627, %v3620, 0
          %3815 = vmatprep.subr.bf16.mxu0 0
          %3816 = vmatpush1.bf16.msra.mxu0 %v3813
          %3817 = vmatprep.subr.bf16.mxu0 0
          %3818 = vmatpush1.bf16.msra.mxu0 0
          %3819 = vmatprep.subr.bf16.mxu0 0
          %3820 = vmatpush1.bf16.msra.mxu0 0
          %3821 = vmatprep.subr.bf16.mxu0 0
          %3822 = vmatpush1.bf16.msra.mxu0 0
          %3823 = vmatprep.subr.bf16.mxu0 0
          %3824 = vmatpush1.bf16.msra.mxu0 0
          %3825 = vmatprep.subr.bf16.mxu0 0
          %3826 = vmatpush1.bf16.msra.mxu0 0
          %3827 = vmatprep.subr.bf16.mxu0 0
          %3828 = vmatpush1.bf16.msra.mxu0 0
          %3829 = vmatprep.subr.bf16.mxu0 0
          %3830 = vmatpush1.bf16.msra.mxu0 0
          %3831 = vmatprep.subr.bf16.mxu0 0
          %3832 = vmatpush1.bf16.msra.mxu0 0
          %3833 = vmatprep.subr.bf16.mxu0 0
          %3834 = vmatpush1.bf16.msra.mxu0 0
          %3835 = vmatprep.subr.bf16.mxu0 0
          %3836 = vmatpush1.bf16.msra.mxu0 0
          %3837 = vmatprep.subr.bf16.mxu0 0
          %3838 = vmatpush1.bf16.msra.mxu0 0
          %3839 = vmatprep.subr.bf16.mxu0 0
          %3840 = vmatpush1.bf16.msra.mxu0 0
          %3841 = vmatprep.subr.bf16.mxu0 0
          %3842 = vmatpush1.bf16.msra.mxu0 0
          %3843 = vmatprep.subr.bf16.mxu0 0
          %3844 = vmatpush1.bf16.msra.mxu0 0
          %3845 = vmatprep.subr.bf16.mxu0 0
          %3846 = vmatpush1.bf16.msra.mxu0 0
          %3847 = vmatprep.mubr.bf16.mxu0 0
          %3848 = vmatmul.mubr.bf16.gmra.mrb[0].mxu0 %v3810
          %v3849 = vpop.f32.mrb[0].mxu0
          %v3850 = vadd.f32 0.0, %v3849
          %v3851 = vpop.f32.mrb[0].mxu0
          %v3852 = vpop.f32.mrb[0].mxu0
          %v3853 = vpop.f32.mrb[0].mxu0
          %3854 = vdwg.mxu0
          %v3856 = vsel %vm2275, %v3611, 0
          %v3859 = vsel %vm3627, %v3621, 0
          %3861 = vmatprep.subr.bf16.mxu0 0
          %3862 = vmatpush1.bf16.msra.mxu0 %v3859
          %3863 = vmatprep.subr.bf16.mxu0 0
          %3864 = vmatpush1.bf16.msra.mxu0 0
          %3865 = vmatprep.subr.bf16.mxu0 0
          %3866 = vmatpush1.bf16.msra.mxu0 0
          %3867 = vmatprep.subr.bf16.mxu0 0
          %3868 = vmatpush1.bf16.msra.mxu0 0
          %3869 = vmatprep.subr.bf16.mxu0 0
          %3870 = vmatpush1.bf16.msra.mxu0 0
          %3871 = vmatprep.subr.bf16.mxu0 0
          %3872 = vmatpush1.bf16.msra.mxu0 0
          %3873 = vmatprep.subr.bf16.mxu0 0
          %3874 = vmatpush1.bf16.msra.mxu0 0
          %3875 = vmatprep.subr.bf16.mxu0 0
          %3876 = vmatpush1.bf16.msra.mxu0 0
          %3877 = vmatprep.subr.bf16.mxu0 0
          %3878 = vmatpush1.bf16.msra.mxu0 0
          %3879 = vmatprep.subr.bf16.mxu0 0
          %3880 = vmatpush1.bf16.msra.mxu0 0
          %3881 = vmatprep.subr.bf16.mxu0 0
          %3882 = vmatpush1.bf16.msra.mxu0 0
          %3883 = vmatprep.subr.bf16.mxu0 0
          %3884 = vmatpush1.bf16.msra.mxu0 0
          %3885 = vmatprep.subr.bf16.mxu0 0
          %3886 = vmatpush1.bf16.msra.mxu0 0
          %3887 = vmatprep.subr.bf16.mxu0 0
          %3888 = vmatpush1.bf16.msra.mxu0 0
          %3889 = vmatprep.subr.bf16.mxu0 0
          %3890 = vmatpush1.bf16.msra.mxu0 0
          %3891 = vmatprep.subr.bf16.mxu0 0
          %3892 = vmatpush1.bf16.msra.mxu0 0
          %3893 = vmatprep.mubr.bf16.mxu0 0
          %3894 = vmatmul.mubr.bf16.gmra.mrb[0].mxu0 %v3856
          %v3895 = vpop.f32.mrb[0].mxu0
          %v3896 = vadd.f32 0.0, %v3895
          %v3897 = vpop.f32.mrb[0].mxu0
          %v3898 = vpop.f32.mrb[0].mxu0
          %v3899 = vpop.f32.mrb[0].mxu0
          %3900 = vdwg.mxu0
          %v3902 = vsel %vm2275, %v3612, 0
          %v3905 = vsel %vm3627, %v3622, 0
          %3907 = vmatprep.subr.bf16.mxu0 0
          %3908 = vmatpush1.bf16.msra.mxu0 %v3905
          %3909 = vmatprep.subr.bf16.mxu0 0
          %3910 = vmatpush1.bf16.msra.mxu0 0
          %3911 = vmatprep.subr.bf16.mxu0 0
          %3912 = vmatpush1.bf16.msra.mxu0 0
          %3913 = vmatprep.subr.bf16.mxu0 0
          %3914 = vmatpush1.bf16.msra.mxu0 0
          %3915 = vmatprep.subr.bf16.mxu0 0
          %3916 = vmatpush1.bf16.msra.mxu0 0
          %3917 = vmatprep.subr.bf16.mxu0 0
          %3918 = vmatpush1.bf16.msra.mxu0 0
          %3919 = vmatprep.subr.bf16.mxu0 0
          %3920 = vmatpush1.bf16.msra.mxu0 0
          %3921 = vmatprep.subr.bf16.mxu0 0
          %3922 = vmatpush1.bf16.msra.mxu0 0
          %3923 = vmatprep.subr.bf16.mxu0 0
          %3924 = vmatpush1.bf16.msra.mxu0 0
          %3925 = vmatprep.subr.bf16.mxu0 0
          %3926 = vmatpush1.bf16.msra.mxu0 0
          %3927 = vmatprep.subr.bf16.mxu0 0
          %3928 = vmatpush1.bf16.msra.mxu0 0
          %3929 = vmatprep.subr.bf16.mxu0 0
          %3930 = vmatpush1.bf16.msra.mxu0 0
          %3931 = vmatprep.subr.bf16.mxu0 0
          %3932 = vmatpush1.bf16.msra.mxu0 0
          %3933 = vmatprep.subr.bf16.mxu0 0
          %3934 = vmatpush1.bf16.msra.mxu0 0
          %3935 = vmatprep.subr.bf16.mxu0 0
          %3936 = vmatpush1.bf16.msra.mxu0 0
          %3937 = vmatprep.subr.bf16.mxu0 0
          %3938 = vmatpush1.bf16.msra.mxu0 0
          %3939 = vmatprep.mubr.bf16.mxu0 0
          %3940 = vmatmul.mubr.bf16.gmra.mrb[0].mxu0 %v3902
          %v3941 = vpop.f32.mrb[0].mxu0
          %v3942 = vadd.f32 0.0, %v3941
          %v3943 = vpop.f32.mrb[0].mxu0
          %v3944 = vpop.f32.mrb[0].mxu0
          %v3945 = vpop.f32.mrb[0].mxu0
          %3946 = vdwg.mxu0
          %v3948 = vsel %vm2275, %v3613, 0
          %v3951 = vsel %vm3627, %v3623, 0
          %3953 = vmatprep.subr.bf16.mxu0 0
          %3954 = vmatpush1.bf16.msra.mxu0 %v3951
          %3955 = vmatprep.subr.bf16.mxu0 0
          %3956 = vmatpush1.bf16.msra.mxu0 0
          %3957 = vmatprep.subr.bf16.mxu0 0
          %3958 = vmatpush1.bf16.msra.mxu0 0
          %3959 = vmatprep.subr.bf16.mxu0 0
          %3960 = vmatpush1.bf16.msra.mxu0 0
          %3961 = vmatprep.subr.bf16.mxu0 0
          %3962 = vmatpush1.bf16.msra.mxu0 0
          %3963 = vmatprep.subr.bf16.mxu0 0
          %3964 = vmatpush1.bf16.msra.mxu0 0
          %3965 = vmatprep.subr.bf16.mxu0 0
          %3966 = vmatpush1.bf16.msra.mxu0 0
          %3967 = vmatprep.subr.bf16.mxu0 0
          %3968 = vmatpush1.bf16.msra.mxu0 0
          %3969 = vmatprep.subr.bf16.mxu0 0
          %3970 = vmatpush1.bf16.msra.mxu0 0
          %3971 = vmatprep.subr.bf16.mxu0 0
          %3972 = vmatpush1.bf16.msra.mxu0 0
          %3973 = vmatprep.subr.bf16.mxu0 0
          %3974 = vmatpush1.bf16.msra.mxu0 0
          %3975 = vmatprep.subr.bf16.mxu0 0
          %3976 = vmatpush1.bf16.msra.mxu0 0
          %3977 = vmatprep.subr.bf16.mxu0 0
          %3978 = vmatpush1.bf16.msra.mxu0 0
          %3979 = vmatprep.subr.bf16.mxu0 0
          %3980 = vmatpush1.bf16.msra.mxu0 0
          %3981 = vmatprep.subr.bf16.mxu0 0
          %3982 = vmatpush1.bf16.msra.mxu0 0
          %3983 = vmatprep.subr.bf16.mxu0 0
          %3984 = vmatpush1.bf16.msra.mxu0 0
          %3985 = vmatprep.mubr.bf16.mxu0 0
          %3986 = vmatmul.mubr.bf16.gmra.mrb[0].mxu0 %v3948
          %v3987 = vpop.f32.mrb[0].mxu0
          %v3988 = vadd.f32 0.0, %v3987
          %v3989 = vpop.f32.mrb[0].mxu0
          %v3990 = vpop.f32.mrb[0].mxu0
          %v3991 = vpop.f32.mrb[0].mxu0
          %3992 = vdwg.mxu0
          %vm3993 = vcmask 257024
          %v3994 = vsel %vm3993, %v3666, 0.0
          %v3995 = vsel %vm3993, %v3712, 0.0
          %v3996 = vadd.f32 %v3994, %v3995
          %v3997 = vsel %vm3993, %v3758, 0.0
          %v3998 = vadd.f32 %v3996, %v3997
          %v3999 = vsel %vm3993, %v3804, 0.0
          %v4000 = vadd.f32 %v3998, %v3999
          %v4001 = vsel %vm3993, %v3850, 0.0
          %v4002 = vadd.f32 %v4000, %v4001
          %v4003 = vsel %vm3993, %v3896, 0.0
          %v4004 = vadd.f32 %v4002, %v4003
          %v4005 = vsel %vm3993, %v3942, 0.0
          %v4006 = vadd.f32 %v4004, %v4005
          %v4007 = vsel %vm3993, %v3988, 0.0
          %v4008 = vadd.f32 %v4006, %v4007
          %v4009 = vlaneseq
          %v4010 = vshrl.u32 %v4009, 7
          %v4011 = vsub.s32 0, %v4010
          %v4012 = vrot.slane %v3605, %v4011
          %v4013 = vadd.f32 %v4008, %v4012
          %v4015 = vrot.slane %v4013, 1
          %v4016 = vrot.slane %v4013, 2
          %v4017 = vrot.slane %v4013, 3
          %v4022 = vadd.f32 %v723, %v4013
          %v4023 = vadd.f32 %v724, %v4015
          %v4024 = vadd.f32 %v725, %v4016
          %v4025 = vadd.f32 %v726, %v4017
          %v4030 = vrot.slane %v4023, 7
          %v4031 = vsel %vm833, %v4030, %v4022
          %v4032 = vrot.slane %v4024, 6
          %v4033 = vsel %vm836, %v4032, %v4031
          %v4034 = vrot.slane %v4025, 5
          %v4035 = vsel %vm839, %v4034, %v4033
          %v4037 = vsel %vm3993, %v4035, 0.0
          %4038 = vadd.xlane.f32.xlu0 %v4037
          %v4039 = vpop.xlane.xlu0 %4038
          %v4040 = vrcp.pop 32.0
          %v4041 = vmul.f32 %v4039, %v4040
          %v4043 = vrot.slane %v4041, 1
          %v4044 = vrot.slane %v4041, 2
          %v4045 = vrot.slane %v4041, 3
          %v4050 = vsub.f32 %v4022, %v4041
          %v4051 = vsub.f32 %v4023, %v4043
          %v4052 = vsub.f32 %v4024, %v4044
          %v4053 = vsub.f32 %v4025, %v4045
          %v4054 = vmul.f32 %v4050, %v4050
          %v4055 = vmul.f32 %v4051, %v4051
          %v4056 = vmul.f32 %v4052, %v4052
          %v4057 = vmul.f32 %v4053, %v4053
          %v4062 = vrot.slane %v4055, 7
          %v4063 = vsel %vm833, %v4062, %v4054
          %v4064 = vrot.slane %v4056, 6
          %v4065 = vsel %vm836, %v4064, %v4063
          %v4066 = vrot.slane %v4057, 5
          %v4067 = vsel %vm839, %v4066, %v4065
          %v4069 = vsel %vm3993, %v4067, 0.0
          %4070 = vadd.xlane.f32.xlu0 %v4069
          %v4071 = vpop.xlane.xlu0 %4070
          %v4072 = vmul.f32 %v4071, %v4040
          %v4073 = vadd.f32 %v4072, 1e-05
          %v4074 = vrsqrt.pop %v4073
          %v4076 = vrot.slane %v4074, 1
          %v4077 = vrot.slane %v4074, 2
          %v4078 = vrot.slane %v4074, 3
          %v4083 = vmul.f32 %v4050, %v4074
          %v4084 = vmul.f32 %v4051, %v4076
          %v4085 = vmul.f32 %v4052, %v4077
          %v4086 = vmul.f32 %v4053, %v4078
          %v4087 = vlaneseq
          %v4088 = vshrl.u32 %v4087, 7
          %v4089 = vsub.s32 1, %v4088
          %v4090 = vrot.slane %v3605, %v4089
          %v4091 = vmul.f32 %v4083, %v4090
          %v4092 = vmul.f32 %v4084, %v4090
          %v4093 = vmul.f32 %v4085, %v4090
          %v4094 = vmul.f32 %v4086, %v4090
          %v4095 = vlaneseq
          %v4096 = vshrl.u32 %v4095, 7
          %v4097 = vsub.s32 2, %v4096
          %v4098 = vrot.slane %v3605, %v4097
          %v4099 = vadd.f32 %v4091, %v4098
          %v4100 = vadd.f32 %v4092, %v4098
          %v4101 = vadd.f32 %v4093, %v4098
          %v4102 = vadd.f32 %v4094, %v4098
          %v4103 = vpack.c.bf16 %v4099, %v4099
          %v4104 = vpack.c.bf16 %v4100, %v4100
          %v4105 = vpack.c.bf16 %v4101, %v4101
          %v4106 = vpack.c.bf16 %v4102, %v4102
          %s4107 = smul.u32 %s718, 24
          %s4108 = smul.addr %s4107, 4
          %s4109 = scalar_lea.vmem %s13, %s4108
          %v4110 = vld [vmem:[%s4109] sm:$0xff]
          %v4111 = vld [vmem:[%s4109 + $0x8] sm:$0xff]
          %v4112 = vld [vmem:[%s4109 + $0x10] sm:$0xff]
          %v4113 = vld [vmem:[%s4109 + $0x18] sm:$0xff]
          %v4114 = vld [vmem:[%s4109 + $0x20] sm:$0xff]
          %v4115 = vld [vmem:[%s4109 + $0x28] sm:$0xff]
          %v4116 = vld [vmem:[%s4109 + $0x30] sm:$0xff]
          %v4117 = vld [vmem:[%s4109 + $0x38] sm:$0xff]
          %v4118 = vld [vmem:[%s4109 + $0x40] sm:$0xff]
          %v4119 = vld [vmem:[%s4109 + $0x48] sm:$0xff]
          %v4120 = vld [vmem:[%s4109 + $0x50] sm:$0xff]
          %v4121 = vld [vmem:[%s4109 + $0x58] sm:$0xff]
          %s4122 = smul.u32 %s718, 6
          %s4123 = scalar_lea.vmem %s14, %s4122
          %v4124 = vld [vmem:[%s4123] sm:$0x3f]
          %v4126 = vlaneseq
          %v4127 = vshrl.u32 %v4126, 7
          %v4128 = vsub.s32 0, %v4127
          %v4129 = vrot.slane %v4124, %v4128
          %v4130 = vlaneseq
          %v4131 = vshrl.u32 %v4130, 7
          %v4132 = vsub.s32 1, %v4131
          %v4133 = vrot.slane %v4124, %v4132
          %v4134 = vlaneseq
          %v4135 = vshrl.u32 %v4134, 7
          %v4136 = vsub.s32 2, %v4135
          %v4137 = vrot.slane %v4124, %v4136
          %v4138 = vlaneseq
          %v4139 = vshrl.u32 %v4138, 7
          %v4140 = vsub.s32 3, %v4139
          %v4141 = vrot.slane %v4124, %v4140
          %v4142 = vlaneseq
          %v4143 = vshrl.u32 %v4142, 7
          %v4144 = vsub.s32 4, %v4143
          %v4145 = vrot.slane %v4124, %v4144
          %v4146 = vlaneseq
          %v4147 = vshrl.u32 %v4146, 7
          %v4148 = vsub.s32 5, %v4147
          %v4149 = vrot.slane %v4124, %v4148
          %v4160 = vunpack.c.l.b16 %v4103
          %v4161 = vunpack.c.l.b16 %v4104
          %v4162 = vunpack.c.l.b16 %v4105
          %v4163 = vunpack.c.l.b16 %v4106
          %v4164 = vrot.slane %v4161, 7
          %v4165 = vsel %vm833, %v4164, %v4160
          %v4166 = vrot.slane %v4162, 6
          %v4167 = vsel %vm836, %v4166, %v4165
          %v4168 = vrot.slane %v4163, 5
          %v4169 = vsel %vm839, %v4168, %v4167
          %v4170 = vpack.c.b16 %v4169, %v4169
          %v4183 = vunpack.c.l.b16 %v4110
          %v4184 = vunpack.c.h.b16 %v4110
          %v4185 = vunpack.c.l.b16 %v4111
          %v4186 = vunpack.c.h.b16 %v4111
          %v4187 = vunpack.c.l.b16 %v4112
          %v4188 = vunpack.c.h.b16 %v4112
          %v4189 = vunpack.c.l.b16 %v4113
          %v4190 = vunpack.c.h.b16 %v4113
          %v4191 = vunpack.c.l.b16 %v4114
          %v4192 = vunpack.c.h.b16 %v4114
          %v4193 = vunpack.c.l.b16 %v4115
          %v4194 = vunpack.c.h.b16 %v4115
          %v4195 = vunpack.c.l.b16 %v4116
          %v4196 = vunpack.c.h.b16 %v4116
          %v4197 = vunpack.c.l.b16 %v4117
          %v4198 = vunpack.c.h.b16 %v4117
          %v4199 = vunpack.c.l.b16 %v4118
          %v4200 = vunpack.c.h.b16 %v4118
          %v4201 = vunpack.c.l.b16 %v4119
          %v4202 = vunpack.c.h.b16 %v4119
          %v4203 = vunpack.c.l.b16 %v4120
          %v4204 = vunpack.c.h.b16 %v4120
          %v4205 = vunpack.c.l.b16 %v4121
          %v4206 = vunpack.c.h.b16 %v4121
          %v4207 = vpack.c.b16 %v4189, %v4183
          %v4208 = vpack.c.b16 %v4190, %v4184
          %v4209 = vpack.c.b16 %v4191, %v4185
          %v4210 = vpack.c.b16 %v4192, %v4186
          %v4211 = vpack.c.b16 %v4193, %v4187
          %v4212 = vpack.c.b16 %v4194, %v4188
          %v4213 = vpack.c.b16 %v4201, %v4195
          %v4214 = vpack.c.b16 %v4202, %v4196
          %v4215 = vpack.c.b16 %v4203, %v4197
          %v4216 = vpack.c.b16 %v4204, %v4198
          %v4217 = vpack.c.b16 %v4205, %v4199
          %v4218 = vpack.c.b16 %v4206, %v4200
          %v4232 = vsel %vm613, %v4170, 0
          %4234 = vmatprep.subr.bf16.mxu0 %v4208
          %4235 = vmatpush1.bf16.msra.mxu0 %v4207
          %4236 = vmatprep.subr.bf16.mxu0 %v4214
          %4237 = vmatpush1.bf16.msra.mxu0 %v4213
          %4238 = vmatprep.subr.bf16.mxu0 0
          %4239 = vmatpush1.bf16.msra.mxu0 0
          %4240 = vmatprep.subr.bf16.mxu0 0
          %4241 = vmatpush1.bf16.msra.mxu0 0
          %4242 = vmatprep.subr.bf16.mxu0 0
          %4243 = vmatpush1.bf16.msra.mxu0 0
          %4244 = vmatprep.subr.bf16.mxu0 0
          %4245 = vmatpush1.bf16.msra.mxu0 0
          %4246 = vmatprep.subr.bf16.mxu0 0
          %4247 = vmatpush1.bf16.msra.mxu0 0
          %4248 = vmatprep.subr.bf16.mxu0 0
          %4249 = vmatpush1.bf16.msra.mxu0 0
          %4250 = vmatprep.subr.bf16.mxu0 0
          %4251 = vmatpush1.bf16.msra.mxu0 0
          %4252 = vmatprep.subr.bf16.mxu0 0
          %4253 = vmatpush1.bf16.msra.mxu0 0
          %4254 = vmatprep.subr.bf16.mxu0 0
          %4255 = vmatpush1.bf16.msra.mxu0 0
          %4256 = vmatprep.subr.bf16.mxu0 0
          %4257 = vmatpush1.bf16.msra.mxu0 0
          %4258 = vmatprep.subr.bf16.mxu0 0
          %4259 = vmatpush1.bf16.msra.mxu0 0
          %4260 = vmatprep.subr.bf16.mxu0 0
          %4261 = vmatpush1.bf16.msra.mxu0 0
          %4262 = vmatprep.subr.bf16.mxu0 0
          %4263 = vmatpush1.bf16.msra.mxu0 0
          %4264 = vmatprep.subr.bf16.mxu0 0
          %4265 = vmatpush1.bf16.msra.mxu0 0
          %4266 = vmatprep.mubr.bf16.mxu0 0
          %4267 = vmatmul.mubr.bf16.gmra.mrb[0].mxu0 %v4232
          %v4268 = vpop.f32.mrb[0].mxu0
          %v4269 = vadd.f32 %v4129, %v4268
          %v4270 = vpop.f32.mrb[0].mxu0
          %v4271 = vadd.f32 %v4133, %v4270
          %v4272 = vpop.f32.mrb[0].mxu0
          %v4273 = vpop.f32.mrb[0].mxu0
          %4274 = vdwg.mxu0
          %4275 = vmatprep.subr.bf16.mxu0 %v4210
          %4276 = vmatpush1.bf16.msra.mxu0 %v4209
          %4277 = vmatprep.subr.bf16.mxu0 %v4216
          %4278 = vmatpush1.bf16.msra.mxu0 %v4215
          %4279 = vmatprep.subr.bf16.mxu0 0
          %4280 = vmatpush1.bf16.msra.mxu0 0
          %4281 = vmatprep.subr.bf16.mxu0 0
          %4282 = vmatpush1.bf16.msra.mxu0 0
          %4283 = vmatprep.subr.bf16.mxu0 0
          %4284 = vmatpush1.bf16.msra.mxu0 0
          %4285 = vmatprep.subr.bf16.mxu0 0
          %4286 = vmatpush1.bf16.msra.mxu0 0
          %4287 = vmatprep.subr.bf16.mxu0 0
          %4288 = vmatpush1.bf16.msra.mxu0 0
          %4289 = vmatprep.subr.bf16.mxu0 0
          %4290 = vmatpush1.bf16.msra.mxu0 0
          %4291 = vmatprep.subr.bf16.mxu0 0
          %4292 = vmatpush1.bf16.msra.mxu0 0
          %4293 = vmatprep.subr.bf16.mxu0 0
          %4294 = vmatpush1.bf16.msra.mxu0 0
          %4295 = vmatprep.subr.bf16.mxu0 0
          %4296 = vmatpush1.bf16.msra.mxu0 0
          %4297 = vmatprep.subr.bf16.mxu0 0
          %4298 = vmatpush1.bf16.msra.mxu0 0
          %4299 = vmatprep.subr.bf16.mxu0 0
          %4300 = vmatpush1.bf16.msra.mxu0 0
          %4301 = vmatprep.subr.bf16.mxu0 0
          %4302 = vmatpush1.bf16.msra.mxu0 0
          %4303 = vmatprep.subr.bf16.mxu0 0
          %4304 = vmatpush1.bf16.msra.mxu0 0
          %4305 = vmatprep.subr.bf16.mxu0 0
          %4306 = vmatpush1.bf16.msra.mxu0 0
          %4307 = vmatprep.mubr.bf16.mxu0 0
          %4308 = vmatmul.mubr.bf16.gmra.mrb[0].mxu0 %v4232
          %v4309 = vpop.f32.mrb[0].mxu0
          %v4310 = vadd.f32 %v4137, %v4309
          %v4311 = vpop.f32.mrb[0].mxu0
          %v4312 = vadd.f32 %v4141, %v4311
          %v4313 = vpop.f32.mrb[0].mxu0
          %v4314 = vpop.f32.mrb[0].mxu0
          %4315 = vdwg.mxu0
          %4316 = vmatprep.subr.bf16.mxu0 %v4212
          %4317 = vmatpush1.bf16.msra.mxu0 %v4211
          %4318 = vmatprep.subr.bf16.mxu0 %v4218
          %4319 = vmatpush1.bf16.msra.mxu0 %v4217
          %4320 = vmatprep.subr.bf16.mxu0 0
          %4321 = vmatpush1.bf16.msra.mxu0 0
          %4322 = vmatprep.subr.bf16.mxu0 0
          %4323 = vmatpush1.bf16.msra.mxu0 0
          %4324 = vmatprep.subr.bf16.mxu0 0
          %4325 = vmatpush1.bf16.msra.mxu0 0
          %4326 = vmatprep.subr.bf16.mxu0 0
          %4327 = vmatpush1.bf16.msra.mxu0 0
          %4328 = vmatprep.subr.bf16.mxu0 0
          %4329 = vmatpush1.bf16.msra.mxu0 0
          %4330 = vmatprep.subr.bf16.mxu0 0
          %4331 = vmatpush1.bf16.msra.mxu0 0
          %4332 = vmatprep.subr.bf16.mxu0 0
          %4333 = vmatpush1.bf16.msra.mxu0 0
          %4334 = vmatprep.subr.bf16.mxu0 0
          %4335 = vmatpush1.bf16.msra.mxu0 0
          %4336 = vmatprep.subr.bf16.mxu0 0
          %4337 = vmatpush1.bf16.msra.mxu0 0
          %4338 = vmatprep.subr.bf16.mxu0 0
          %4339 = vmatpush1.bf16.msra.mxu0 0
          %4340 = vmatprep.subr.bf16.mxu0 0
          %4341 = vmatpush1.bf16.msra.mxu0 0
          %4342 = vmatprep.subr.bf16.mxu0 0
          %4343 = vmatpush1.bf16.msra.mxu0 0
          %4344 = vmatprep.subr.bf16.mxu0 0
          %4345 = vmatpush1.bf16.msra.mxu0 0
          %4346 = vmatprep.subr.bf16.mxu0 0
          %4347 = vmatpush1.bf16.msra.mxu0 0
          %4348 = vmatprep.mubr.bf16.mxu0 0
          %4349 = vmatmul.mubr.bf16.gmra.mrb[0].mxu0 %v4232
          %v4350 = vpop.f32.mrb[0].mxu0
          %v4351 = vadd.f32 %v4145, %v4350
          %v4352 = vpop.f32.mrb[0].mxu0
          %v4353 = vadd.f32 %v4149, %v4352
          %v4354 = vpop.f32.mrb[0].mxu0
          %v4355 = vpop.f32.mrb[0].mxu0
          %4356 = vdwg.mxu0
          %v4357 = vmax.f32 %v4269, 0.0
          %v4358 = vmax.f32 %v4271, 0.0
          %v4359 = vmax.f32 %v4310, 0.0
          %v4360 = vmax.f32 %v4312, 0.0
          %v4361 = vmax.f32 %v4351, 0.0
          %v4362 = vmax.f32 %v4353, 0.0
          %v4363 = vpack.c.bf16 %v4357, %v4357
          %v4364 = vpack.c.bf16 %v4358, %v4358
          %v4365 = vpack.c.bf16 %v4359, %v4359
          %v4366 = vpack.c.bf16 %v4360, %v4360
          %v4367 = vpack.c.bf16 %v4361, %v4361
          %v4368 = vpack.c.bf16 %v4362, %v4362
          %s4369 = smul.u32 %s718, 96
          %s4370 = smul.addr %s4369, 4
          %s4371 = scalar_lea.vmem %s15, %s4370
          %v4372 = vld [vmem:[%s4371] sm:$0xf]
          %v4373 = vld [vmem:[%s4371 + $0x4] sm:$0xf]
          %v4374 = vld [vmem:[%s4371 + $0x8] sm:$0xf]
          %v4375 = vld [vmem:[%s4371 + $0xc] sm:$0xf]
          %v4376 = vld [vmem:[%s4371 + $0x10] sm:$0xf]
          %v4377 = vld [vmem:[%s4371 + $0x14] sm:$0xf]
          %v4378 = vld [vmem:[%s4371 + $0x18] sm:$0xf]
          %v4379 = vld [vmem:[%s4371 + $0x1c] sm:$0xf]
          %v4380 = vld [vmem:[%s4371 + $0x20] sm:$0xf]
          %v4381 = vld [vmem:[%s4371 + $0x24] sm:$0xf]
          %v4382 = vld [vmem:[%s4371 + $0x28] sm:$0xf]
          %v4383 = vld [vmem:[%s4371 + $0x2c] sm:$0xf]
          %v4384 = vld [vmem:[%s4371 + $0x30] sm:$0xf]
          %v4385 = vld [vmem:[%s4371 + $0x34] sm:$0xf]
          %v4386 = vld [vmem:[%s4371 + $0x38] sm:$0xf]
          %v4387 = vld [vmem:[%s4371 + $0x3c] sm:$0xf]
          %v4388 = vld [vmem:[%s4371 + $0x40] sm:$0xf]
          %v4389 = vld [vmem:[%s4371 + $0x44] sm:$0xf]
          %v4390 = vld [vmem:[%s4371 + $0x48] sm:$0xf]
          %v4391 = vld [vmem:[%s4371 + $0x4c] sm:$0xf]
          %v4392 = vld [vmem:[%s4371 + $0x50] sm:$0xf]
          %v4393 = vld [vmem:[%s4371 + $0x54] sm:$0xf]
          %v4394 = vld [vmem:[%s4371 + $0x58] sm:$0xf]
          %v4395 = vld [vmem:[%s4371 + $0x5c] sm:$0xf]
          %v4396 = vld [vmem:[%s4371 + $0x60] sm:$0xf]
          %v4397 = vld [vmem:[%s4371 + $0x64] sm:$0xf]
          %v4398 = vld [vmem:[%s4371 + $0x68] sm:$0xf]
          %v4399 = vld [vmem:[%s4371 + $0x6c] sm:$0xf]
          %v4400 = vld [vmem:[%s4371 + $0x70] sm:$0xf]
          %v4401 = vld [vmem:[%s4371 + $0x74] sm:$0xf]
          %v4402 = vld [vmem:[%s4371 + $0x78] sm:$0xf]
          %v4403 = vld [vmem:[%s4371 + $0x7c] sm:$0xf]
          %v4404 = vld [vmem:[%s4371 + $0x80] sm:$0xf]
          %v4405 = vld [vmem:[%s4371 + $0x84] sm:$0xf]
          %v4406 = vld [vmem:[%s4371 + $0x88] sm:$0xf]
          %v4407 = vld [vmem:[%s4371 + $0x8c] sm:$0xf]
          %v4408 = vld [vmem:[%s4371 + $0x90] sm:$0xf]
          %v4409 = vld [vmem:[%s4371 + $0x94] sm:$0xf]
          %v4410 = vld [vmem:[%s4371 + $0x98] sm:$0xf]
          %v4411 = vld [vmem:[%s4371 + $0x9c] sm:$0xf]
          %v4412 = vld [vmem:[%s4371 + $0xa0] sm:$0xf]
          %v4413 = vld [vmem:[%s4371 + $0xa4] sm:$0xf]
          %v4414 = vld [vmem:[%s4371 + $0xa8] sm:$0xf]
          %v4415 = vld [vmem:[%s4371 + $0xac] sm:$0xf]
          %v4416 = vld [vmem:[%s4371 + $0xb0] sm:$0xf]
          %v4417 = vld [vmem:[%s4371 + $0xb4] sm:$0xf]
          %v4418 = vld [vmem:[%s4371 + $0xb8] sm:$0xf]
          %v4419 = vld [vmem:[%s4371 + $0xbc] sm:$0xf]
          %v4420 = vld [vmem:[%s4371 + $0xc0] sm:$0xf]
          %v4421 = vld [vmem:[%s4371 + $0xc4] sm:$0xf]
          %v4422 = vld [vmem:[%s4371 + $0xc8] sm:$0xf]
          %v4423 = vld [vmem:[%s4371 + $0xcc] sm:$0xf]
          %v4424 = vld [vmem:[%s4371 + $0xd0] sm:$0xf]
          %v4425 = vld [vmem:[%s4371 + $0xd4] sm:$0xf]
          %v4426 = vld [vmem:[%s4371 + $0xd8] sm:$0xf]
          %v4427 = vld [vmem:[%s4371 + $0xdc] sm:$0xf]
          %v4428 = vld [vmem:[%s4371 + $0xe0] sm:$0xf]
          %v4429 = vld [vmem:[%s4371 + $0xe4] sm:$0xf]
          %v4430 = vld [vmem:[%s4371 + $0xe8] sm:$0xf]
          %v4431 = vld [vmem:[%s4371 + $0xec] sm:$0xf]
          %v4432 = vld [vmem:[%s4371 + $0xf0] sm:$0xf]
          %v4433 = vld [vmem:[%s4371 + $0xf4] sm:$0xf]
          %v4434 = vld [vmem:[%s4371 + $0xf8] sm:$0xf]
          %v4435 = vld [vmem:[%s4371 + $0xfc] sm:$0xf]
          %v4436 = vld [vmem:[%s4371 + $0x100] sm:$0xf]
          %v4437 = vld [vmem:[%s4371 + $0x104] sm:$0xf]
          %v4438 = vld [vmem:[%s4371 + $0x108] sm:$0xf]
          %v4439 = vld [vmem:[%s4371 + $0x10c] sm:$0xf]
          %v4440 = vld [vmem:[%s4371 + $0x110] sm:$0xf]
          %v4441 = vld [vmem:[%s4371 + $0x114] sm:$0xf]
          %v4442 = vld [vmem:[%s4371 + $0x118] sm:$0xf]
          %v4443 = vld [vmem:[%s4371 + $0x11c] sm:$0xf]
          %v4444 = vld [vmem:[%s4371 + $0x120] sm:$0xf]
          %v4445 = vld [vmem:[%s4371 + $0x124] sm:$0xf]
          %v4446 = vld [vmem:[%s4371 + $0x128] sm:$0xf]
          %v4447 = vld [vmem:[%s4371 + $0x12c] sm:$0xf]
          %v4448 = vld [vmem:[%s4371 + $0x130] sm:$0xf]
          %v4449 = vld [vmem:[%s4371 + $0x134] sm:$0xf]
          %v4450 = vld [vmem:[%s4371 + $0x138] sm:$0xf]
          %v4451 = vld [vmem:[%s4371 + $0x13c] sm:$0xf]
          %v4452 = vld [vmem:[%s4371 + $0x140] sm:$0xf]
          %v4453 = vld [vmem:[%s4371 + $0x144] sm:$0xf]
          %v4454 = vld [vmem:[%s4371 + $0x148] sm:$0xf]
          %v4455 = vld [vmem:[%s4371 + $0x14c] sm:$0xf]
          %v4456 = vld [vmem:[%s4371 + $0x150] sm:$0xf]
          %v4457 = vld [vmem:[%s4371 + $0x154] sm:$0xf]
          %v4458 = vld [vmem:[%s4371 + $0x158] sm:$0xf]
          %v4459 = vld [vmem:[%s4371 + $0x15c] sm:$0xf]
          %v4460 = vld [vmem:[%s4371 + $0x160] sm:$0xf]
          %v4461 = vld [vmem:[%s4371 + $0x164] sm:$0xf]
          %v4462 = vld [vmem:[%s4371 + $0x168] sm:$0xf]
          %v4463 = vld [vmem:[%s4371 + $0x16c] sm:$0xf]
          %v4464 = vld [vmem:[%s4371 + $0x170] sm:$0xf]
          %v4465 = vld [vmem:[%s4371 + $0x174] sm:$0xf]
          %v4466 = vld [vmem:[%s4371 + $0x178] sm:$0xf]
          %v4467 = vld [vmem:[%s4371 + $0x17c] sm:$0xf]
          %v4468 = vlaneseq
          %v4469 = vshrl.u32 %v4468, 7
          %v4470 = vsub.s32 5, %v4469
          %v4471 = vrot.slane %v3605, %v4470
          %v4568 = vunpack.c.l.b16 %v4372
          %v4569 = vunpack.c.l.b16 %v4373
          %v4570 = vunpack.c.l.b16 %v4374
          %v4571 = vunpack.c.l.b16 %v4375
          %v4572 = vunpack.c.l.b16 %v4376
          %v4573 = vunpack.c.l.b16 %v4377
          %v4574 = vunpack.c.l.b16 %v4378
          %v4575 = vunpack.c.l.b16 %v4379
          %v4576 = vunpack.c.l.b16 %v4380
          %v4577 = vunpack.c.l.b16 %v4381
          %v4578 = vunpack.c.l.b16 %v4382
          %v4579 = vunpack.c.l.b16 %v4383
          %v4580 = vunpack.c.l.b16 %v4384
          %v4581 = vunpack.c.l.b16 %v4385
          %v4582 = vunpack.c.l.b16 %v4386
          %v4583 = vunpack.c.l.b16 %v4387
          %v4584 = vunpack.c.l.b16 %v4388
          %v4585 = vunpack.c.l.b16 %v4389
          %v4586 = vunpack.c.l.b16 %v4390
          %v4587 = vunpack.c.l.b16 %v4391
          %v4588 = vunpack.c.l.b16 %v4392
          %v4589 = vunpack.c.l.b16 %v4393
          %v4590 = vunpack.c.l.b16 %v4394
          %v4591 = vunpack.c.l.b16 %v4395
          %v4592 = vunpack.c.l.b16 %v4396
          %v4593 = vunpack.c.l.b16 %v4397
          %v4594 = vunpack.c.l.b16 %v4398
          %v4595 = vunpack.c.l.b16 %v4399
          %v4596 = vunpack.c.l.b16 %v4400
          %v4597 = vunpack.c.l.b16 %v4401
          %v4598 = vunpack.c.l.b16 %v4402
          %v4599 = vunpack.c.l.b16 %v4403
          %v4600 = vunpack.c.l.b16 %v4404
          %v4601 = vunpack.c.l.b16 %v4405
          %v4602 = vunpack.c.l.b16 %v4406
          %v4603 = vunpack.c.l.b16 %v4407
          %v4604 = vunpack.c.l.b16 %v4408
          %v4605 = vunpack.c.l.b16 %v4409
          %v4606 = vunpack.c.l.b16 %v4410
          %v4607 = vunpack.c.l.b16 %v4411
          %v4608 = vunpack.c.l.b16 %v4412
          %v4609 = vunpack.c.l.b16 %v4413
          %v4610 = vunpack.c.l.b16 %v4414
          %v4611 = vunpack.c.l.b16 %v4415
          %v4612 = vunpack.c.l.b16 %v4416
          %v4613 = vunpack.c.l.b16 %v4417
          %v4614 = vunpack.c.l.b16 %v4418
          %v4615 = vunpack.c.l.b16 %v4419
          %v4616 = vunpack.c.l.b16 %v4420
          %v4617 = vunpack.c.l.b16 %v4421
          %v4618 = vunpack.c.l.b16 %v4422
          %v4619 = vunpack.c.l.b16 %v4423
          %v4620 = vunpack.c.l.b16 %v4424
          %v4621 = vunpack.c.l.b16 %v4425
          %v4622 = vunpack.c.l.b16 %v4426
          %v4623 = vunpack.c.l.b16 %v4427
          %v4624 = vunpack.c.l.b16 %v4428
          %v4625 = vunpack.c.l.b16 %v4429
          %v4626 = vunpack.c.l.b16 %v4430
          %v4627 = vunpack.c.l.b16 %v4431
          %v4628 = vunpack.c.l.b16 %v4432
          %v4629 = vunpack.c.l.b16 %v4433
          %v4630 = vunpack.c.l.b16 %v4434
          %v4631 = vunpack.c.l.b16 %v4435
          %v4632 = vunpack.c.l.b16 %v4436
          %v4633 = vunpack.c.l.b16 %v4437
          %v4634 = vunpack.c.l.b16 %v4438
          %v4635 = vunpack.c.l.b16 %v4439
          %v4636 = vunpack.c.l.b16 %v4440
          %v4637 = vunpack.c.l.b16 %v4441
          %v4638 = vunpack.c.l.b16 %v4442
          %v4639 = vunpack.c.l.b16 %v4443
          %v4640 = vunpack.c.l.b16 %v4444
          %v4641 = vunpack.c.l.b16 %v4445
          %v4642 = vunpack.c.l.b16 %v4446
          %v4643 = vunpack.c.l.b16 %v4447
          %v4644 = vunpack.c.l.b16 %v4448
          %v4645 = vunpack.c.l.b16 %v4449
          %v4646 = vunpack.c.l.b16 %v4450
          %v4647 = vunpack.c.l.b16 %v4451
          %v4648 = vunpack.c.l.b16 %v4452
          %v4649 = vunpack.c.l.b16 %v4453
          %v4650 = vunpack.c.l.b16 %v4454
          %v4651 = vunpack.c.l.b16 %v4455
          %v4652 = vunpack.c.l.b16 %v4456
          %v4653 = vunpack.c.l.b16 %v4457
          %v4654 = vunpack.c.l.b16 %v4458
          %v4655 = vunpack.c.l.b16 %v4459
          %v4656 = vunpack.c.l.b16 %v4460
          %v4657 = vunpack.c.l.b16 %v4461
          %v4658 = vunpack.c.l.b16 %v4462
          %v4659 = vunpack.c.l.b16 %v4463
          %v4660 = vunpack.c.l.b16 %v4464
          %v4661 = vunpack.c.l.b16 %v4465
          %v4662 = vunpack.c.l.b16 %v4466
          %v4663 = vunpack.c.l.b16 %v4467
          %v4664 = vpack.c.b16 %v4569, %v4568
          %v4665 = vpack.c.b16 %v4571, %v4570
          %v4666 = vpack.c.b16 %v4573, %v4572
          %v4667 = vpack.c.b16 %v4575, %v4574
          %v4668 = vpack.c.b16 %v4577, %v4576
          %v4669 = vpack.c.b16 %v4579, %v4578
          %v4670 = vpack.c.b16 %v4581, %v4580
          %v4671 = vpack.c.b16 %v4583, %v4582
          %v4672 = vpack.c.b16 %v4585, %v4584
          %v4673 = vpack.c.b16 %v4587, %v4586
          %v4674 = vpack.c.b16 %v4589, %v4588
          %v4675 = vpack.c.b16 %v4591, %v4590
          %v4676 = vpack.c.b16 %v4593, %v4592
          %v4677 = vpack.c.b16 %v4595, %v4594
          %v4678 = vpack.c.b16 %v4597, %v4596
          %v4679 = vpack.c.b16 %v4599, %v4598
          %v4680 = vpack.c.b16 %v4601, %v4600
          %v4681 = vpack.c.b16 %v4603, %v4602
          %v4682 = vpack.c.b16 %v4605, %v4604
          %v4683 = vpack.c.b16 %v4607, %v4606
          %v4684 = vpack.c.b16 %v4609, %v4608
          %v4685 = vpack.c.b16 %v4611, %v4610
          %v4686 = vpack.c.b16 %v4613, %v4612
          %v4687 = vpack.c.b16 %v4615, %v4614
          %v4688 = vpack.c.b16 %v4617, %v4616
          %v4689 = vpack.c.b16 %v4619, %v4618
          %v4690 = vpack.c.b16 %v4621, %v4620
          %v4691 = vpack.c.b16 %v4623, %v4622
          %v4692 = vpack.c.b16 %v4625, %v4624
          %v4693 = vpack.c.b16 %v4627, %v4626
          %v4694 = vpack.c.b16 %v4629, %v4628
          %v4695 = vpack.c.b16 %v4631, %v4630
          %v4696 = vpack.c.b16 %v4633, %v4632
          %v4697 = vpack.c.b16 %v4635, %v4634
          %v4698 = vpack.c.b16 %v4637, %v4636
          %v4699 = vpack.c.b16 %v4639, %v4638
          %v4700 = vpack.c.b16 %v4641, %v4640
          %v4701 = vpack.c.b16 %v4643, %v4642
          %v4702 = vpack.c.b16 %v4645, %v4644
          %v4703 = vpack.c.b16 %v4647, %v4646
          %v4704 = vpack.c.b16 %v4649, %v4648
          %v4705 = vpack.c.b16 %v4651, %v4650
          %v4706 = vpack.c.b16 %v4653, %v4652
          %v4707 = vpack.c.b16 %v4655, %v4654
          %v4708 = vpack.c.b16 %v4657, %v4656
          %v4709 = vpack.c.b16 %v4659, %v4658
          %v4710 = vpack.c.b16 %v4661, %v4660
          %v4711 = vpack.c.b16 %v4663, %v4662
          %4760 = vmatprep.subr.bf16.mxu0 0
          %4761 = vmatpush1.bf16.msra.mxu0 %v4664
          %4762 = vmatprep.subr.bf16.mxu0 0
          %4763 = vmatpush1.bf16.msra.mxu0 %v4665
          %4764 = vmatprep.subr.bf16.mxu0 0
          %4765 = vmatpush1.bf16.msra.mxu0 %v4666
          %4766 = vmatprep.subr.bf16.mxu0 0
          %4767 = vmatpush1.bf16.msra.mxu0 %v4667
          %4768 = vmatprep.subr.bf16.mxu0 0
          %4769 = vmatpush1.bf16.msra.mxu0 %v4668
          %4770 = vmatprep.subr.bf16.mxu0 0
          %4771 = vmatpush1.bf16.msra.mxu0 %v4669
          %4772 = vmatprep.subr.bf16.mxu0 0
          %4773 = vmatpush1.bf16.msra.mxu0 %v4670
          %4774 = vmatprep.subr.bf16.mxu0 0
          %4775 = vmatpush1.bf16.msra.mxu0 %v4671
          %4776 = vmatprep.subr.bf16.mxu0 0
          %4777 = vmatpush1.bf16.msra.mxu0 %v4672
          %4778 = vmatprep.subr.bf16.mxu0 0
          %4779 = vmatpush1.bf16.msra.mxu0 %v4673
          %4780 = vmatprep.subr.bf16.mxu0 0
          %4781 = vmatpush1.bf16.msra.mxu0 %v4674
          %4782 = vmatprep.subr.bf16.mxu0 0
          %4783 = vmatpush1.bf16.msra.mxu0 %v4675
          %4784 = vmatprep.subr.bf16.mxu0 0
          %4785 = vmatpush1.bf16.msra.mxu0 %v4676
          %4786 = vmatprep.subr.bf16.mxu0 0
          %4787 = vmatpush1.bf16.msra.mxu0 %v4677
          %4788 = vmatprep.subr.bf16.mxu0 0
          %4789 = vmatpush1.bf16.msra.mxu0 %v4678
          %4790 = vmatprep.subr.bf16.mxu0 0
          %4791 = vmatpush1.bf16.msra.mxu0 %v4679
          %4792 = vmatprep.mubr.bf16.mxu0 %v4364
          %4793 = vmatmul.mubr.bf16.gmra.mrb[0].mxu0 %v4363
          %v4794 = vpop.f32.mrb[0].mxu0
          %v4795 = vadd.f32 %v4471, %v4794
          %v4796 = vpop.f32.mrb[0].mxu0
          %v4797 = vpop.f32.mrb[0].mxu0
          %v4798 = vpop.f32.mrb[0].mxu0
          %4799 = vdwg.mxu0
          %4800 = vmatprep.subr.bf16.mxu0 0
          %4801 = vmatpush1.bf16.msra.mxu0 %v4680
          %4802 = vmatprep.subr.bf16.mxu0 0
          %4803 = vmatpush1.bf16.msra.mxu0 %v4681
          %4804 = vmatprep.subr.bf16.mxu0 0
          %4805 = vmatpush1.bf16.msra.mxu0 %v4682
          %4806 = vmatprep.subr.bf16.mxu0 0
          %4807 = vmatpush1.bf16.msra.mxu0 %v4683
          %4808 = vmatprep.subr.bf16.mxu0 0
          %4809 = vmatpush1.bf16.msra.mxu0 %v4684
          %4810 = vmatprep.subr.bf16.mxu0 0
          %4811 = vmatpush1.bf16.msra.mxu0 %v4685
          %4812 = vmatprep.subr.bf16.mxu0 0
          %4813 = vmatpush1.bf16.msra.mxu0 %v4686
          %4814 = vmatprep.subr.bf16.mxu0 0
          %4815 = vmatpush1.bf16.msra.mxu0 %v4687
          %4816 = vmatprep.subr.bf16.mxu0 0
          %4817 = vmatpush1.bf16.msra.mxu0 %v4688
          %4818 = vmatprep.subr.bf16.mxu0 0
          %4819 = vmatpush1.bf16.msra.mxu0 %v4689
          %4820 = vmatprep.subr.bf16.mxu0 0
          %4821 = vmatpush1.bf16.msra.mxu0 %v4690
          %4822 = vmatprep.subr.bf16.mxu0 0
          %4823 = vmatpush1.bf16.msra.mxu0 %v4691
          %4824 = vmatprep.subr.bf16.mxu0 0
          %4825 = vmatpush1.bf16.msra.mxu0 %v4692
          %4826 = vmatprep.subr.bf16.mxu0 0
          %4827 = vmatpush1.bf16.msra.mxu0 %v4693
          %4828 = vmatprep.subr.bf16.mxu0 0
          %4829 = vmatpush1.bf16.msra.mxu0 %v4694
          %4830 = vmatprep.subr.bf16.mxu0 0
          %4831 = vmatpush1.bf16.msra.mxu0 %v4695
          %4832 = vmatprep.mubr.bf16.mxu0 %v4366
          %4833 = vmatmul.mubr.bf16.gmra.mrb[0].mxu0 %v4365
          %v4834 = vpop.f32.mrb[0].mxu0
          %v4835 = vadd.f32 %v4795, %v4834
          %v4836 = vpop.f32.mrb[0].mxu0
          %v4837 = vpop.f32.mrb[0].mxu0
          %v4838 = vpop.f32.mrb[0].mxu0
          %4839 = vdwg.mxu0
          %4840 = vmatprep.subr.bf16.mxu0 0
          %4841 = vmatpush1.bf16.msra.mxu0 %v4696
          %4842 = vmatprep.subr.bf16.mxu0 0
          %4843 = vmatpush1.bf16.msra.mxu0 %v4697
          %4844 = vmatprep.subr.bf16.mxu0 0
          %4845 = vmatpush1.bf16.msra.mxu0 %v4698
          %4846 = vmatprep.subr.bf16.mxu0 0
          %4847 = vmatpush1.bf16.msra.mxu0 %v4699
          %4848 = vmatprep.subr.bf16.mxu0 0
          %4849 = vmatpush1.bf16.msra.mxu0 %v4700
          %4850 = vmatprep.subr.bf16.mxu0 0
          %4851 = vmatpush1.bf16.msra.mxu0 %v4701
          %4852 = vmatprep.subr.bf16.mxu0 0
          %4853 = vmatpush1.bf16.msra.mxu0 %v4702
          %4854 = vmatprep.subr.bf16.mxu0 0
          %4855 = vmatpush1.bf16.msra.mxu0 %v4703
          %4856 = vmatprep.subr.bf16.mxu0 0
          %4857 = vmatpush1.bf16.msra.mxu0 %v4704
          %4858 = vmatprep.subr.bf16.mxu0 0
          %4859 = vmatpush1.bf16.msra.mxu0 %v4705
          %4860 = vmatprep.subr.bf16.mxu0 0
          %4861 = vmatpush1.bf16.msra.mxu0 %v4706
          %4862 = vmatprep.subr.bf16.mxu0 0
          %4863 = vmatpush1.bf16.msra.mxu0 %v4707
          %4864 = vmatprep.subr.bf16.mxu0 0
          %4865 = vmatpush1.bf16.msra.mxu0 %v4708
          %4866 = vmatprep.subr.bf16.mxu0 0
          %4867 = vmatpush1.bf16.msra.mxu0 %v4709
          %4868 = vmatprep.subr.bf16.mxu0 0
          %4869 = vmatpush1.bf16.msra.mxu0 %v4710
          %4870 = vmatprep.subr.bf16.mxu0 0
          %4871 = vmatpush1.bf16.msra.mxu0 %v4711
          %4872 = vmatprep.mubr.bf16.mxu0 %v4368
          %4873 = vmatmul.mubr.bf16.gmra.mrb[0].mxu0 %v4367
          %v4874 = vpop.f32.mrb[0].mxu0
          %v4875 = vadd.f32 %v4835, %v4874
          %v4876 = vpop.f32.mrb[0].mxu0
          %v4877 = vpop.f32.mrb[0].mxu0
          %v4878 = vpop.f32.mrb[0].mxu0
          %4879 = vdwg.mxu0
          %v4881 = vrot.slane %v4875, 1
          %v4882 = vrot.slane %v4875, 2
          %v4883 = vrot.slane %v4875, 3
          %v4888 = vadd.f32 %v4099, %v4875
          %v4889 = vadd.f32 %v4100, %v4881
          %v4890 = vadd.f32 %v4101, %v4882
          %v4891 = vadd.f32 %v4102, %v4883
          %v4896 = vrot.slane %v4889, 7
          %v4897 = vsel %vm833, %v4896, %v4888
          %v4898 = vrot.slane %v4890, 6
          %v4899 = vsel %vm836, %v4898, %v4897
          %v4900 = vrot.slane %v4891, 5
          %v4901 = vsel %vm839, %v4900, %v4899
          %v4903 = vsel %vm3993, %v4901, 0.0
          %4904 = vadd.xlane.f32.xlu0 %v4903
          %v4905 = vpop.xlane.xlu0 %4904
          %v4906 = vmul.f32 %v4905, %v4040
          %v4908 = vrot.slane %v4906, 1
          %v4909 = vrot.slane %v4906, 2
          %v4910 = vrot.slane %v4906, 3
          %v4915 = vsub.f32 %v4888, %v4906
          %v4916 = vsub.f32 %v4889, %v4908
          %v4917 = vsub.f32 %v4890, %v4909
          %v4918 = vsub.f32 %v4891, %v4910
          %v4919 = vmul.f32 %v4915, %v4915
          %v4920 = vmul.f32 %v4916, %v4916
          %v4921 = vmul.f32 %v4917, %v4917
          %v4922 = vmul.f32 %v4918, %v4918
          %v4927 = vrot.slane %v4920, 7
          %v4928 = vsel %vm833, %v4927, %v4919
          %v4929 = vrot.slane %v4921, 6
          %v4930 = vsel %vm836, %v4929, %v4928
          %v4931 = vrot.slane %v4922, 5
          %v4932 = vsel %vm839, %v4931, %v4930
          %v4934 = vsel %vm3993, %v4932, 0.0
          %4935 = vadd.xlane.f32.xlu0 %v4934
          %v4936 = vpop.xlane.xlu0 %4935
          %v4937 = vmul.f32 %v4936, %v4040
          %v4938 = vadd.f32 %v4937, 1e-05
          %v4939 = vrsqrt.pop %v4938
          %v4941 = vrot.slane %v4939, 1
          %v4942 = vrot.slane %v4939, 2
          %v4943 = vrot.slane %v4939, 3
          %v4948 = vmul.f32 %v4915, %v4939
          %v4949 = vmul.f32 %v4916, %v4941
          %v4950 = vmul.f32 %v4917, %v4942
          %v4951 = vmul.f32 %v4918, %v4943
          %v4952 = vlaneseq
          %v4953 = vshrl.u32 %v4952, 7
          %v4954 = vsub.s32 3, %v4953
          %v4955 = vrot.slane %v3605, %v4954
          %v4956 = vmul.f32 %v4948, %v4955
          %v4957 = vmul.f32 %v4949, %v4955
          %v4958 = vmul.f32 %v4950, %v4955
          %v4959 = vmul.f32 %v4951, %v4955
          %v4960 = vlaneseq
          %v4961 = vshrl.u32 %v4960, 7
          %v4962 = vsub.s32 4, %v4961
          %v4963 = vrot.slane %v3605, %v4962
          %v4964 = vadd.f32 %v4956, %v4963
          %v4965 = vadd.f32 %v4957, %v4963
          %v4966 = vadd.f32 %v4958, %v4963
          %v4967 = vadd.f32 %v4959, %v4963
        $region93: #{codebert_forward.1} parent=87 // loop_footer
          %s722 = sadd.s32 1, %s718
        $region94: #{codebert_forward.1} parent=87 // loop_footer_branch
          %717 = sbr.rel target = $region90
        $region95: #{codebert_forward.1} parent=87 // loop_exit
          _
        %v4968 = vpack.c.bf16 %v723, %v723
        %v4969 = vld [vmem:[%s4] sm:$0xf]
        %v4970 = vld [vmem:[%s4 + $0x4] sm:$0xf]
        %v4971 = vld [vmem:[%s4 + $0x8] sm:$0xf]
        %v4972 = vld [vmem:[%s4 + $0xc] sm:$0xf]
        %v4973 = vld [vmem:[%s5] sm:$0x1]
        %v4978 = vunpack.c.l.b16 %v4969
        %v4979 = vunpack.c.l.b16 %v4970
        %v4980 = vunpack.c.l.b16 %v4971
        %v4981 = vunpack.c.l.b16 %v4972
        %v4982 = vpack.c.b16 %v4979, %v4978
        %v4983 = vpack.c.b16 %v4981, %v4980
        %v4987 = vsel %vm613, %v4968, 0
        %4989 = vmatprep.subr.bf16.mxu0 0
        %4990 = vmatpush1.bf16.msra.mxu0 %v4982
        %4991 = vmatprep.subr.bf16.mxu0 0
        %4992 = vmatpush1.bf16.msra.mxu0 %v4983
        %4993 = vmatprep.subr.bf16.mxu0 0
        %4994 = vmatpush1.bf16.msra.mxu0 0
        %4995 = vmatprep.subr.bf16.mxu0 0
        %4996 = vmatpush1.bf16.msra.mxu0 0
        %4997 = vmatprep.subr.bf16.mxu0 0
        %4998 = vmatpush1.bf16.msra.mxu0 0
        %4999 = vmatprep.subr.bf16.mxu0 0
        %5000 = vmatpush1.bf16.msra.mxu0 0
        %5001 = vmatprep.subr.bf16.mxu0 0
        %5002 = vmatpush1.bf16.msra.mxu0 0
        %5003 = vmatprep.subr.bf16.mxu0 0
        %5004 = vmatpush1.bf16.msra.mxu0 0
        %5005 = vmatprep.subr.bf16.mxu0 0
        %5006 = vmatpush1.bf16.msra.mxu0 0
        %5007 = vmatprep.subr.bf16.mxu0 0
        %5008 = vmatpush1.bf16.msra.mxu0 0
        %5009 = vmatprep.subr.bf16.mxu0 0
        %5010 = vmatpush1.bf16.msra.mxu0 0
        %5011 = vmatprep.subr.bf16.mxu0 0
        %5012 = vmatpush1.bf16.msra.mxu0 0
        %5013 = vmatprep.subr.bf16.mxu0 0
        %5014 = vmatpush1.bf16.msra.mxu0 0
        %5015 = vmatprep.subr.bf16.mxu0 0
        %5016 = vmatpush1.bf16.msra.mxu0 0
        %5017 = vmatprep.subr.bf16.mxu0 0
        %5018 = vmatpush1.bf16.msra.mxu0 0
        %5019 = vmatprep.subr.bf16.mxu0 0
        %5020 = vmatpush1.bf16.msra.mxu0 0
        %5021 = vmatprep.mubr.bf16.mxu0 0
        %5022 = vmatmul.mubr.bf16.gmra.mrb[0].mxu0 %v4987
        %v5023 = vpop.f32.mrb[0].mxu0
        %v5024 = vadd.f32 %v4973, %v5023
        %v5025 = vpop.f32.mrb[0].mxu0
        %v5026 = vpop.f32.mrb[0].mxu0
        %v5027 = vpop.f32.mrb[0].mxu0
        %5028 = vdwg.mxu0
        %vm5029 = vcmask 8192
        %5030 = vst.msk [vmem:[%s566] sm:$0x1] %vm5029, %v5024
        %s5031 = sand.u32 %s411, 1
        %s5032 = scalar_lea.sflag [#allocation3], %s5031
        %s5033 = sand.u32 %s411, 1
        %s5034 = scalar_lea.vmem [#allocation2], %s5033
        // Predicated region
        $region96: #{codebert_forward.1} parent=87 // pred_check
          %p5035 = pneg %p421
        $region97: #{codebert_forward.1} parent=87 // pred_check_branch
          %5037 = sbr.rel (%p5035) target = $region99
        $region98: #{codebert_forward.1} parent=87 // pred_region
          %s5039 = ssub.s32 16, 16
          %5040 = vsyncadd %s5032, %s5039
          %s5041 = smul.addr %s31, 16
          %s5042 = scalar_lea.hbm %s17, %s5041
          %s5044 = sshll.u32 %s5034, 4
          %s5045 = int_to_ptr.vmem [resolvable:$true] %s5044
          %5047 = dma.vmem_to_hbm [thread:$0]  %s5045, 16, %s5042, %s5032
        $region99: #{codebert_forward.1} parent=87 // pred_fallthru
          _
      $region88: #{codebert_forward.1} parent=5 // pred_fallthru
        _
      %p5048 = scmp.le.s32.totalorder 2, %s26
      // Predicated region
      $region100: #{codebert_forward.1} parent=5 // pred_check
        %p5049 = pneg %p5048
      $region101: #{codebert_forward.1} parent=5 // pred_check_branch
        %5051 = sbr.rel (%p5049) target = $region103
      $region102: #{codebert_forward.1} parent=5 // pred_region
        %s5052 = ssub.s32 %s26, 2
        // Predicated region
        $region104: #{codebert_forward.1} parent=102 // pred_check
          %p5053 = pneg %p427
        $region105: #{codebert_forward.1} parent=102 // pred_check_branch
          %5055 = sbr.rel (%p5053) target = $region107
        $region106: #{codebert_forward.1} parent=102 // pred_region
          %s5056 = sand.u32 %s412, 1
          %s5057 = scalar_lea.sflag [#allocation3], %s5056
          %s5058 = sand.u32 %s412, 1
          %s5059 = scalar_lea.vmem [#allocation2], %s5058
          %5060 = dma.done %s5057, 16
        $region107: #{codebert_forward.1} parent=102 // pred_fallthru
          _
      $region103: #{codebert_forward.1} parent=5 // pred_fallthru
        _
    $region6: #{codebert_forward.1} parent=1 // loop_footer
      %s30 = sadd.s32 1, %s26
    $region7: #{codebert_forward.1} parent=1 // loop_footer_branch
      %25 = sbr.rel target = $region3
    $region8: #{codebert_forward.1} parent=1 // loop_exit
      _
    %5061 = vsyncpa [#allocation3], 1
    %s5062 = scalar_lea.sflag [#allocation3], 1
    %5063 = vsyncpa %s5062, 1

</llo_original>
